<compile_context>
chip_gen: v7x
topology: tpu7x:2x2x1
jax: 0.10.0
libtpu: 0.0.40
codegen_flags: <defaults>
</compile_context>

<pallas_src>
import jax
import jax.numpy as jnp
from jax.experimental import pallas as pl
from jax.experimental.pallas import tpu as pltpu

_LANE = 128
# dtype itemsize -> minimum sublane multiple (sub-32-bit dtypes pack on sublanes)
_SUBLANE = {4: 8, 2: 16, 1: 32}
_SMALL_BYPASS_BYTES = 256 << 10   # below this, launch overhead > HBM time
_TARGET_BLOCK_BYTES = 6 << 20     # per-input block size for the streaming grid


def _weighted_sum_kernel(alpha_ref, a_ref, b_ref, o_ref):
    # alpha_ref: (1, 1) f32 scalar in SMEM.
    alpha = alpha_ref[0, 0]
    a = a_ref[...]
    b = b_ref[...]
    # Exact module arithmetic: (1 - alpha) * a + alpha * b.
    o_ref[...] = ((1.0 - alpha) * a + alpha * b).astype(o_ref.dtype)


def _vmem_cap_bytes() -> int:
    """Generation-aware scoped-VMEM cap (headroom under physical VMEM)."""
    try:
        phys = pltpu.get_tpu_info().vmem_capacity_bytes
    except Exception:
        phys = 64 << 20  # conservative (v7x-sized) fallback
    if phys >= (128 << 20):   # v5e / v6e: 128 MiB physical
        return 64 << 20
    return 48 << 20           # v7x: 64 MiB physical


def _weighted_sum_pallas_2d(a2: jax.Array, b2: jax.Array, alpha_smem: jax.Array) -> jax.Array:
    """Run the streaming kernel on an aligned (rows, 128) slab."""
    rows, lanes = a2.shape
    itemsize = jnp.dtype(a2.dtype).itemsize
    sub = _SUBLANE.get(itemsize, 8)

    # ~6 MiB per input block; with double-buffering that's 3 arrays x 2 bufs
    # x 6 MiB = 36 MiB of VMEM, which fits under every generation's cap.
    target_rows = max(sub, (_TARGET_BLOCK_BYTES // (lanes * itemsize)) // sub * sub)
    tile_r = min(rows, target_rows)

    grid = (pl.cdiv(rows, tile_r),)  # partial last block handled by Pallas masking
    block_bytes = tile_r * lanes * itemsize
    vmem_limit = min(int(6 * block_bytes + (8 << 20)), _vmem_cap_bytes())

    return pl.pallas_call(
        _weighted_sum_kernel,
        out_shape=jax.ShapeDtypeStruct((rows, lanes), a2.dtype),
        grid_spec=pltpu.PrefetchScalarGridSpec(
            num_scalar_prefetch=0,
            grid=grid,
            in_specs=[
                pl.BlockSpec(memory_space=pltpu.SMEM),            # alpha scalar
                pl.BlockSpec((tile_r, lanes), lambda i: (i, 0)),  # a
                pl.BlockSpec((tile_r, lanes), lambda i: (i, 0)),  # b
            ],
            out_specs=pl.BlockSpec((tile_r, lanes), lambda i: (i, 0)),
        ),
        compiler_params=pltpu.CompilerParams(
            # Mem-bound stream: megacore sharding buys no bandwidth, so do not
            # contort tiling for it.
            dimension_semantics=("arbitrary",),
            vmem_limit_bytes=vmem_limit,
        ),
    )(alpha_smem, a2, b2)


def weighted_sum(a: jax.Array, b: jax.Array, alpha) -> jax.Array:
    """(1 - alpha) * a + alpha * b, computed with a Pallas TPU kernel."""
    assert a.shape == b.shape and a.dtype == b.dtype
    orig_shape = a.shape
    total = a.size
    itemsize = jnp.dtype(a.dtype).itemsize
    alpha_f32 = jnp.asarray(alpha, dtype=jnp.float32)

    # Small-input bypass: PGGAN's early fade-in stages (4x4..32x32) are a few
    # KiB; pallas_call launch + SMEM marshaling dwarfs the sub-us HBM time.
    if total * itemsize < _SMALL_BYPASS_BYTES:
        out = (1.0 - alpha_f32) * a + alpha_f32 * b
        return out.astype(a.dtype).reshape(orig_shape)

    sub = _SUBLANE.get(itemsize, 8)
    min_elems = sub * _LANE
    alpha_smem = alpha_f32.reshape(1, 1)

    a_flat = a.reshape(-1)
    b_flat = b.reshape(-1)

    # Aligned bulk through the kernel (zero-copy reshape in the common case).
    bulk = (total // min_elems) * min_elems
    rows = bulk // _LANE
    out_bulk = _weighted_sum_pallas_2d(
        a_flat[:bulk].reshape(rows, _LANE),
        b_flat[:bulk].reshape(rows, _LANE),
        alpha_smem,
    ).reshape(-1)

    if bulk == total:
        return out_bulk.reshape(orig_shape)

    # Ragged tail (< sub*128 elements): plain jnp + stitch. Avoids the old
    # full-size jnp.pad copies of both inputs (which doubled HBM traffic).
    # TODO(synk): could instead mask the tail in-kernel with pltpu.store(mask=...).
    tail = ((1.0 - alpha_f32) * a_flat[bulk:] + alpha_f32 * b_flat[bulk:]).astype(a.dtype)
    return jnp.concatenate([out_bulk, tail]).reshape(orig_shape)


class WeightedSum:
    """JAX/Pallas port of the PyTorch WeightedSum module."""

    def __init__(self, alpha: float = 0.0):
        # nn.Parameter(torch.tensor(alpha), requires_grad=False)
        self.alpha = jnp.asarray(alpha, dtype=jnp.float32)

    def __call__(self, inputs):
        return weighted_sum(inputs[0], inputs[1], self.alpha)


if __name__ == "__main__":
    key = jax.random.PRNGKey(0)
    k0, k1, k2, k3, k4, k5, k6, k7 = jax.random.split(key, 8)

    # 1) Small NCHW feature maps (PGGAN fade-in demo shape) -> bypass path.
    x0 = jax.random.normal(k0, (2, 4, 16, 16), dtype=jnp.float32)
    x1 = jax.random.normal(k1, (2, 4, 16, 16), dtype=jnp.float32)
    module = WeightedSum(alpha=0.25)
    out = jax.block_until_ready(module([x0, x1]))
    ref = (1.0 - 0.25) * x0 + 0.25 * x1
    assert out.shape == x0.shape and out.dtype == x0.dtype
    assert jnp.allclose(out, ref, atol=1e-5, rtol=1e-5)

    # 2) Medium input (2 MiB) -> single-block Pallas path.
    y0 = jax.random.normal(k2, (4, 32, 64, 64), dtype=jnp.float32)
    y1 = jax.random.normal(k3, (4, 32, 64, 64), dtype=jnp.float32)
    out2 = jax.block_until_ready(weighted_sum(y0, y1, jnp.float32(0.7)))
    ref2 = (1.0 - 0.7) * y0 + 0.7 * y1
    assert out2.shape == y0.shape and out2.dtype == y0.dtype
    assert jnp.allclose(out2, ref2, atol=1e-5, rtol=1e-5)

    # 3) Larger input (12 MiB) -> multi-block streaming grid.
    z0 = jax.random.normal(k4, (6, 8, 256, 256), dtype=jnp.float32)
    z1 = jax.random.normal(k5, (6, 8, 256, 256), dtype=jnp.float32)
    out3 = jax.block_until_ready(weighted_sum(z0, z1, 0.4))
    ref3 = (1.0 - 0.4) * z0 + 0.4 * z1
    assert out3.shape == z0.shape and out3.dtype == z0.dtype
    assert jnp.allclose(out3, ref3, atol=1e-5, rtol=1e-5)

    # 4) Ragged element count -> aligned bulk via Pallas + jnp tail stitch.
    w0 = jax.random.normal(k6, (3, 7, 129, 130), dtype=jnp.float32)
    w1 = jax.random.normal(k7, (3, 7, 129, 130), dtype=jnp.float32)
    out4 = jax.block_until_ready(weighted_sum(w0, w1, 0.9))
    ref4 = (1.0 - 0.9) * w0 + 0.9 * w1
    assert out4.shape == w0.shape and out4.dtype == w0.dtype
    assert jnp.allclose(out4, ref4, atol=1e-5, rtol=1e-5)

    print("KERNEL_OK")
</pallas_src>

<mosaic_0001>
module attributes {stable_mosaic.version = 11 : i64} {
  func.func @_weighted_sum_kernel(%arg0: i32, %arg1: memref<1x1xf32, #tpu.memory_space<smem>>, %arg2: memref<4096x128xf32, #tpu.memory_space<vmem>>, %arg3: memref<4096x128xf32, #tpu.memory_space<vmem>>, %arg4: memref<4096x128xf32, #tpu.memory_space<vmem>>) attributes {dimension_semantics = [#tpu.dimension_semantics<arbitrary>], iteration_bounds = array<i64: 1>, scalar_prefetch = 0 : i64, scratch_operands = 0 : i64, tpu.core_type = #tpu.core_type<tc>, window_params = [{transform_indices = @transform_0, window_bounds = array<i64: 1, 1>}, {transform_indices = @transform_1, window_bounds = array<i64: 4096, 128>}, {transform_indices = @transform_2, window_bounds = array<i64: 4096, 128>}, {transform_indices = @transform_3, window_bounds = array<i64: 4096, 128>}]} {
    %c0 = arith.constant 0 : index
    %c0_0 = arith.constant 0 : index
    %0 = memref.load %arg1[%c0, %c0_0] : memref<1x1xf32, #tpu.memory_space<smem>>
    %c0_1 = arith.constant 0 : index
    %c0_2 = arith.constant 0 : index
    %1 = vector.load %arg2[%c0_1, %c0_2] : memref<4096x128xf32, #tpu.memory_space<vmem>>, vector<4096x128xf32>
    %c0_3 = arith.constant 0 : index
    %c0_4 = arith.constant 0 : index
    %2 = vector.load %arg3[%c0_3, %c0_4] : memref<4096x128xf32, #tpu.memory_space<vmem>>, vector<4096x128xf32>
    %cst = arith.constant 1.000000e+00 : f32
    %3 = arith.subf %cst, %0 : f32
    %4 = vector.broadcast %3 : f32 to vector<4096x128xf32>
    %5 = arith.mulf %4, %1 : vector<4096x128xf32>
    %6 = vector.broadcast %0 : f32 to vector<4096x128xf32>
    %7 = arith.mulf %6, %2 : vector<4096x128xf32>
    %8 = arith.addf %5, %7 : vector<4096x128xf32>
    %c0_5 = arith.constant 0 : index
    %c0_6 = arith.constant 0 : index
    %9 = vector.load %arg4[%c0_5, %c0_6] : memref<4096x128xf32, #tpu.memory_space<vmem>>, vector<4096x128xf32>
    tpu.vector_store %arg4[%c0_5, %c0_6], %8 {strides = array<i32>} : memref<4096x128xf32, #tpu.memory_space<vmem>>, vector<4096x128xf32>,
    return
  }
  func.func @transform_0(%arg0: i32) -> (i32, i32) {
    %c0_i32 = arith.constant 0 : i32
    %c0_i32_0 = arith.constant 0 : i32
    %c0_i32_1 = arith.constant 0 : i32
    return %c0_i32, %c0_i32_0 : i32, i32
  }
  func.func @transform_1(%arg0: i32) -> (i32, i32) {
    %c0_i32 = arith.constant 0 : i32
    %c0_i32_0 = arith.constant 0 : i32
    return %arg0, %c0_i32 : i32, i32
  }
  func.func @transform_2(%arg0: i32) -> (i32, i32) {
    %c0_i32 = arith.constant 0 : i32
    %c0_i32_0 = arith.constant 0 : i32
    return %arg0, %c0_i32 : i32, i32
  }
  func.func @transform_3(%arg0: i32) -> (i32, i32) {
    %c0_i32 = arith.constant 0 : i32
    %c0_i32_0 = arith.constant 0 : i32
    return %arg0, %c0_i32 : i32, i32
  }
}

</mosaic_0001>

<llo_original>
// kernel: tpu_custom_call.1
$region0: #{tpu_custom_call.1}
  #allocation0 [shape = 'u32[]', space=smem, size = 0x4, offset = 0x4, fixed_abs, tag = 'smem constant byte address 0x4 - core index']
  #allocation1 [shape = 'u32[144,128]{1,0:T(1,128)}', space=vmem, size = 0x12000, scoped, tag = 'internal scratch']
  #allocation2 [shape = 'f32[1,1]{1,0:T(1,128)S(6)}', space=smem, size = 0x200, scoped, tag = 'scoped memory for tpu_custom_call.1']
  %s0 = inlined_call_operand.<no memory space> [shape: f32[1,1], index: 0, kind: input, shape index: {}]
  %s1 = inlined_call_operand.hbm [shape: f32[4096,128], index: 1, kind: input, shape index: {}]
  %s2 = inlined_call_operand.hbm [shape: f32[4096,128], index: 2, kind: input, shape index: {}]
  %s3 = inlined_call_operand.hbm [shape: f32[4096,128], index: 3, kind: output, shape index: {}]
  %s4 = sld [smem:[#allocation0]]
  $region30: #{tpu_custom_call.1} parent=0
    _
  %s6 = ssub.s32 1, %s4
  %s7 = scalar_select 0, %s6, %s4
  %8 = sst [smem:[#allocation2]] %s0
  $region1: #{tpu_custom_call.1} parent=0
    #allocation3 [shape = 'u8[2097152]{0}', space=vmem, size = 0x200000, scoped, tag = 'input window, operand 1, single buffered']
    #allocation4 [shape = 's32[1]{0}', space=sflag, size = 0x4, scoped, tag = 'scoped memory for tpu_custom_call.1']
    #allocation5 [shape = 's32[1]{0}', space=sflag, size = 0x4, scoped, tag = 'scoped memory for tpu_custom_call.1']
    #allocation6 [shape = 'u8[2097152]{0}', space=vmem, size = 0x200000, scoped, tag = 'input window, operand 2, single buffered']
    #allocation7 [shape = 's32[1]{0}', space=sflag, size = 0x4, scoped, tag = 'scoped memory for tpu_custom_call.1']
    #allocation8 [shape = 'u8[2097152]{0}', space=vmem, size = 0x200000, scoped, tag = 'output window, operand 0, single buffered']
    %9 = vsyncpa [#allocation4], 0
    %10 = vsyncpa [#allocation7], 0
    %11 = vsyncpa [#allocation5], 0
    // Predicated region
    $region2: #{tpu_custom_call.1} parent=1 // pred_check
      _
    $region3: #{tpu_custom_call.1} parent=1 // pred_check_branch
      %13 = sbr.rel (0) target = $region5
    $region4: #{tpu_custom_call.1} parent=1 // pred_region
      _
    $region5: #{tpu_custom_call.1} parent=1 // pred_fallthru
      _
    // Predicated region
    $region6: #{tpu_custom_call.1} parent=1 // pred_check
      _
    $region7: #{tpu_custom_call.1} parent=1 // pred_check_branch
      %15 = sbr.rel (0) target = $region9
    $region8: #{tpu_custom_call.1} parent=1 // pred_region
      %s17 = ssub.s32 65536, 65536
      %18 = vsyncadd [#allocation4], %s17
      %s19 = sshll.u32 [#allocation3], 4
      %s20 = int_to_ptr.vmem [resolvable:$true] %s19
      %25 = dma.hbm_to_vmem [thread:$0]  %s1, 65536, %s20, [#allocation4], 128, 128, 8
    $region9: #{tpu_custom_call.1} parent=1 // pred_fallthru
      _
    // Predicated region
    $region10: #{tpu_custom_call.1} parent=1 // pred_check
      _
    $region11: #{tpu_custom_call.1} parent=1 // pred_check_branch
      %27 = sbr.rel (0) target = $region13
    $region12: #{tpu_custom_call.1} parent=1 // pred_region
      %s29 = ssub.s32 65536, 65536
      %30 = vsyncadd [#allocation7], %s29
      %s31 = sshll.u32 [#allocation6], 4
      %s32 = int_to_ptr.vmem [resolvable:$true] %s31
      %37 = dma.hbm_to_vmem [thread:$0]  %s2, 65536, %s32, [#allocation7], 128, 128, 8
    $region13: #{tpu_custom_call.1} parent=1 // pred_fallthru
      _
    // Predicated region
    $region14: #{tpu_custom_call.1} parent=1 // pred_check
      _
    $region15: #{tpu_custom_call.1} parent=1 // pred_check_branch
      %39 = sbr.rel (0) target = $region17
    $region16: #{tpu_custom_call.1} parent=1 // pred_region
      %40 = dma.done [#allocation4], 65536
    $region17: #{tpu_custom_call.1} parent=1 // pred_fallthru
      _
    // Predicated region
    $region18: #{tpu_custom_call.1} parent=1 // pred_check
      _
    $region19: #{tpu_custom_call.1} parent=1 // pred_check_branch
      %42 = sbr.rel (0) target = $region21
    $region20: #{tpu_custom_call.1} parent=1 // pred_region
      %43 = dma.done [#allocation7], 65536
    $region21: #{tpu_custom_call.1} parent=1 // pred_fallthru
      _
    %s44 = sld [smem:[#allocation2]]
    %v45 = vld [vmem:[#allocation3] sm:$0xff]
    %v46 = vld [vmem:[#allocation3 + $0x8] sm:$0xff]
    %v47 = vld [vmem:[#allocation3 + $0x10] sm:$0xff]
    %v48 = vld [vmem:[#allocation3 + $0x18] sm:$0xff]
    %v49 = vld [vmem:[#allocation3 + $0x20] sm:$0xff]
    %v50 = vld [vmem:[#allocation3 + $0x28] sm:$0xff]
    %v51 = vld [vmem:[#allocation3 + $0x30] sm:$0xff]
    %v52 = vld [vmem:[#allocation3 + $0x38] sm:$0xff]
    %v53 = vld [vmem:[#allocation3 + $0x40] sm:$0xff]
    %v54 = vld [vmem:[#allocation3 + $0x48] sm:$0xff]
    %v55 = vld [vmem:[#allocation3 + $0x50] sm:$0xff]
    %v56 = vld [vmem:[#allocation3 + $0x58] sm:$0xff]
    %v57 = vld [vmem:[#allocation3 + $0x60] sm:$0xff]
    %v58 = vld [vmem:[#allocation3 + $0x68] sm:$0xff]
    %v59 = vld [vmem:[#allocation3 + $0x70] sm:$0xff]
    %v60 = vld [vmem:[#allocation3 + $0x78] sm:$0xff]
    %v61 = vld [vmem:[#allocation3 + $0x80] sm:$0xff]
    %v62 = vld [vmem:[#allocation3 + $0x88] sm:$0xff]
    %v63 = vld [vmem:[#allocation3 + $0x90] sm:$0xff]
    %v64 = vld [vmem:[#allocation3 + $0x98] sm:$0xff]
    %v65 = vld [vmem:[#allocation3 + $0xa0] sm:$0xff]
    %v66 = vld [vmem:[#allocation3 + $0xa8] sm:$0xff]
    %v67 = vld [vmem:[#allocation3 + $0xb0] sm:$0xff]
    %v68 = vld [vmem:[#allocation3 + $0xb8] sm:$0xff]
    %v69 = vld [vmem:[#allocation3 + $0xc0] sm:$0xff]
    %v70 = vld [vmem:[#allocation3 + $0xc8] sm:$0xff]
    %v71 = vld [vmem:[#allocation3 + $0xd0] sm:$0xff]
    %v72 = vld [vmem:[#allocation3 + $0xd8] sm:$0xff]
    %v73 = vld [vmem:[#allocation3 + $0xe0] sm:$0xff]
    %v74 = vld [vmem:[#allocation3 + $0xe8] sm:$0xff]
    %v75 = vld [vmem:[#allocation3 + $0xf0] sm:$0xff]
    %v76 = vld [vmem:[#allocation3 + $0xf8] sm:$0xff]
    %v77 = vld [vmem:[#allocation3 + $0x100] sm:$0xff]
    %v78 = vld [vmem:[#allocation3 + $0x108] sm:$0xff]
    %v79 = vld [vmem:[#allocation3 + $0x110] sm:$0xff]
    %v80 = vld [vmem:[#allocation3 + $0x118] sm:$0xff]
    %v81 = vld [vmem:[#allocation3 + $0x120] sm:$0xff]
    %v82 = vld [vmem:[#allocation3 + $0x128] sm:$0xff]
    %v83 = vld [vmem:[#allocation3 + $0x130] sm:$0xff]
    %v84 = vld [vmem:[#allocation3 + $0x138] sm:$0xff]
    %v85 = vld [vmem:[#allocation3 + $0x140] sm:$0xff]
    %v86 = vld [vmem:[#allocation3 + $0x148] sm:$0xff]
    %v87 = vld [vmem:[#allocation3 + $0x150] sm:$0xff]
    %v88 = vld [vmem:[#allocation3 + $0x158] sm:$0xff]
    %v89 = vld [vmem:[#allocation3 + $0x160] sm:$0xff]
    %v90 = vld [vmem:[#allocation3 + $0x168] sm:$0xff]
    %v91 = vld [vmem:[#allocation3 + $0x170] sm:$0xff]
    %v92 = vld [vmem:[#allocation3 + $0x178] sm:$0xff]
    %v93 = vld [vmem:[#allocation3 + $0x180] sm:$0xff]
    %v94 = vld [vmem:[#allocation3 + $0x188] sm:$0xff]
    %v95 = vld [vmem:[#allocation3 + $0x190] sm:$0xff]
    %v96 = vld [vmem:[#allocation3 + $0x198] sm:$0xff]
    %v97 = vld [vmem:[#allocation3 + $0x1a0] sm:$0xff]
    %v98 = vld [vmem:[#allocation3 + $0x1a8] sm:$0xff]
    %v99 = vld [vmem:[#allocation3 + $0x1b0] sm:$0xff]
    %v100 = vld [vmem:[#allocation3 + $0x1b8] sm:$0xff]
    %v101 = vld [vmem:[#allocation3 + $0x1c0] sm:$0xff]
    %v102 = vld [vmem:[#allocation3 + $0x1c8] sm:$0xff]
    %v103 = vld [vmem:[#allocation3 + $0x1d0] sm:$0xff]
    %v104 = vld [vmem:[#allocation3 + $0x1d8] sm:$0xff]
    %v105 = vld [vmem:[#allocation3 + $0x1e0] sm:$0xff]
    %v106 = vld [vmem:[#allocation3 + $0x1e8] sm:$0xff]
    %v107 = vld [vmem:[#allocation3 + $0x1f0] sm:$0xff]
    %v108 = vld [vmem:[#allocation3 + $0x1f8] sm:$0xff]
    %v109 = vld [vmem:[#allocation3 + $0x200] sm:$0xff]
    %v110 = vld [vmem:[#allocation3 + $0x208] sm:$0xff]
    %v111 = vld [vmem:[#allocation3 + $0x210] sm:$0xff]
    %v112 = vld [vmem:[#allocation3 + $0x218] sm:$0xff]
    %v113 = vld [vmem:[#allocation3 + $0x220] sm:$0xff]
    %v114 = vld [vmem:[#allocation3 + $0x228] sm:$0xff]
    %v115 = vld [vmem:[#allocation3 + $0x230] sm:$0xff]
    %v116 = vld [vmem:[#allocation3 + $0x238] sm:$0xff]
    %v117 = vld [vmem:[#allocation3 + $0x240] sm:$0xff]
    %v118 = vld [vmem:[#allocation3 + $0x248] sm:$0xff]
    %v119 = vld [vmem:[#allocation3 + $0x250] sm:$0xff]
    %v120 = vld [vmem:[#allocation3 + $0x258] sm:$0xff]
    %v121 = vld [vmem:[#allocation3 + $0x260] sm:$0xff]
    %v122 = vld [vmem:[#allocation3 + $0x268] sm:$0xff]
    %v123 = vld [vmem:[#allocation3 + $0x270] sm:$0xff]
    %v124 = vld [vmem:[#allocation3 + $0x278] sm:$0xff]
    %v125 = vld [vmem:[#allocation3 + $0x280] sm:$0xff]
    %v126 = vld [vmem:[#allocation3 + $0x288] sm:$0xff]
    %v127 = vld [vmem:[#allocation3 + $0x290] sm:$0xff]
    %v128 = vld [vmem:[#allocation3 + $0x298] sm:$0xff]
    %v129 = vld [vmem:[#allocation3 + $0x2a0] sm:$0xff]
    %v130 = vld [vmem:[#allocation3 + $0x2a8] sm:$0xff]
    %v131 = vld [vmem:[#allocation3 + $0x2b0] sm:$0xff]
    %v132 = vld [vmem:[#allocation3 + $0x2b8] sm:$0xff]
    %v133 = vld [vmem:[#allocation3 + $0x2c0] sm:$0xff]
    %v134 = vld [vmem:[#allocation3 + $0x2c8] sm:$0xff]
    %v135 = vld [vmem:[#allocation3 + $0x2d0] sm:$0xff]
    %v136 = vld [vmem:[#allocation3 + $0x2d8] sm:$0xff]
    %v137 = vld [vmem:[#allocation3 + $0x2e0] sm:$0xff]
    %v138 = vld [vmem:[#allocation3 + $0x2e8] sm:$0xff]
    %v139 = vld [vmem:[#allocation3 + $0x2f0] sm:$0xff]
    %v140 = vld [vmem:[#allocation3 + $0x2f8] sm:$0xff]
    %v141 = vld [vmem:[#allocation3 + $0x300] sm:$0xff]
    %v142 = vld [vmem:[#allocation3 + $0x308] sm:$0xff]
    %v143 = vld [vmem:[#allocation3 + $0x310] sm:$0xff]
    %v144 = vld [vmem:[#allocation3 + $0x318] sm:$0xff]
    %v145 = vld [vmem:[#allocation3 + $0x320] sm:$0xff]
    %v146 = vld [vmem:[#allocation3 + $0x328] sm:$0xff]
    %v147 = vld [vmem:[#allocation3 + $0x330] sm:$0xff]
    %v148 = vld [vmem:[#allocation3 + $0x338] sm:$0xff]
    %v149 = vld [vmem:[#allocation3 + $0x340] sm:$0xff]
    %v150 = vld [vmem:[#allocation3 + $0x348] sm:$0xff]
    %v151 = vld [vmem:[#allocation3 + $0x350] sm:$0xff]
    %v152 = vld [vmem:[#allocation3 + $0x358] sm:$0xff]
    %v153 = vld [vmem:[#allocation3 + $0x360] sm:$0xff]
    %v154 = vld [vmem:[#allocation3 + $0x368] sm:$0xff]
    %v155 = vld [vmem:[#allocation3 + $0x370] sm:$0xff]
    %v156 = vld [vmem:[#allocation3 + $0x378] sm:$0xff]
    %v157 = vld [vmem:[#allocation3 + $0x380] sm:$0xff]
    %v158 = vld [vmem:[#allocation3 + $0x388] sm:$0xff]
    %v159 = vld [vmem:[#allocation3 + $0x390] sm:$0xff]
    %v160 = vld [vmem:[#allocation3 + $0x398] sm:$0xff]
    %v161 = vld [vmem:[#allocation3 + $0x3a0] sm:$0xff]
    %v162 = vld [vmem:[#allocation3 + $0x3a8] sm:$0xff]
    %v163 = vld [vmem:[#allocation3 + $0x3b0] sm:$0xff]
    %v164 = vld [vmem:[#allocation3 + $0x3b8] sm:$0xff]
    %v165 = vld [vmem:[#allocation3 + $0x3c0] sm:$0xff]
    %v166 = vld [vmem:[#allocation3 + $0x3c8] sm:$0xff]
    %v167 = vld [vmem:[#allocation3 + $0x3d0] sm:$0xff]
    %v168 = vld [vmem:[#allocation3 + $0x3d8] sm:$0xff]
    %v169 = vld [vmem:[#allocation3 + $0x3e0] sm:$0xff]
    %v170 = vld [vmem:[#allocation3 + $0x3e8] sm:$0xff]
    %v171 = vld [vmem:[#allocation3 + $0x3f0] sm:$0xff]
    %v172 = vld [vmem:[#allocation3 + $0x3f8] sm:$0xff]
    %v173 = vld [vmem:[#allocation3 + $0x400] sm:$0xff]
    %v174 = vld [vmem:[#allocation3 + $0x408] sm:$0xff]
    %v175 = vld [vmem:[#allocation3 + $0x410] sm:$0xff]
    %v176 = vld [vmem:[#allocation3 + $0x418] sm:$0xff]
    %v177 = vld [vmem:[#allocation3 + $0x420] sm:$0xff]
    %v178 = vld [vmem:[#allocation3 + $0x428] sm:$0xff]
    %v179 = vld [vmem:[#allocation3 + $0x430] sm:$0xff]
    %v180 = vld [vmem:[#allocation3 + $0x438] sm:$0xff]
    %v181 = vld [vmem:[#allocation3 + $0x440] sm:$0xff]
    %v182 = vld [vmem:[#allocation3 + $0x448] sm:$0xff]
    %v183 = vld [vmem:[#allocation3 + $0x450] sm:$0xff]
    %v184 = vld [vmem:[#allocation3 + $0x458] sm:$0xff]
    %v185 = vld [vmem:[#allocation3 + $0x460] sm:$0xff]
    %v186 = vld [vmem:[#allocation3 + $0x468] sm:$0xff]
    %v187 = vld [vmem:[#allocation3 + $0x470] sm:$0xff]
    %v188 = vld [vmem:[#allocation3 + $0x478] sm:$0xff]
    %v189 = vld [vmem:[#allocation3 + $0x480] sm:$0xff]
    %v190 = vld [vmem:[#allocation3 + $0x488] sm:$0xff]
    %v191 = vld [vmem:[#allocation3 + $0x490] sm:$0xff]
    %v192 = vld [vmem:[#allocation3 + $0x498] sm:$0xff]
    %v193 = vld [vmem:[#allocation3 + $0x4a0] sm:$0xff]
    %v194 = vld [vmem:[#allocation3 + $0x4a8] sm:$0xff]
    %v195 = vld [vmem:[#allocation3 + $0x4b0] sm:$0xff]
    %v196 = vld [vmem:[#allocation3 + $0x4b8] sm:$0xff]
    %v197 = vld [vmem:[#allocation3 + $0x4c0] sm:$0xff]
    %v198 = vld [vmem:[#allocation3 + $0x4c8] sm:$0xff]
    %v199 = vld [vmem:[#allocation3 + $0x4d0] sm:$0xff]
    %v200 = vld [vmem:[#allocation3 + $0x4d8] sm:$0xff]
    %v201 = vld [vmem:[#allocation3 + $0x4e0] sm:$0xff]
    %v202 = vld [vmem:[#allocation3 + $0x4e8] sm:$0xff]
    %v203 = vld [vmem:[#allocation3 + $0x4f0] sm:$0xff]
    %v204 = vld [vmem:[#allocation3 + $0x4f8] sm:$0xff]
    %v205 = vld [vmem:[#allocation3 + $0x500] sm:$0xff]
    %v206 = vld [vmem:[#allocation3 + $0x508] sm:$0xff]
    %v207 = vld [vmem:[#allocation3 + $0x510] sm:$0xff]
    %v208 = vld [vmem:[#allocation3 + $0x518] sm:$0xff]
    %v209 = vld [vmem:[#allocation3 + $0x520] sm:$0xff]
    %v210 = vld [vmem:[#allocation3 + $0x528] sm:$0xff]
    %v211 = vld [vmem:[#allocation3 + $0x530] sm:$0xff]
    %v212 = vld [vmem:[#allocation3 + $0x538] sm:$0xff]
    %v213 = vld [vmem:[#allocation3 + $0x540] sm:$0xff]
    %v214 = vld [vmem:[#allocation3 + $0x548] sm:$0xff]
    %v215 = vld [vmem:[#allocation3 + $0x550] sm:$0xff]
    %v216 = vld [vmem:[#allocation3 + $0x558] sm:$0xff]
    %v217 = vld [vmem:[#allocation3 + $0x560] sm:$0xff]
    %v218 = vld [vmem:[#allocation3 + $0x568] sm:$0xff]
    %v219 = vld [vmem:[#allocation3 + $0x570] sm:$0xff]
    %v220 = vld [vmem:[#allocation3 + $0x578] sm:$0xff]
    %v221 = vld [vmem:[#allocation3 + $0x580] sm:$0xff]
    %v222 = vld [vmem:[#allocation3 + $0x588] sm:$0xff]
    %v223 = vld [vmem:[#allocation3 + $0x590] sm:$0xff]
    %v224 = vld [vmem:[#allocation3 + $0x598] sm:$0xff]
    %v225 = vld [vmem:[#allocation3 + $0x5a0] sm:$0xff]
    %v226 = vld [vmem:[#allocation3 + $0x5a8] sm:$0xff]
    %v227 = vld [vmem:[#allocation3 + $0x5b0] sm:$0xff]
    %v228 = vld [vmem:[#allocation3 + $0x5b8] sm:$0xff]
    %v229 = vld [vmem:[#allocation3 + $0x5c0] sm:$0xff]
    %v230 = vld [vmem:[#allocation3 + $0x5c8] sm:$0xff]
    %v231 = vld [vmem:[#allocation3 + $0x5d0] sm:$0xff]
    %v232 = vld [vmem:[#allocation3 + $0x5d8] sm:$0xff]
    %v233 = vld [vmem:[#allocation3 + $0x5e0] sm:$0xff]
    %v234 = vld [vmem:[#allocation3 + $0x5e8] sm:$0xff]
    %v235 = vld [vmem:[#allocation3 + $0x5f0] sm:$0xff]
    %v236 = vld [vmem:[#allocation3 + $0x5f8] sm:$0xff]
    %v237 = vld [vmem:[#allocation3 + $0x600] sm:$0xff]
    %v238 = vld [vmem:[#allocation3 + $0x608] sm:$0xff]
    %v239 = vld [vmem:[#allocation3 + $0x610] sm:$0xff]
    %v240 = vld [vmem:[#allocation3 + $0x618] sm:$0xff]
    %v241 = vld [vmem:[#allocation3 + $0x620] sm:$0xff]
    %v242 = vld [vmem:[#allocation3 + $0x628] sm:$0xff]
    %v243 = vld [vmem:[#allocation3 + $0x630] sm:$0xff]
    %v244 = vld [vmem:[#allocation3 + $0x638] sm:$0xff]
    %v245 = vld [vmem:[#allocation3 + $0x640] sm:$0xff]
    %v246 = vld [vmem:[#allocation3 + $0x648] sm:$0xff]
    %v247 = vld [vmem:[#allocation3 + $0x650] sm:$0xff]
    %v248 = vld [vmem:[#allocation3 + $0x658] sm:$0xff]
    %v249 = vld [vmem:[#allocation3 + $0x660] sm:$0xff]
    %v250 = vld [vmem:[#allocation3 + $0x668] sm:$0xff]
    %v251 = vld [vmem:[#allocation3 + $0x670] sm:$0xff]
    %v252 = vld [vmem:[#allocation3 + $0x678] sm:$0xff]
    %v253 = vld [vmem:[#allocation3 + $0x680] sm:$0xff]
    %v254 = vld [vmem:[#allocation3 + $0x688] sm:$0xff]
    %v255 = vld [vmem:[#allocation3 + $0x690] sm:$0xff]
    %v256 = vld [vmem:[#allocation3 + $0x698] sm:$0xff]
    %v257 = vld [vmem:[#allocation3 + $0x6a0] sm:$0xff]
    %v258 = vld [vmem:[#allocation3 + $0x6a8] sm:$0xff]
    %v259 = vld [vmem:[#allocation3 + $0x6b0] sm:$0xff]
    %v260 = vld [vmem:[#allocation3 + $0x6b8] sm:$0xff]
    %v261 = vld [vmem:[#allocation3 + $0x6c0] sm:$0xff]
    %v262 = vld [vmem:[#allocation3 + $0x6c8] sm:$0xff]
    %v263 = vld [vmem:[#allocation3 + $0x6d0] sm:$0xff]
    %v264 = vld [vmem:[#allocation3 + $0x6d8] sm:$0xff]
    %v265 = vld [vmem:[#allocation3 + $0x6e0] sm:$0xff]
    %v266 = vld [vmem:[#allocation3 + $0x6e8] sm:$0xff]
    %v267 = vld [vmem:[#allocation3 + $0x6f0] sm:$0xff]
    %v268 = vld [vmem:[#allocation3 + $0x6f8] sm:$0xff]
    %v269 = vld [vmem:[#allocation3 + $0x700] sm:$0xff]
    %v270 = vld [vmem:[#allocation3 + $0x708] sm:$0xff]
    %v271 = vld [vmem:[#allocation3 + $0x710] sm:$0xff]
    %v272 = vld [vmem:[#allocation3 + $0x718] sm:$0xff]
    %v273 = vld [vmem:[#allocation3 + $0x720] sm:$0xff]
    %v274 = vld [vmem:[#allocation3 + $0x728] sm:$0xff]
    %v275 = vld [vmem:[#allocation3 + $0x730] sm:$0xff]
    %v276 = vld [vmem:[#allocation3 + $0x738] sm:$0xff]
    %v277 = vld [vmem:[#allocation3 + $0x740] sm:$0xff]
    %v278 = vld [vmem:[#allocation3 + $0x748] sm:$0xff]
    %v279 = vld [vmem:[#allocation3 + $0x750] sm:$0xff]
    %v280 = vld [vmem:[#allocation3 + $0x758] sm:$0xff]
    %v281 = vld [vmem:[#allocation3 + $0x760] sm:$0xff]
    %v282 = vld [vmem:[#allocation3 + $0x768] sm:$0xff]
    %v283 = vld [vmem:[#allocation3 + $0x770] sm:$0xff]
    %v284 = vld [vmem:[#allocation3 + $0x778] sm:$0xff]
    %v285 = vld [vmem:[#allocation3 + $0x780] sm:$0xff]
    %v286 = vld [vmem:[#allocation3 + $0x788] sm:$0xff]
    %v287 = vld [vmem:[#allocation3 + $0x790] sm:$0xff]
    %v288 = vld [vmem:[#allocation3 + $0x798] sm:$0xff]
    %v289 = vld [vmem:[#allocation3 + $0x7a0] sm:$0xff]
    %v290 = vld [vmem:[#allocation3 + $0x7a8] sm:$0xff]
    %v291 = vld [vmem:[#allocation3 + $0x7b0] sm:$0xff]
    %v292 = vld [vmem:[#allocation3 + $0x7b8] sm:$0xff]
    %v293 = vld [vmem:[#allocation3 + $0x7c0] sm:$0xff]
    %v294 = vld [vmem:[#allocation3 + $0x7c8] sm:$0xff]
    %v295 = vld [vmem:[#allocation3 + $0x7d0] sm:$0xff]
    %v296 = vld [vmem:[#allocation3 + $0x7d8] sm:$0xff]
    %v297 = vld [vmem:[#allocation3 + $0x7e0] sm:$0xff]
    %v298 = vld [vmem:[#allocation3 + $0x7e8] sm:$0xff]
    %v299 = vld [vmem:[#allocation3 + $0x7f0] sm:$0xff]
    %v300 = vld [vmem:[#allocation3 + $0x7f8] sm:$0xff]
    %v301 = vld [vmem:[#allocation3 + $0x800] sm:$0xff]
    %v302 = vld [vmem:[#allocation3 + $0x808] sm:$0xff]
    %v303 = vld [vmem:[#allocation3 + $0x810] sm:$0xff]
    %v304 = vld [vmem:[#allocation3 + $0x818] sm:$0xff]
    %v305 = vld [vmem:[#allocation3 + $0x820] sm:$0xff]
    %v306 = vld [vmem:[#allocation3 + $0x828] sm:$0xff]
    %v307 = vld [vmem:[#allocation3 + $0x830] sm:$0xff]
    %v308 = vld [vmem:[#allocation3 + $0x838] sm:$0xff]
    %v309 = vld [vmem:[#allocation3 + $0x840] sm:$0xff]
    %v310 = vld [vmem:[#allocation3 + $0x848] sm:$0xff]
    %v311 = vld [vmem:[#allocation3 + $0x850] sm:$0xff]
    %v312 = vld [vmem:[#allocation3 + $0x858] sm:$0xff]
    %v313 = vld [vmem:[#allocation3 + $0x860] sm:$0xff]
    %v314 = vld [vmem:[#allocation3 + $0x868] sm:$0xff]
    %v315 = vld [vmem:[#allocation3 + $0x870] sm:$0xff]
    %v316 = vld [vmem:[#allocation3 + $0x878] sm:$0xff]
    %v317 = vld [vmem:[#allocation3 + $0x880] sm:$0xff]
    %v318 = vld [vmem:[#allocation3 + $0x888] sm:$0xff]
    %v319 = vld [vmem:[#allocation3 + $0x890] sm:$0xff]
    %v320 = vld [vmem:[#allocation3 + $0x898] sm:$0xff]
    %v321 = vld [vmem:[#allocation3 + $0x8a0] sm:$0xff]
    %v322 = vld [vmem:[#allocation3 + $0x8a8] sm:$0xff]
    %v323 = vld [vmem:[#allocation3 + $0x8b0] sm:$0xff]
    %v324 = vld [vmem:[#allocation3 + $0x8b8] sm:$0xff]
    %v325 = vld [vmem:[#allocation3 + $0x8c0] sm:$0xff]
    %v326 = vld [vmem:[#allocation3 + $0x8c8] sm:$0xff]
    %v327 = vld [vmem:[#allocation3 + $0x8d0] sm:$0xff]
    %v328 = vld [vmem:[#allocation3 + $0x8d8] sm:$0xff]
    %v329 = vld [vmem:[#allocation3 + $0x8e0] sm:$0xff]
    %v330 = vld [vmem:[#allocation3 + $0x8e8] sm:$0xff]
    %v331 = vld [vmem:[#allocation3 + $0x8f0] sm:$0xff]
    %v332 = vld [vmem:[#allocation3 + $0x8f8] sm:$0xff]
    %v333 = vld [vmem:[#allocation3 + $0x900] sm:$0xff]
    %v334 = vld [vmem:[#allocation3 + $0x908] sm:$0xff]
    %v335 = vld [vmem:[#allocation3 + $0x910] sm:$0xff]
    %v336 = vld [vmem:[#allocation3 + $0x918] sm:$0xff]
    %v337 = vld [vmem:[#allocation3 + $0x920] sm:$0xff]
    %v338 = vld [vmem:[#allocation3 + $0x928] sm:$0xff]
    %v339 = vld [vmem:[#allocation3 + $0x930] sm:$0xff]
    %v340 = vld [vmem:[#allocation3 + $0x938] sm:$0xff]
    %v341 = vld [vmem:[#allocation3 + $0x940] sm:$0xff]
    %v342 = vld [vmem:[#allocation3 + $0x948] sm:$0xff]
    %v343 = vld [vmem:[#allocation3 + $0x950] sm:$0xff]
    %v344 = vld [vmem:[#allocation3 + $0x958] sm:$0xff]
    %v345 = vld [vmem:[#allocation3 + $0x960] sm:$0xff]
    %v346 = vld [vmem:[#allocation3 + $0x968] sm:$0xff]
    %v347 = vld [vmem:[#allocation3 + $0x970] sm:$0xff]
    %v348 = vld [vmem:[#allocation3 + $0x978] sm:$0xff]
    %v349 = vld [vmem:[#allocation3 + $0x980] sm:$0xff]
    %v350 = vld [vmem:[#allocation3 + $0x988] sm:$0xff]
    %v351 = vld [vmem:[#allocation3 + $0x990] sm:$0xff]
    %v352 = vld [vmem:[#allocation3 + $0x998] sm:$0xff]
    %v353 = vld [vmem:[#allocation3 + $0x9a0] sm:$0xff]
    %v354 = vld [vmem:[#allocation3 + $0x9a8] sm:$0xff]
    %v355 = vld [vmem:[#allocation3 + $0x9b0] sm:$0xff]
    %v356 = vld [vmem:[#allocation3 + $0x9b8] sm:$0xff]
    %v357 = vld [vmem:[#allocation3 + $0x9c0] sm:$0xff]
    %v358 = vld [vmem:[#allocation3 + $0x9c8] sm:$0xff]
    %v359 = vld [vmem:[#allocation3 + $0x9d0] sm:$0xff]
    %v360 = vld [vmem:[#allocation3 + $0x9d8] sm:$0xff]
    %v361 = vld [vmem:[#allocation3 + $0x9e0] sm:$0xff]
    %v362 = vld [vmem:[#allocation3 + $0x9e8] sm:$0xff]
    %v363 = vld [vmem:[#allocation3 + $0x9f0] sm:$0xff]
    %v364 = vld [vmem:[#allocation3 + $0x9f8] sm:$0xff]
    %v365 = vld [vmem:[#allocation3 + $0xa00] sm:$0xff]
    %v366 = vld [vmem:[#allocation3 + $0xa08] sm:$0xff]
    %v367 = vld [vmem:[#allocation3 + $0xa10] sm:$0xff]
    %v368 = vld [vmem:[#allocation3 + $0xa18] sm:$0xff]
    %v369 = vld [vmem:[#allocation3 + $0xa20] sm:$0xff]
    %v370 = vld [vmem:[#allocation3 + $0xa28] sm:$0xff]
    %v371 = vld [vmem:[#allocation3 + $0xa30] sm:$0xff]
    %v372 = vld [vmem:[#allocation3 + $0xa38] sm:$0xff]
    %v373 = vld [vmem:[#allocation3 + $0xa40] sm:$0xff]
    %v374 = vld [vmem:[#allocation3 + $0xa48] sm:$0xff]
    %v375 = vld [vmem:[#allocation3 + $0xa50] sm:$0xff]
    %v376 = vld [vmem:[#allocation3 + $0xa58] sm:$0xff]
    %v377 = vld [vmem:[#allocation3 + $0xa60] sm:$0xff]
    %v378 = vld [vmem:[#allocation3 + $0xa68] sm:$0xff]
    %v379 = vld [vmem:[#allocation3 + $0xa70] sm:$0xff]
    %v380 = vld [vmem:[#allocation3 + $0xa78] sm:$0xff]
    %v381 = vld [vmem:[#allocation3 + $0xa80] sm:$0xff]
    %v382 = vld [vmem:[#allocation3 + $0xa88] sm:$0xff]
    %v383 = vld [vmem:[#allocation3 + $0xa90] sm:$0xff]
    %v384 = vld [vmem:[#allocation3 + $0xa98] sm:$0xff]
    %v385 = vld [vmem:[#allocation3 + $0xaa0] sm:$0xff]
    %v386 = vld [vmem:[#allocation3 + $0xaa8] sm:$0xff]
    %v387 = vld [vmem:[#allocation3 + $0xab0] sm:$0xff]
    %v388 = vld [vmem:[#allocation3 + $0xab8] sm:$0xff]
    %v389 = vld [vmem:[#allocation3 + $0xac0] sm:$0xff]
    %v390 = vld [vmem:[#allocation3 + $0xac8] sm:$0xff]
    %v391 = vld [vmem:[#allocation3 + $0xad0] sm:$0xff]
    %v392 = vld [vmem:[#allocation3 + $0xad8] sm:$0xff]
    %v393 = vld [vmem:[#allocation3 + $0xae0] sm:$0xff]
    %v394 = vld [vmem:[#allocation3 + $0xae8] sm:$0xff]
    %v395 = vld [vmem:[#allocation3 + $0xaf0] sm:$0xff]
    %v396 = vld [vmem:[#allocation3 + $0xaf8] sm:$0xff]
    %v397 = vld [vmem:[#allocation3 + $0xb00] sm:$0xff]
    %v398 = vld [vmem:[#allocation3 + $0xb08] sm:$0xff]
    %v399 = vld [vmem:[#allocation3 + $0xb10] sm:$0xff]
    %v400 = vld [vmem:[#allocation3 + $0xb18] sm:$0xff]
    %v401 = vld [vmem:[#allocation3 + $0xb20] sm:$0xff]
    %v402 = vld [vmem:[#allocation3 + $0xb28] sm:$0xff]
    %v403 = vld [vmem:[#allocation3 + $0xb30] sm:$0xff]
    %v404 = vld [vmem:[#allocation3 + $0xb38] sm:$0xff]
    %v405 = vld [vmem:[#allocation3 + $0xb40] sm:$0xff]
    %v406 = vld [vmem:[#allocation3 + $0xb48] sm:$0xff]
    %v407 = vld [vmem:[#allocation3 + $0xb50] sm:$0xff]
    %v408 = vld [vmem:[#allocation3 + $0xb58] sm:$0xff]
    %v409 = vld [vmem:[#allocation3 + $0xb60] sm:$0xff]
    %v410 = vld [vmem:[#allocation3 + $0xb68] sm:$0xff]
    %v411 = vld [vmem:[#allocation3 + $0xb70] sm:$0xff]
    %v412 = vld [vmem:[#allocation3 + $0xb78] sm:$0xff]
    %v413 = vld [vmem:[#allocation3 + $0xb80] sm:$0xff]
    %v414 = vld [vmem:[#allocation3 + $0xb88] sm:$0xff]
    %v415 = vld [vmem:[#allocation3 + $0xb90] sm:$0xff]
    %v416 = vld [vmem:[#allocation3 + $0xb98] sm:$0xff]
    %v417 = vld [vmem:[#allocation3 + $0xba0] sm:$0xff]
    %v418 = vld [vmem:[#allocation3 + $0xba8] sm:$0xff]
    %v419 = vld [vmem:[#allocation3 + $0xbb0] sm:$0xff]
    %v420 = vld [vmem:[#allocation3 + $0xbb8] sm:$0xff]
    %v421 = vld [vmem:[#allocation3 + $0xbc0] sm:$0xff]
    %v422 = vld [vmem:[#allocation3 + $0xbc8] sm:$0xff]
    %v423 = vld [vmem:[#allocation3 + $0xbd0] sm:$0xff]
    %v424 = vld [vmem:[#allocation3 + $0xbd8] sm:$0xff]
    %v425 = vld [vmem:[#allocation3 + $0xbe0] sm:$0xff]
    %v426 = vld [vmem:[#allocation3 + $0xbe8] sm:$0xff]
    %v427 = vld [vmem:[#allocation3 + $0xbf0] sm:$0xff]
    %v428 = vld [vmem:[#allocation3 + $0xbf8] sm:$0xff]
    %v429 = vld [vmem:[#allocation3 + $0xc00] sm:$0xff]
    %v430 = vld [vmem:[#allocation3 + $0xc08] sm:$0xff]
    %v431 = vld [vmem:[#allocation3 + $0xc10] sm:$0xff]
    %v432 = vld [vmem:[#allocation3 + $0xc18] sm:$0xff]
    %v433 = vld [vmem:[#allocation3 + $0xc20] sm:$0xff]
    %v434 = vld [vmem:[#allocation3 + $0xc28] sm:$0xff]
    %v435 = vld [vmem:[#allocation3 + $0xc30] sm:$0xff]
    %v436 = vld [vmem:[#allocation3 + $0xc38] sm:$0xff]
    %v437 = vld [vmem:[#allocation3 + $0xc40] sm:$0xff]
    %v438 = vld [vmem:[#allocation3 + $0xc48] sm:$0xff]
    %v439 = vld [vmem:[#allocation3 + $0xc50] sm:$0xff]
    %v440 = vld [vmem:[#allocation3 + $0xc58] sm:$0xff]
    %v441 = vld [vmem:[#allocation3 + $0xc60] sm:$0xff]
    %v442 = vld [vmem:[#allocation3 + $0xc68] sm:$0xff]
    %v443 = vld [vmem:[#allocation3 + $0xc70] sm:$0xff]
    %v444 = vld [vmem:[#allocation3 + $0xc78] sm:$0xff]
    %v445 = vld [vmem:[#allocation3 + $0xc80] sm:$0xff]
    %v446 = vld [vmem:[#allocation3 + $0xc88] sm:$0xff]
    %v447 = vld [vmem:[#allocation3 + $0xc90] sm:$0xff]
    %v448 = vld [vmem:[#allocation3 + $0xc98] sm:$0xff]
    %v449 = vld [vmem:[#allocation3 + $0xca0] sm:$0xff]
    %v450 = vld [vmem:[#allocation3 + $0xca8] sm:$0xff]
    %v451 = vld [vmem:[#allocation3 + $0xcb0] sm:$0xff]
    %v452 = vld [vmem:[#allocation3 + $0xcb8] sm:$0xff]
    %v453 = vld [vmem:[#allocation3 + $0xcc0] sm:$0xff]
    %v454 = vld [vmem:[#allocation3 + $0xcc8] sm:$0xff]
    %v455 = vld [vmem:[#allocation3 + $0xcd0] sm:$0xff]
    %v456 = vld [vmem:[#allocation3 + $0xcd8] sm:$0xff]
    %v457 = vld [vmem:[#allocation3 + $0xce0] sm:$0xff]
    %v458 = vld [vmem:[#allocation3 + $0xce8] sm:$0xff]
    %v459 = vld [vmem:[#allocation3 + $0xcf0] sm:$0xff]
    %v460 = vld [vmem:[#allocation3 + $0xcf8] sm:$0xff]
    %v461 = vld [vmem:[#allocation3 + $0xd00] sm:$0xff]
    %v462 = vld [vmem:[#allocation3 + $0xd08] sm:$0xff]
    %v463 = vld [vmem:[#allocation3 + $0xd10] sm:$0xff]
    %v464 = vld [vmem:[#allocation3 + $0xd18] sm:$0xff]
    %v465 = vld [vmem:[#allocation3 + $0xd20] sm:$0xff]
    %v466 = vld [vmem:[#allocation3 + $0xd28] sm:$0xff]
    %v467 = vld [vmem:[#allocation3 + $0xd30] sm:$0xff]
    %v468 = vld [vmem:[#allocation3 + $0xd38] sm:$0xff]
    %v469 = vld [vmem:[#allocation3 + $0xd40] sm:$0xff]
    %v470 = vld [vmem:[#allocation3 + $0xd48] sm:$0xff]
    %v471 = vld [vmem:[#allocation3 + $0xd50] sm:$0xff]
    %v472 = vld [vmem:[#allocation3 + $0xd58] sm:$0xff]
    %v473 = vld [vmem:[#allocation3 + $0xd60] sm:$0xff]
    %v474 = vld [vmem:[#allocation3 + $0xd68] sm:$0xff]
    %v475 = vld [vmem:[#allocation3 + $0xd70] sm:$0xff]
    %v476 = vld [vmem:[#allocation3 + $0xd78] sm:$0xff]
    %v477 = vld [vmem:[#allocation3 + $0xd80] sm:$0xff]
    %v478 = vld [vmem:[#allocation3 + $0xd88] sm:$0xff]
    %v479 = vld [vmem:[#allocation3 + $0xd90] sm:$0xff]
    %v480 = vld [vmem:[#allocation3 + $0xd98] sm:$0xff]
    %v481 = vld [vmem:[#allocation3 + $0xda0] sm:$0xff]
    %v482 = vld [vmem:[#allocation3 + $0xda8] sm:$0xff]
    %v483 = vld [vmem:[#allocation3 + $0xdb0] sm:$0xff]
    %v484 = vld [vmem:[#allocation3 + $0xdb8] sm:$0xff]
    %v485 = vld [vmem:[#allocation3 + $0xdc0] sm:$0xff]
    %v486 = vld [vmem:[#allocation3 + $0xdc8] sm:$0xff]
    %v487 = vld [vmem:[#allocation3 + $0xdd0] sm:$0xff]
    %v488 = vld [vmem:[#allocation3 + $0xdd8] sm:$0xff]
    %v489 = vld [vmem:[#allocation3 + $0xde0] sm:$0xff]
    %v490 = vld [vmem:[#allocation3 + $0xde8] sm:$0xff]
    %v491 = vld [vmem:[#allocation3 + $0xdf0] sm:$0xff]
    %v492 = vld [vmem:[#allocation3 + $0xdf8] sm:$0xff]
    %v493 = vld [vmem:[#allocation3 + $0xe00] sm:$0xff]
    %v494 = vld [vmem:[#allocation3 + $0xe08] sm:$0xff]
    %v495 = vld [vmem:[#allocation3 + $0xe10] sm:$0xff]
    %v496 = vld [vmem:[#allocation3 + $0xe18] sm:$0xff]
    %v497 = vld [vmem:[#allocation3 + $0xe20] sm:$0xff]
    %v498 = vld [vmem:[#allocation3 + $0xe28] sm:$0xff]
    %v499 = vld [vmem:[#allocation3 + $0xe30] sm:$0xff]
    %v500 = vld [vmem:[#allocation3 + $0xe38] sm:$0xff]
    %v501 = vld [vmem:[#allocation3 + $0xe40] sm:$0xff]
    %v502 = vld [vmem:[#allocation3 + $0xe48] sm:$0xff]
    %v503 = vld [vmem:[#allocation3 + $0xe50] sm:$0xff]
    %v504 = vld [vmem:[#allocation3 + $0xe58] sm:$0xff]
    %v505 = vld [vmem:[#allocation3 + $0xe60] sm:$0xff]
    %v506 = vld [vmem:[#allocation3 + $0xe68] sm:$0xff]
    %v507 = vld [vmem:[#allocation3 + $0xe70] sm:$0xff]
    %v508 = vld [vmem:[#allocation3 + $0xe78] sm:$0xff]
    %v509 = vld [vmem:[#allocation3 + $0xe80] sm:$0xff]
    %v510 = vld [vmem:[#allocation3 + $0xe88] sm:$0xff]
    %v511 = vld [vmem:[#allocation3 + $0xe90] sm:$0xff]
    %v512 = vld [vmem:[#allocation3 + $0xe98] sm:$0xff]
    %v513 = vld [vmem:[#allocation3 + $0xea0] sm:$0xff]
    %v514 = vld [vmem:[#allocation3 + $0xea8] sm:$0xff]
    %v515 = vld [vmem:[#allocation3 + $0xeb0] sm:$0xff]
    %v516 = vld [vmem:[#allocation3 + $0xeb8] sm:$0xff]
    %v517 = vld [vmem:[#allocation3 + $0xec0] sm:$0xff]
    %v518 = vld [vmem:[#allocation3 + $0xec8] sm:$0xff]
    %v519 = vld [vmem:[#allocation3 + $0xed0] sm:$0xff]
    %v520 = vld [vmem:[#allocation3 + $0xed8] sm:$0xff]
    %v521 = vld [vmem:[#allocation3 + $0xee0] sm:$0xff]
    %v522 = vld [vmem:[#allocation3 + $0xee8] sm:$0xff]
    %v523 = vld [vmem:[#allocation3 + $0xef0] sm:$0xff]
    %v524 = vld [vmem:[#allocation3 + $0xef8] sm:$0xff]
    %v525 = vld [vmem:[#allocation3 + $0xf00] sm:$0xff]
    %v526 = vld [vmem:[#allocation3 + $0xf08] sm:$0xff]
    %v527 = vld [vmem:[#allocation3 + $0xf10] sm:$0xff]
    %v528 = vld [vmem:[#allocation3 + $0xf18] sm:$0xff]
    %v529 = vld [vmem:[#allocation3 + $0xf20] sm:$0xff]
    %v530 = vld [vmem:[#allocation3 + $0xf28] sm:$0xff]
    %v531 = vld [vmem:[#allocation3 + $0xf30] sm:$0xff]
    %v532 = vld [vmem:[#allocation3 + $0xf38] sm:$0xff]
    %v533 = vld [vmem:[#allocation3 + $0xf40] sm:$0xff]
    %v534 = vld [vmem:[#allocation3 + $0xf48] sm:$0xff]
    %v535 = vld [vmem:[#allocation3 + $0xf50] sm:$0xff]
    %v536 = vld [vmem:[#allocation3 + $0xf58] sm:$0xff]
    %v537 = vld [vmem:[#allocation3 + $0xf60] sm:$0xff]
    %v538 = vld [vmem:[#allocation3 + $0xf68] sm:$0xff]
    %v539 = vld [vmem:[#allocation3 + $0xf70] sm:$0xff]
    %v540 = vld [vmem:[#allocation3 + $0xf78] sm:$0xff]
    %v541 = vld [vmem:[#allocation3 + $0xf80] sm:$0xff]
    %v542 = vld [vmem:[#allocation3 + $0xf88] sm:$0xff]
    %v543 = vld [vmem:[#allocation3 + $0xf90] sm:$0xff]
    %v544 = vld [vmem:[#allocation3 + $0xf98] sm:$0xff]
    %v545 = vld [vmem:[#allocation3 + $0xfa0] sm:$0xff]
    %v546 = vld [vmem:[#allocation3 + $0xfa8] sm:$0xff]
    %v547 = vld [vmem:[#allocation3 + $0xfb0] sm:$0xff]
    %v548 = vld [vmem:[#allocation3 + $0xfb8] sm:$0xff]
    %v549 = vld [vmem:[#allocation3 + $0xfc0] sm:$0xff]
    %v550 = vld [vmem:[#allocation3 + $0xfc8] sm:$0xff]
    %v551 = vld [vmem:[#allocation3 + $0xfd0] sm:$0xff]
    %v552 = vld [vmem:[#allocation3 + $0xfd8] sm:$0xff]
    %v553 = vld [vmem:[#allocation3 + $0xfe0] sm:$0xff]
    %v554 = vld [vmem:[#allocation3 + $0xfe8] sm:$0xff]
    %v555 = vld [vmem:[#allocation3 + $0xff0] sm:$0xff]
    %v556 = vld [vmem:[#allocation3 + $0xff8] sm:$0xff]
    %v557 = vld [vmem:[#allocation6] sm:$0xff]
    %v558 = vld [vmem:[#allocation6 + $0x8] sm:$0xff]
    %v559 = vld [vmem:[#allocation6 + $0x10] sm:$0xff]
    %v560 = vld [vmem:[#allocation6 + $0x18] sm:$0xff]
    %v561 = vld [vmem:[#allocation6 + $0x20] sm:$0xff]
    %v562 = vld [vmem:[#allocation6 + $0x28] sm:$0xff]
    %v563 = vld [vmem:[#allocation6 + $0x30] sm:$0xff]
    %v564 = vld [vmem:[#allocation6 + $0x38] sm:$0xff]
    %v565 = vld [vmem:[#allocation6 + $0x40] sm:$0xff]
    %v566 = vld [vmem:[#allocation6 + $0x48] sm:$0xff]
    %v567 = vld [vmem:[#allocation6 + $0x50] sm:$0xff]
    %v568 = vld [vmem:[#allocation6 + $0x58] sm:$0xff]
    %v569 = vld [vmem:[#allocation6 + $0x60] sm:$0xff]
    %v570 = vld [vmem:[#allocation6 + $0x68] sm:$0xff]
    %v571 = vld [vmem:[#allocation6 + $0x70] sm:$0xff]
    %v572 = vld [vmem:[#allocation6 + $0x78] sm:$0xff]
    %v573 = vld [vmem:[#allocation6 + $0x80] sm:$0xff]
    %v574 = vld [vmem:[#allocation6 + $0x88] sm:$0xff]
    %v575 = vld [vmem:[#allocation6 + $0x90] sm:$0xff]
    %v576 = vld [vmem:[#allocation6 + $0x98] sm:$0xff]
    %v577 = vld [vmem:[#allocation6 + $0xa0] sm:$0xff]
    %v578 = vld [vmem:[#allocation6 + $0xa8] sm:$0xff]
    %v579 = vld [vmem:[#allocation6 + $0xb0] sm:$0xff]
    %v580 = vld [vmem:[#allocation6 + $0xb8] sm:$0xff]
    %v581 = vld [vmem:[#allocation6 + $0xc0] sm:$0xff]
    %v582 = vld [vmem:[#allocation6 + $0xc8] sm:$0xff]
    %v583 = vld [vmem:[#allocation6 + $0xd0] sm:$0xff]
    %v584 = vld [vmem:[#allocation6 + $0xd8] sm:$0xff]
    %v585 = vld [vmem:[#allocation6 + $0xe0] sm:$0xff]
    %v586 = vld [vmem:[#allocation6 + $0xe8] sm:$0xff]
    %v587 = vld [vmem:[#allocation6 + $0xf0] sm:$0xff]
    %v588 = vld [vmem:[#allocation6 + $0xf8] sm:$0xff]
    %v589 = vld [vmem:[#allocation6 + $0x100] sm:$0xff]
    %v590 = vld [vmem:[#allocation6 + $0x108] sm:$0xff]
    %v591 = vld [vmem:[#allocation6 + $0x110] sm:$0xff]
    %v592 = vld [vmem:[#allocation6 + $0x118] sm:$0xff]
    %v593 = vld [vmem:[#allocation6 + $0x120] sm:$0xff]
    %v594 = vld [vmem:[#allocation6 + $0x128] sm:$0xff]
    %v595 = vld [vmem:[#allocation6 + $0x130] sm:$0xff]
    %v596 = vld [vmem:[#allocation6 + $0x138] sm:$0xff]
    %v597 = vld [vmem:[#allocation6 + $0x140] sm:$0xff]
    %v598 = vld [vmem:[#allocation6 + $0x148] sm:$0xff]
    %v599 = vld [vmem:[#allocation6 + $0x150] sm:$0xff]
    %v600 = vld [vmem:[#allocation6 + $0x158] sm:$0xff]
    %v601 = vld [vmem:[#allocation6 + $0x160] sm:$0xff]
    %v602 = vld [vmem:[#allocation6 + $0x168] sm:$0xff]
    %v603 = vld [vmem:[#allocation6 + $0x170] sm:$0xff]
    %v604 = vld [vmem:[#allocation6 + $0x178] sm:$0xff]
    %v605 = vld [vmem:[#allocation6 + $0x180] sm:$0xff]
    %v606 = vld [vmem:[#allocation6 + $0x188] sm:$0xff]
    %v607 = vld [vmem:[#allocation6 + $0x190] sm:$0xff]
    %v608 = vld [vmem:[#allocation6 + $0x198] sm:$0xff]
    %v609 = vld [vmem:[#allocation6 + $0x1a0] sm:$0xff]
    %v610 = vld [vmem:[#allocation6 + $0x1a8] sm:$0xff]
    %v611 = vld [vmem:[#allocation6 + $0x1b0] sm:$0xff]
    %v612 = vld [vmem:[#allocation6 + $0x1b8] sm:$0xff]
    %v613 = vld [vmem:[#allocation6 + $0x1c0] sm:$0xff]
    %v614 = vld [vmem:[#allocation6 + $0x1c8] sm:$0xff]
    %v615 = vld [vmem:[#allocation6 + $0x1d0] sm:$0xff]
    %v616 = vld [vmem:[#allocation6 + $0x1d8] sm:$0xff]
    %v617 = vld [vmem:[#allocation6 + $0x1e0] sm:$0xff]
    %v618 = vld [vmem:[#allocation6 + $0x1e8] sm:$0xff]
    %v619 = vld [vmem:[#allocation6 + $0x1f0] sm:$0xff]
    %v620 = vld [vmem:[#allocation6 + $0x1f8] sm:$0xff]
    %v621 = vld [vmem:[#allocation6 + $0x200] sm:$0xff]
    %v622 = vld [vmem:[#allocation6 + $0x208] sm:$0xff]
    %v623 = vld [vmem:[#allocation6 + $0x210] sm:$0xff]
    %v624 = vld [vmem:[#allocation6 + $0x218] sm:$0xff]
    %v625 = vld [vmem:[#allocation6 + $0x220] sm:$0xff]
    %v626 = vld [vmem:[#allocation6 + $0x228] sm:$0xff]
    %v627 = vld [vmem:[#allocation6 + $0x230] sm:$0xff]
    %v628 = vld [vmem:[#allocation6 + $0x238] sm:$0xff]
    %v629 = vld [vmem:[#allocation6 + $0x240] sm:$0xff]
    %v630 = vld [vmem:[#allocation6 + $0x248] sm:$0xff]
    %v631 = vld [vmem:[#allocation6 + $0x250] sm:$0xff]
    %v632 = vld [vmem:[#allocation6 + $0x258] sm:$0xff]
    %v633 = vld [vmem:[#allocation6 + $0x260] sm:$0xff]
    %v634 = vld [vmem:[#allocation6 + $0x268] sm:$0xff]
    %v635 = vld [vmem:[#allocation6 + $0x270] sm:$0xff]
    %v636 = vld [vmem:[#allocation6 + $0x278] sm:$0xff]
    %v637 = vld [vmem:[#allocation6 + $0x280] sm:$0xff]
    %v638 = vld [vmem:[#allocation6 + $0x288] sm:$0xff]
    %v639 = vld [vmem:[#allocation6 + $0x290] sm:$0xff]
    %v640 = vld [vmem:[#allocation6 + $0x298] sm:$0xff]
    %v641 = vld [vmem:[#allocation6 + $0x2a0] sm:$0xff]
    %v642 = vld [vmem:[#allocation6 + $0x2a8] sm:$0xff]
    %v643 = vld [vmem:[#allocation6 + $0x2b0] sm:$0xff]
    %v644 = vld [vmem:[#allocation6 + $0x2b8] sm:$0xff]
    %v645 = vld [vmem:[#allocation6 + $0x2c0] sm:$0xff]
    %v646 = vld [vmem:[#allocation6 + $0x2c8] sm:$0xff]
    %v647 = vld [vmem:[#allocation6 + $0x2d0] sm:$0xff]
    %v648 = vld [vmem:[#allocation6 + $0x2d8] sm:$0xff]
    %v649 = vld [vmem:[#allocation6 + $0x2e0] sm:$0xff]
    %v650 = vld [vmem:[#allocation6 + $0x2e8] sm:$0xff]
    %v651 = vld [vmem:[#allocation6 + $0x2f0] sm:$0xff]
    %v652 = vld [vmem:[#allocation6 + $0x2f8] sm:$0xff]
    %v653 = vld [vmem:[#allocation6 + $0x300] sm:$0xff]
    %v654 = vld [vmem:[#allocation6 + $0x308] sm:$0xff]
    %v655 = vld [vmem:[#allocation6 + $0x310] sm:$0xff]
    %v656 = vld [vmem:[#allocation6 + $0x318] sm:$0xff]
    %v657 = vld [vmem:[#allocation6 + $0x320] sm:$0xff]
    %v658 = vld [vmem:[#allocation6 + $0x328] sm:$0xff]
    %v659 = vld [vmem:[#allocation6 + $0x330] sm:$0xff]
    %v660 = vld [vmem:[#allocation6 + $0x338] sm:$0xff]
    %v661 = vld [vmem:[#allocation6 + $0x340] sm:$0xff]
    %v662 = vld [vmem:[#allocation6 + $0x348] sm:$0xff]
    %v663 = vld [vmem:[#allocation6 + $0x350] sm:$0xff]
    %v664 = vld [vmem:[#allocation6 + $0x358] sm:$0xff]
    %v665 = vld [vmem:[#allocation6 + $0x360] sm:$0xff]
    %v666 = vld [vmem:[#allocation6 + $0x368] sm:$0xff]
    %v667 = vld [vmem:[#allocation6 + $0x370] sm:$0xff]
    %v668 = vld [vmem:[#allocation6 + $0x378] sm:$0xff]
    %v669 = vld [vmem:[#allocation6 + $0x380] sm:$0xff]
    %v670 = vld [vmem:[#allocation6 + $0x388] sm:$0xff]
    %v671 = vld [vmem:[#allocation6 + $0x390] sm:$0xff]
    %v672 = vld [vmem:[#allocation6 + $0x398] sm:$0xff]
    %v673 = vld [vmem:[#allocation6 + $0x3a0] sm:$0xff]
    %v674 = vld [vmem:[#allocation6 + $0x3a8] sm:$0xff]
    %v675 = vld [vmem:[#allocation6 + $0x3b0] sm:$0xff]
    %v676 = vld [vmem:[#allocation6 + $0x3b8] sm:$0xff]
    %v677 = vld [vmem:[#allocation6 + $0x3c0] sm:$0xff]
    %v678 = vld [vmem:[#allocation6 + $0x3c8] sm:$0xff]
    %v679 = vld [vmem:[#allocation6 + $0x3d0] sm:$0xff]
    %v680 = vld [vmem:[#allocation6 + $0x3d8] sm:$0xff]
    %v681 = vld [vmem:[#allocation6 + $0x3e0] sm:$0xff]
    %v682 = vld [vmem:[#allocation6 + $0x3e8] sm:$0xff]
    %v683 = vld [vmem:[#allocation6 + $0x3f0] sm:$0xff]
    %v684 = vld [vmem:[#allocation6 + $0x3f8] sm:$0xff]
    %v685 = vld [vmem:[#allocation6 + $0x400] sm:$0xff]
    %v686 = vld [vmem:[#allocation6 + $0x408] sm:$0xff]
    %v687 = vld [vmem:[#allocation6 + $0x410] sm:$0xff]
    %v688 = vld [vmem:[#allocation6 + $0x418] sm:$0xff]
    %v689 = vld [vmem:[#allocation6 + $0x420] sm:$0xff]
    %v690 = vld [vmem:[#allocation6 + $0x428] sm:$0xff]
    %v691 = vld [vmem:[#allocation6 + $0x430] sm:$0xff]
    %v692 = vld [vmem:[#allocation6 + $0x438] sm:$0xff]
    %v693 = vld [vmem:[#allocation6 + $0x440] sm:$0xff]
    %v694 = vld [vmem:[#allocation6 + $0x448] sm:$0xff]
    %v695 = vld [vmem:[#allocation6 + $0x450] sm:$0xff]
    %v696 = vld [vmem:[#allocation6 + $0x458] sm:$0xff]
    %v697 = vld [vmem:[#allocation6 + $0x460] sm:$0xff]
    %v698 = vld [vmem:[#allocation6 + $0x468] sm:$0xff]
    %v699 = vld [vmem:[#allocation6 + $0x470] sm:$0xff]
    %v700 = vld [vmem:[#allocation6 + $0x478] sm:$0xff]
    %v701 = vld [vmem:[#allocation6 + $0x480] sm:$0xff]
    %v702 = vld [vmem:[#allocation6 + $0x488] sm:$0xff]
    %v703 = vld [vmem:[#allocation6 + $0x490] sm:$0xff]
    %v704 = vld [vmem:[#allocation6 + $0x498] sm:$0xff]
    %v705 = vld [vmem:[#allocation6 + $0x4a0] sm:$0xff]
    %v706 = vld [vmem:[#allocation6 + $0x4a8] sm:$0xff]
    %v707 = vld [vmem:[#allocation6 + $0x4b0] sm:$0xff]
    %v708 = vld [vmem:[#allocation6 + $0x4b8] sm:$0xff]
    %v709 = vld [vmem:[#allocation6 + $0x4c0] sm:$0xff]
    %v710 = vld [vmem:[#allocation6 + $0x4c8] sm:$0xff]
    %v711 = vld [vmem:[#allocation6 + $0x4d0] sm:$0xff]
    %v712 = vld [vmem:[#allocation6 + $0x4d8] sm:$0xff]
    %v713 = vld [vmem:[#allocation6 + $0x4e0] sm:$0xff]
    %v714 = vld [vmem:[#allocation6 + $0x4e8] sm:$0xff]
    %v715 = vld [vmem:[#allocation6 + $0x4f0] sm:$0xff]
    %v716 = vld [vmem:[#allocation6 + $0x4f8] sm:$0xff]
    %v717 = vld [vmem:[#allocation6 + $0x500] sm:$0xff]
    %v718 = vld [vmem:[#allocation6 + $0x508] sm:$0xff]
    %v719 = vld [vmem:[#allocation6 + $0x510] sm:$0xff]
    %v720 = vld [vmem:[#allocation6 + $0x518] sm:$0xff]
    %v721 = vld [vmem:[#allocation6 + $0x520] sm:$0xff]
    %v722 = vld [vmem:[#allocation6 + $0x528] sm:$0xff]
    %v723 = vld [vmem:[#allocation6 + $0x530] sm:$0xff]
    %v724 = vld [vmem:[#allocation6 + $0x538] sm:$0xff]
    %v725 = vld [vmem:[#allocation6 + $0x540] sm:$0xff]
    %v726 = vld [vmem:[#allocation6 + $0x548] sm:$0xff]
    %v727 = vld [vmem:[#allocation6 + $0x550] sm:$0xff]
    %v728 = vld [vmem:[#allocation6 + $0x558] sm:$0xff]
    %v729 = vld [vmem:[#allocation6 + $0x560] sm:$0xff]
    %v730 = vld [vmem:[#allocation6 + $0x568] sm:$0xff]
    %v731 = vld [vmem:[#allocation6 + $0x570] sm:$0xff]
    %v732 = vld [vmem:[#allocation6 + $0x578] sm:$0xff]
    %v733 = vld [vmem:[#allocation6 + $0x580] sm:$0xff]
    %v734 = vld [vmem:[#allocation6 + $0x588] sm:$0xff]
    %v735 = vld [vmem:[#allocation6 + $0x590] sm:$0xff]
    %v736 = vld [vmem:[#allocation6 + $0x598] sm:$0xff]
    %v737 = vld [vmem:[#allocation6 + $0x5a0] sm:$0xff]
    %v738 = vld [vmem:[#allocation6 + $0x5a8] sm:$0xff]
    %v739 = vld [vmem:[#allocation6 + $0x5b0] sm:$0xff]
    %v740 = vld [vmem:[#allocation6 + $0x5b8] sm:$0xff]
    %v741 = vld [vmem:[#allocation6 + $0x5c0] sm:$0xff]
    %v742 = vld [vmem:[#allocation6 + $0x5c8] sm:$0xff]
    %v743 = vld [vmem:[#allocation6 + $0x5d0] sm:$0xff]
    %v744 = vld [vmem:[#allocation6 + $0x5d8] sm:$0xff]
    %v745 = vld [vmem:[#allocation6 + $0x5e0] sm:$0xff]
    %v746 = vld [vmem:[#allocation6 + $0x5e8] sm:$0xff]
    %v747 = vld [vmem:[#allocation6 + $0x5f0] sm:$0xff]
    %v748 = vld [vmem:[#allocation6 + $0x5f8] sm:$0xff]
    %v749 = vld [vmem:[#allocation6 + $0x600] sm:$0xff]
    %v750 = vld [vmem:[#allocation6 + $0x608] sm:$0xff]
    %v751 = vld [vmem:[#allocation6 + $0x610] sm:$0xff]
    %v752 = vld [vmem:[#allocation6 + $0x618] sm:$0xff]
    %v753 = vld [vmem:[#allocation6 + $0x620] sm:$0xff]
    %v754 = vld [vmem:[#allocation6 + $0x628] sm:$0xff]
    %v755 = vld [vmem:[#allocation6 + $0x630] sm:$0xff]
    %v756 = vld [vmem:[#allocation6 + $0x638] sm:$0xff]
    %v757 = vld [vmem:[#allocation6 + $0x640] sm:$0xff]
    %v758 = vld [vmem:[#allocation6 + $0x648] sm:$0xff]
    %v759 = vld [vmem:[#allocation6 + $0x650] sm:$0xff]
    %v760 = vld [vmem:[#allocation6 + $0x658] sm:$0xff]
    %v761 = vld [vmem:[#allocation6 + $0x660] sm:$0xff]
    %v762 = vld [vmem:[#allocation6 + $0x668] sm:$0xff]
    %v763 = vld [vmem:[#allocation6 + $0x670] sm:$0xff]
    %v764 = vld [vmem:[#allocation6 + $0x678] sm:$0xff]
    %v765 = vld [vmem:[#allocation6 + $0x680] sm:$0xff]
    %v766 = vld [vmem:[#allocation6 + $0x688] sm:$0xff]
    %v767 = vld [vmem:[#allocation6 + $0x690] sm:$0xff]
    %v768 = vld [vmem:[#allocation6 + $0x698] sm:$0xff]
    %v769 = vld [vmem:[#allocation6 + $0x6a0] sm:$0xff]
    %v770 = vld [vmem:[#allocation6 + $0x6a8] sm:$0xff]
    %v771 = vld [vmem:[#allocation6 + $0x6b0] sm:$0xff]
    %v772 = vld [vmem:[#allocation6 + $0x6b8] sm:$0xff]
    %v773 = vld [vmem:[#allocation6 + $0x6c0] sm:$0xff]
    %v774 = vld [vmem:[#allocation6 + $0x6c8] sm:$0xff]
    %v775 = vld [vmem:[#allocation6 + $0x6d0] sm:$0xff]
    %v776 = vld [vmem:[#allocation6 + $0x6d8] sm:$0xff]
    %v777 = vld [vmem:[#allocation6 + $0x6e0] sm:$0xff]
    %v778 = vld [vmem:[#allocation6 + $0x6e8] sm:$0xff]
    %v779 = vld [vmem:[#allocation6 + $0x6f0] sm:$0xff]
    %v780 = vld [vmem:[#allocation6 + $0x6f8] sm:$0xff]
    %v781 = vld [vmem:[#allocation6 + $0x700] sm:$0xff]
    %v782 = vld [vmem:[#allocation6 + $0x708] sm:$0xff]
    %v783 = vld [vmem:[#allocation6 + $0x710] sm:$0xff]
    %v784 = vld [vmem:[#allocation6 + $0x718] sm:$0xff]
    %v785 = vld [vmem:[#allocation6 + $0x720] sm:$0xff]
    %v786 = vld [vmem:[#allocation6 + $0x728] sm:$0xff]
    %v787 = vld [vmem:[#allocation6 + $0x730] sm:$0xff]
    %v788 = vld [vmem:[#allocation6 + $0x738] sm:$0xff]
    %v789 = vld [vmem:[#allocation6 + $0x740] sm:$0xff]
    %v790 = vld [vmem:[#allocation6 + $0x748] sm:$0xff]
    %v791 = vld [vmem:[#allocation6 + $0x750] sm:$0xff]
    %v792 = vld [vmem:[#allocation6 + $0x758] sm:$0xff]
    %v793 = vld [vmem:[#allocation6 + $0x760] sm:$0xff]
    %v794 = vld [vmem:[#allocation6 + $0x768] sm:$0xff]
    %v795 = vld [vmem:[#allocation6 + $0x770] sm:$0xff]
    %v796 = vld [vmem:[#allocation6 + $0x778] sm:$0xff]
    %v797 = vld [vmem:[#allocation6 + $0x780] sm:$0xff]
    %v798 = vld [vmem:[#allocation6 + $0x788] sm:$0xff]
    %v799 = vld [vmem:[#allocation6 + $0x790] sm:$0xff]
    %v800 = vld [vmem:[#allocation6 + $0x798] sm:$0xff]
    %v801 = vld [vmem:[#allocation6 + $0x7a0] sm:$0xff]
    %v802 = vld [vmem:[#allocation6 + $0x7a8] sm:$0xff]
    %v803 = vld [vmem:[#allocation6 + $0x7b0] sm:$0xff]
    %v804 = vld [vmem:[#allocation6 + $0x7b8] sm:$0xff]
    %v805 = vld [vmem:[#allocation6 + $0x7c0] sm:$0xff]
    %v806 = vld [vmem:[#allocation6 + $0x7c8] sm:$0xff]
    %v807 = vld [vmem:[#allocation6 + $0x7d0] sm:$0xff]
    %v808 = vld [vmem:[#allocation6 + $0x7d8] sm:$0xff]
    %v809 = vld [vmem:[#allocation6 + $0x7e0] sm:$0xff]
    %v810 = vld [vmem:[#allocation6 + $0x7e8] sm:$0xff]
    %v811 = vld [vmem:[#allocation6 + $0x7f0] sm:$0xff]
    %v812 = vld [vmem:[#allocation6 + $0x7f8] sm:$0xff]
    %v813 = vld [vmem:[#allocation6 + $0x800] sm:$0xff]
    %v814 = vld [vmem:[#allocation6 + $0x808] sm:$0xff]
    %v815 = vld [vmem:[#allocation6 + $0x810] sm:$0xff]
    %v816 = vld [vmem:[#allocation6 + $0x818] sm:$0xff]
    %v817 = vld [vmem:[#allocation6 + $0x820] sm:$0xff]
    %v818 = vld [vmem:[#allocation6 + $0x828] sm:$0xff]
    %v819 = vld [vmem:[#allocation6 + $0x830] sm:$0xff]
    %v820 = vld [vmem:[#allocation6 + $0x838] sm:$0xff]
    %v821 = vld [vmem:[#allocation6 + $0x840] sm:$0xff]
    %v822 = vld [vmem:[#allocation6 + $0x848] sm:$0xff]
    %v823 = vld [vmem:[#allocation6 + $0x850] sm:$0xff]
    %v824 = vld [vmem:[#allocation6 + $0x858] sm:$0xff]
    %v825 = vld [vmem:[#allocation6 + $0x860] sm:$0xff]
    %v826 = vld [vmem:[#allocation6 + $0x868] sm:$0xff]
    %v827 = vld [vmem:[#allocation6 + $0x870] sm:$0xff]
    %v828 = vld [vmem:[#allocation6 + $0x878] sm:$0xff]
    %v829 = vld [vmem:[#allocation6 + $0x880] sm:$0xff]
    %v830 = vld [vmem:[#allocation6 + $0x888] sm:$0xff]
    %v831 = vld [vmem:[#allocation6 + $0x890] sm:$0xff]
    %v832 = vld [vmem:[#allocation6 + $0x898] sm:$0xff]
    %v833 = vld [vmem:[#allocation6 + $0x8a0] sm:$0xff]
    %v834 = vld [vmem:[#allocation6 + $0x8a8] sm:$0xff]
    %v835 = vld [vmem:[#allocation6 + $0x8b0] sm:$0xff]
    %v836 = vld [vmem:[#allocation6 + $0x8b8] sm:$0xff]
    %v837 = vld [vmem:[#allocation6 + $0x8c0] sm:$0xff]
    %v838 = vld [vmem:[#allocation6 + $0x8c8] sm:$0xff]
    %v839 = vld [vmem:[#allocation6 + $0x8d0] sm:$0xff]
    %v840 = vld [vmem:[#allocation6 + $0x8d8] sm:$0xff]
    %v841 = vld [vmem:[#allocation6 + $0x8e0] sm:$0xff]
    %v842 = vld [vmem:[#allocation6 + $0x8e8] sm:$0xff]
    %v843 = vld [vmem:[#allocation6 + $0x8f0] sm:$0xff]
    %v844 = vld [vmem:[#allocation6 + $0x8f8] sm:$0xff]
    %v845 = vld [vmem:[#allocation6 + $0x900] sm:$0xff]
    %v846 = vld [vmem:[#allocation6 + $0x908] sm:$0xff]
    %v847 = vld [vmem:[#allocation6 + $0x910] sm:$0xff]
    %v848 = vld [vmem:[#allocation6 + $0x918] sm:$0xff]
    %v849 = vld [vmem:[#allocation6 + $0x920] sm:$0xff]
    %v850 = vld [vmem:[#allocation6 + $0x928] sm:$0xff]
    %v851 = vld [vmem:[#allocation6 + $0x930] sm:$0xff]
    %v852 = vld [vmem:[#allocation6 + $0x938] sm:$0xff]
    %v853 = vld [vmem:[#allocation6 + $0x940] sm:$0xff]
    %v854 = vld [vmem:[#allocation6 + $0x948] sm:$0xff]
    %v855 = vld [vmem:[#allocation6 + $0x950] sm:$0xff]
    %v856 = vld [vmem:[#allocation6 + $0x958] sm:$0xff]
    %v857 = vld [vmem:[#allocation6 + $0x960] sm:$0xff]
    %v858 = vld [vmem:[#allocation6 + $0x968] sm:$0xff]
    %v859 = vld [vmem:[#allocation6 + $0x970] sm:$0xff]
    %v860 = vld [vmem:[#allocation6 + $0x978] sm:$0xff]
    %v861 = vld [vmem:[#allocation6 + $0x980] sm:$0xff]
    %v862 = vld [vmem:[#allocation6 + $0x988] sm:$0xff]
    %v863 = vld [vmem:[#allocation6 + $0x990] sm:$0xff]
    %v864 = vld [vmem:[#allocation6 + $0x998] sm:$0xff]
    %v865 = vld [vmem:[#allocation6 + $0x9a0] sm:$0xff]
    %v866 = vld [vmem:[#allocation6 + $0x9a8] sm:$0xff]
    %v867 = vld [vmem:[#allocation6 + $0x9b0] sm:$0xff]
    %v868 = vld [vmem:[#allocation6 + $0x9b8] sm:$0xff]
    %v869 = vld [vmem:[#allocation6 + $0x9c0] sm:$0xff]
    %v870 = vld [vmem:[#allocation6 + $0x9c8] sm:$0xff]
    %v871 = vld [vmem:[#allocation6 + $0x9d0] sm:$0xff]
    %v872 = vld [vmem:[#allocation6 + $0x9d8] sm:$0xff]
    %v873 = vld [vmem:[#allocation6 + $0x9e0] sm:$0xff]
    %v874 = vld [vmem:[#allocation6 + $0x9e8] sm:$0xff]
    %v875 = vld [vmem:[#allocation6 + $0x9f0] sm:$0xff]
    %v876 = vld [vmem:[#allocation6 + $0x9f8] sm:$0xff]
    %v877 = vld [vmem:[#allocation6 + $0xa00] sm:$0xff]
    %v878 = vld [vmem:[#allocation6 + $0xa08] sm:$0xff]
    %v879 = vld [vmem:[#allocation6 + $0xa10] sm:$0xff]
    %v880 = vld [vmem:[#allocation6 + $0xa18] sm:$0xff]
    %v881 = vld [vmem:[#allocation6 + $0xa20] sm:$0xff]
    %v882 = vld [vmem:[#allocation6 + $0xa28] sm:$0xff]
    %v883 = vld [vmem:[#allocation6 + $0xa30] sm:$0xff]
    %v884 = vld [vmem:[#allocation6 + $0xa38] sm:$0xff]
    %v885 = vld [vmem:[#allocation6 + $0xa40] sm:$0xff]
    %v886 = vld [vmem:[#allocation6 + $0xa48] sm:$0xff]
    %v887 = vld [vmem:[#allocation6 + $0xa50] sm:$0xff]
    %v888 = vld [vmem:[#allocation6 + $0xa58] sm:$0xff]
    %v889 = vld [vmem:[#allocation6 + $0xa60] sm:$0xff]
    %v890 = vld [vmem:[#allocation6 + $0xa68] sm:$0xff]
    %v891 = vld [vmem:[#allocation6 + $0xa70] sm:$0xff]
    %v892 = vld [vmem:[#allocation6 + $0xa78] sm:$0xff]
    %v893 = vld [vmem:[#allocation6 + $0xa80] sm:$0xff]
    %v894 = vld [vmem:[#allocation6 + $0xa88] sm:$0xff]
    %v895 = vld [vmem:[#allocation6 + $0xa90] sm:$0xff]
    %v896 = vld [vmem:[#allocation6 + $0xa98] sm:$0xff]
    %v897 = vld [vmem:[#allocation6 + $0xaa0] sm:$0xff]
    %v898 = vld [vmem:[#allocation6 + $0xaa8] sm:$0xff]
    %v899 = vld [vmem:[#allocation6 + $0xab0] sm:$0xff]
    %v900 = vld [vmem:[#allocation6 + $0xab8] sm:$0xff]
    %v901 = vld [vmem:[#allocation6 + $0xac0] sm:$0xff]
    %v902 = vld [vmem:[#allocation6 + $0xac8] sm:$0xff]
    %v903 = vld [vmem:[#allocation6 + $0xad0] sm:$0xff]
    %v904 = vld [vmem:[#allocation6 + $0xad8] sm:$0xff]
    %v905 = vld [vmem:[#allocation6 + $0xae0] sm:$0xff]
    %v906 = vld [vmem:[#allocation6 + $0xae8] sm:$0xff]
    %v907 = vld [vmem:[#allocation6 + $0xaf0] sm:$0xff]
    %v908 = vld [vmem:[#allocation6 + $0xaf8] sm:$0xff]
    %v909 = vld [vmem:[#allocation6 + $0xb00] sm:$0xff]
    %v910 = vld [vmem:[#allocation6 + $0xb08] sm:$0xff]
    %v911 = vld [vmem:[#allocation6 + $0xb10] sm:$0xff]
    %v912 = vld [vmem:[#allocation6 + $0xb18] sm:$0xff]
    %v913 = vld [vmem:[#allocation6 + $0xb20] sm:$0xff]
    %v914 = vld [vmem:[#allocation6 + $0xb28] sm:$0xff]
    %v915 = vld [vmem:[#allocation6 + $0xb30] sm:$0xff]
    %v916 = vld [vmem:[#allocation6 + $0xb38] sm:$0xff]
    %v917 = vld [vmem:[#allocation6 + $0xb40] sm:$0xff]
    %v918 = vld [vmem:[#allocation6 + $0xb48] sm:$0xff]
    %v919 = vld [vmem:[#allocation6 + $0xb50] sm:$0xff]
    %v920 = vld [vmem:[#allocation6 + $0xb58] sm:$0xff]
    %v921 = vld [vmem:[#allocation6 + $0xb60] sm:$0xff]
    %v922 = vld [vmem:[#allocation6 + $0xb68] sm:$0xff]
    %v923 = vld [vmem:[#allocation6 + $0xb70] sm:$0xff]
    %v924 = vld [vmem:[#allocation6 + $0xb78] sm:$0xff]
    %v925 = vld [vmem:[#allocation6 + $0xb80] sm:$0xff]
    %v926 = vld [vmem:[#allocation6 + $0xb88] sm:$0xff]
    %v927 = vld [vmem:[#allocation6 + $0xb90] sm:$0xff]
    %v928 = vld [vmem:[#allocation6 + $0xb98] sm:$0xff]
    %v929 = vld [vmem:[#allocation6 + $0xba0] sm:$0xff]
    %v930 = vld [vmem:[#allocation6 + $0xba8] sm:$0xff]
    %v931 = vld [vmem:[#allocation6 + $0xbb0] sm:$0xff]
    %v932 = vld [vmem:[#allocation6 + $0xbb8] sm:$0xff]
    %v933 = vld [vmem:[#allocation6 + $0xbc0] sm:$0xff]
    %v934 = vld [vmem:[#allocation6 + $0xbc8] sm:$0xff]
    %v935 = vld [vmem:[#allocation6 + $0xbd0] sm:$0xff]
    %v936 = vld [vmem:[#allocation6 + $0xbd8] sm:$0xff]
    %v937 = vld [vmem:[#allocation6 + $0xbe0] sm:$0xff]
    %v938 = vld [vmem:[#allocation6 + $0xbe8] sm:$0xff]
    %v939 = vld [vmem:[#allocation6 + $0xbf0] sm:$0xff]
    %v940 = vld [vmem:[#allocation6 + $0xbf8] sm:$0xff]
    %v941 = vld [vmem:[#allocation6 + $0xc00] sm:$0xff]
    %v942 = vld [vmem:[#allocation6 + $0xc08] sm:$0xff]
    %v943 = vld [vmem:[#allocation6 + $0xc10] sm:$0xff]
    %v944 = vld [vmem:[#allocation6 + $0xc18] sm:$0xff]
    %v945 = vld [vmem:[#allocation6 + $0xc20] sm:$0xff]
    %v946 = vld [vmem:[#allocation6 + $0xc28] sm:$0xff]
    %v947 = vld [vmem:[#allocation6 + $0xc30] sm:$0xff]
    %v948 = vld [vmem:[#allocation6 + $0xc38] sm:$0xff]
    %v949 = vld [vmem:[#allocation6 + $0xc40] sm:$0xff]
    %v950 = vld [vmem:[#allocation6 + $0xc48] sm:$0xff]
    %v951 = vld [vmem:[#allocation6 + $0xc50] sm:$0xff]
    %v952 = vld [vmem:[#allocation6 + $0xc58] sm:$0xff]
    %v953 = vld [vmem:[#allocation6 + $0xc60] sm:$0xff]
    %v954 = vld [vmem:[#allocation6 + $0xc68] sm:$0xff]
    %v955 = vld [vmem:[#allocation6 + $0xc70] sm:$0xff]
    %v956 = vld [vmem:[#allocation6 + $0xc78] sm:$0xff]
    %v957 = vld [vmem:[#allocation6 + $0xc80] sm:$0xff]
    %v958 = vld [vmem:[#allocation6 + $0xc88] sm:$0xff]
    %v959 = vld [vmem:[#allocation6 + $0xc90] sm:$0xff]
    %v960 = vld [vmem:[#allocation6 + $0xc98] sm:$0xff]
    %v961 = vld [vmem:[#allocation6 + $0xca0] sm:$0xff]
    %v962 = vld [vmem:[#allocation6 + $0xca8] sm:$0xff]
    %v963 = vld [vmem:[#allocation6 + $0xcb0] sm:$0xff]
    %v964 = vld [vmem:[#allocation6 + $0xcb8] sm:$0xff]
    %v965 = vld [vmem:[#allocation6 + $0xcc0] sm:$0xff]
    %v966 = vld [vmem:[#allocation6 + $0xcc8] sm:$0xff]
    %v967 = vld [vmem:[#allocation6 + $0xcd0] sm:$0xff]
    %v968 = vld [vmem:[#allocation6 + $0xcd8] sm:$0xff]
    %v969 = vld [vmem:[#allocation6 + $0xce0] sm:$0xff]
    %v970 = vld [vmem:[#allocation6 + $0xce8] sm:$0xff]
    %v971 = vld [vmem:[#allocation6 + $0xcf0] sm:$0xff]
    %v972 = vld [vmem:[#allocation6 + $0xcf8] sm:$0xff]
    %v973 = vld [vmem:[#allocation6 + $0xd00] sm:$0xff]
    %v974 = vld [vmem:[#allocation6 + $0xd08] sm:$0xff]
    %v975 = vld [vmem:[#allocation6 + $0xd10] sm:$0xff]
    %v976 = vld [vmem:[#allocation6 + $0xd18] sm:$0xff]
    %v977 = vld [vmem:[#allocation6 + $0xd20] sm:$0xff]
    %v978 = vld [vmem:[#allocation6 + $0xd28] sm:$0xff]
    %v979 = vld [vmem:[#allocation6 + $0xd30] sm:$0xff]
    %v980 = vld [vmem:[#allocation6 + $0xd38] sm:$0xff]
    %v981 = vld [vmem:[#allocation6 + $0xd40] sm:$0xff]
    %v982 = vld [vmem:[#allocation6 + $0xd48] sm:$0xff]
    %v983 = vld [vmem:[#allocation6 + $0xd50] sm:$0xff]
    %v984 = vld [vmem:[#allocation6 + $0xd58] sm:$0xff]
    %v985 = vld [vmem:[#allocation6 + $0xd60] sm:$0xff]
    %v986 = vld [vmem:[#allocation6 + $0xd68] sm:$0xff]
    %v987 = vld [vmem:[#allocation6 + $0xd70] sm:$0xff]
    %v988 = vld [vmem:[#allocation6 + $0xd78] sm:$0xff]
    %v989 = vld [vmem:[#allocation6 + $0xd80] sm:$0xff]
    %v990 = vld [vmem:[#allocation6 + $0xd88] sm:$0xff]
    %v991 = vld [vmem:[#allocation6 + $0xd90] sm:$0xff]
    %v992 = vld [vmem:[#allocation6 + $0xd98] sm:$0xff]
    %v993 = vld [vmem:[#allocation6 + $0xda0] sm:$0xff]
    %v994 = vld [vmem:[#allocation6 + $0xda8] sm:$0xff]
    %v995 = vld [vmem:[#allocation6 + $0xdb0] sm:$0xff]
    %v996 = vld [vmem:[#allocation6 + $0xdb8] sm:$0xff]
    %v997 = vld [vmem:[#allocation6 + $0xdc0] sm:$0xff]
    %v998 = vld [vmem:[#allocation6 + $0xdc8] sm:$0xff]
    %v999 = vld [vmem:[#allocation6 + $0xdd0] sm:$0xff]
    %v1000 = vld [vmem:[#allocation6 + $0xdd8] sm:$0xff]
    %v1001 = vld [vmem:[#allocation6 + $0xde0] sm:$0xff]
    %v1002 = vld [vmem:[#allocation6 + $0xde8] sm:$0xff]
    %v1003 = vld [vmem:[#allocation6 + $0xdf0] sm:$0xff]
    %v1004 = vld [vmem:[#allocation6 + $0xdf8] sm:$0xff]
    %v1005 = vld [vmem:[#allocation6 + $0xe00] sm:$0xff]
    %v1006 = vld [vmem:[#allocation6 + $0xe08] sm:$0xff]
    %v1007 = vld [vmem:[#allocation6 + $0xe10] sm:$0xff]
    %v1008 = vld [vmem:[#allocation6 + $0xe18] sm:$0xff]
    %v1009 = vld [vmem:[#allocation6 + $0xe20] sm:$0xff]
    %v1010 = vld [vmem:[#allocation6 + $0xe28] sm:$0xff]
    %v1011 = vld [vmem:[#allocation6 + $0xe30] sm:$0xff]
    %v1012 = vld [vmem:[#allocation6 + $0xe38] sm:$0xff]
    %v1013 = vld [vmem:[#allocation6 + $0xe40] sm:$0xff]
    %v1014 = vld [vmem:[#allocation6 + $0xe48] sm:$0xff]
    %v1015 = vld [vmem:[#allocation6 + $0xe50] sm:$0xff]
    %v1016 = vld [vmem:[#allocation6 + $0xe58] sm:$0xff]
    %v1017 = vld [vmem:[#allocation6 + $0xe60] sm:$0xff]
    %v1018 = vld [vmem:[#allocation6 + $0xe68] sm:$0xff]
    %v1019 = vld [vmem:[#allocation6 + $0xe70] sm:$0xff]
    %v1020 = vld [vmem:[#allocation6 + $0xe78] sm:$0xff]
    %v1021 = vld [vmem:[#allocation6 + $0xe80] sm:$0xff]
    %v1022 = vld [vmem:[#allocation6 + $0xe88] sm:$0xff]
    %v1023 = vld [vmem:[#allocation6 + $0xe90] sm:$0xff]
    %v1024 = vld [vmem:[#allocation6 + $0xe98] sm:$0xff]
    %v1025 = vld [vmem:[#allocation6 + $0xea0] sm:$0xff]
    %v1026 = vld [vmem:[#allocation6 + $0xea8] sm:$0xff]
    %v1027 = vld [vmem:[#allocation6 + $0xeb0] sm:$0xff]
    %v1028 = vld [vmem:[#allocation6 + $0xeb8] sm:$0xff]
    %v1029 = vld [vmem:[#allocation6 + $0xec0] sm:$0xff]
    %v1030 = vld [vmem:[#allocation6 + $0xec8] sm:$0xff]
    %v1031 = vld [vmem:[#allocation6 + $0xed0] sm:$0xff]
    %v1032 = vld [vmem:[#allocation6 + $0xed8] sm:$0xff]
    %v1033 = vld [vmem:[#allocation6 + $0xee0] sm:$0xff]
    %v1034 = vld [vmem:[#allocation6 + $0xee8] sm:$0xff]
    %v1035 = vld [vmem:[#allocation6 + $0xef0] sm:$0xff]
    %v1036 = vld [vmem:[#allocation6 + $0xef8] sm:$0xff]
    %v1037 = vld [vmem:[#allocation6 + $0xf00] sm:$0xff]
    %v1038 = vld [vmem:[#allocation6 + $0xf08] sm:$0xff]
    %v1039 = vld [vmem:[#allocation6 + $0xf10] sm:$0xff]
    %v1040 = vld [vmem:[#allocation6 + $0xf18] sm:$0xff]
    %v1041 = vld [vmem:[#allocation6 + $0xf20] sm:$0xff]
    %v1042 = vld [vmem:[#allocation6 + $0xf28] sm:$0xff]
    %v1043 = vld [vmem:[#allocation6 + $0xf30] sm:$0xff]
    %v1044 = vld [vmem:[#allocation6 + $0xf38] sm:$0xff]
    %v1045 = vld [vmem:[#allocation6 + $0xf40] sm:$0xff]
    %v1046 = vld [vmem:[#allocation6 + $0xf48] sm:$0xff]
    %v1047 = vld [vmem:[#allocation6 + $0xf50] sm:$0xff]
    %v1048 = vld [vmem:[#allocation6 + $0xf58] sm:$0xff]
    %v1049 = vld [vmem:[#allocation6 + $0xf60] sm:$0xff]
    %v1050 = vld [vmem:[#allocation6 + $0xf68] sm:$0xff]
    %v1051 = vld [vmem:[#allocation6 + $0xf70] sm:$0xff]
    %v1052 = vld [vmem:[#allocation6 + $0xf78] sm:$0xff]
    %v1053 = vld [vmem:[#allocation6 + $0xf80] sm:$0xff]
    %v1054 = vld [vmem:[#allocation6 + $0xf88] sm:$0xff]
    %v1055 = vld [vmem:[#allocation6 + $0xf90] sm:$0xff]
    %v1056 = vld [vmem:[#allocation6 + $0xf98] sm:$0xff]
    %v1057 = vld [vmem:[#allocation6 + $0xfa0] sm:$0xff]
    %v1058 = vld [vmem:[#allocation6 + $0xfa8] sm:$0xff]
    %v1059 = vld [vmem:[#allocation6 + $0xfb0] sm:$0xff]
    %v1060 = vld [vmem:[#allocation6 + $0xfb8] sm:$0xff]
    %v1061 = vld [vmem:[#allocation6 + $0xfc0] sm:$0xff]
    %v1062 = vld [vmem:[#allocation6 + $0xfc8] sm:$0xff]
    %v1063 = vld [vmem:[#allocation6 + $0xfd0] sm:$0xff]
    %v1064 = vld [vmem:[#allocation6 + $0xfd8] sm:$0xff]
    %v1065 = vld [vmem:[#allocation6 + $0xfe0] sm:$0xff]
    %v1066 = vld [vmem:[#allocation6 + $0xfe8] sm:$0xff]
    %v1067 = vld [vmem:[#allocation6 + $0xff0] sm:$0xff]
    %v1068 = vld [vmem:[#allocation6 + $0xff8] sm:$0xff]
    %s1069 = ssub.f32 1.0, %s44
    %v1070 = vstv %s1069
    %v1071 = vmul.f32 %v1070, %v45
    %v1072 = vmul.f32 %v1070, %v46
    %v1073 = vmul.f32 %v1070, %v47
    %v1074 = vmul.f32 %v1070, %v48
    %v1075 = vmul.f32 %v1070, %v49
    %v1076 = vmul.f32 %v1070, %v50
    %v1077 = vmul.f32 %v1070, %v51
    %v1078 = vmul.f32 %v1070, %v52
    %v1079 = vmul.f32 %v1070, %v53
    %v1080 = vmul.f32 %v1070, %v54
    %v1081 = vmul.f32 %v1070, %v55
    %v1082 = vmul.f32 %v1070, %v56
    %v1083 = vmul.f32 %v1070, %v57
    %v1084 = vmul.f32 %v1070, %v58
    %v1085 = vmul.f32 %v1070, %v59
    %v1086 = vmul.f32 %v1070, %v60
    %v1087 = vmul.f32 %v1070, %v61
    %v1088 = vmul.f32 %v1070, %v62
    %v1089 = vmul.f32 %v1070, %v63
    %v1090 = vmul.f32 %v1070, %v64
    %v1091 = vmul.f32 %v1070, %v65
    %v1092 = vmul.f32 %v1070, %v66
    %v1093 = vmul.f32 %v1070, %v67
    %v1094 = vmul.f32 %v1070, %v68
    %v1095 = vmul.f32 %v1070, %v69
    %v1096 = vmul.f32 %v1070, %v70
    %v1097 = vmul.f32 %v1070, %v71
    %v1098 = vmul.f32 %v1070, %v72
    %v1099 = vmul.f32 %v1070, %v73
    %v1100 = vmul.f32 %v1070, %v74
    %v1101 = vmul.f32 %v1070, %v75
    %v1102 = vmul.f32 %v1070, %v76
    %v1103 = vmul.f32 %v1070, %v77
    %v1104 = vmul.f32 %v1070, %v78
    %v1105 = vmul.f32 %v1070, %v79
    %v1106 = vmul.f32 %v1070, %v80
    %v1107 = vmul.f32 %v1070, %v81
    %v1108 = vmul.f32 %v1070, %v82
    %v1109 = vmul.f32 %v1070, %v83
    %v1110 = vmul.f32 %v1070, %v84
    %v1111 = vmul.f32 %v1070, %v85
    %v1112 = vmul.f32 %v1070, %v86
    %v1113 = vmul.f32 %v1070, %v87
    %v1114 = vmul.f32 %v1070, %v88
    %v1115 = vmul.f32 %v1070, %v89
    %v1116 = vmul.f32 %v1070, %v90
    %v1117 = vmul.f32 %v1070, %v91
    %v1118 = vmul.f32 %v1070, %v92
    %v1119 = vmul.f32 %v1070, %v93
    %v1120 = vmul.f32 %v1070, %v94
    %v1121 = vmul.f32 %v1070, %v95
    %v1122 = vmul.f32 %v1070, %v96
    %v1123 = vmul.f32 %v1070, %v97
    %v1124 = vmul.f32 %v1070, %v98
    %v1125 = vmul.f32 %v1070, %v99
    %v1126 = vmul.f32 %v1070, %v100
    %v1127 = vmul.f32 %v1070, %v101
    %v1128 = vmul.f32 %v1070, %v102
    %v1129 = vmul.f32 %v1070, %v103
    %v1130 = vmul.f32 %v1070, %v104
    %v1131 = vmul.f32 %v1070, %v105
    %v1132 = vmul.f32 %v1070, %v106
    %v1133 = vmul.f32 %v1070, %v107
    %v1134 = vmul.f32 %v1070, %v108
    %v1135 = vmul.f32 %v1070, %v109
    %v1136 = vmul.f32 %v1070, %v110
    %v1137 = vmul.f32 %v1070, %v111
    %v1138 = vmul.f32 %v1070, %v112
    %v1139 = vmul.f32 %v1070, %v113
    %v1140 = vmul.f32 %v1070, %v114
    %v1141 = vmul.f32 %v1070, %v115
    %v1142 = vmul.f32 %v1070, %v116
    %v1143 = vmul.f32 %v1070, %v117
    %v1144 = vmul.f32 %v1070, %v118
    %v1145 = vmul.f32 %v1070, %v119
    %v1146 = vmul.f32 %v1070, %v120
    %v1147 = vmul.f32 %v1070, %v121
    %v1148 = vmul.f32 %v1070, %v122
    %v1149 = vmul.f32 %v1070, %v123
    %v1150 = vmul.f32 %v1070, %v124
    %v1151 = vmul.f32 %v1070, %v125
    %v1152 = vmul.f32 %v1070, %v126
    %v1153 = vmul.f32 %v1070, %v127
    %v1154 = vmul.f32 %v1070, %v128
    %v1155 = vmul.f32 %v1070, %v129
    %v1156 = vmul.f32 %v1070, %v130
    %v1157 = vmul.f32 %v1070, %v131
    %v1158 = vmul.f32 %v1070, %v132
    %v1159 = vmul.f32 %v1070, %v133
    %v1160 = vmul.f32 %v1070, %v134
    %v1161 = vmul.f32 %v1070, %v135
    %v1162 = vmul.f32 %v1070, %v136
    %v1163 = vmul.f32 %v1070, %v137
    %v1164 = vmul.f32 %v1070, %v138
    %v1165 = vmul.f32 %v1070, %v139
    %v1166 = vmul.f32 %v1070, %v140
    %v1167 = vmul.f32 %v1070, %v141
    %v1168 = vmul.f32 %v1070, %v142
    %v1169 = vmul.f32 %v1070, %v143
    %v1170 = vmul.f32 %v1070, %v144
    %v1171 = vmul.f32 %v1070, %v145
    %v1172 = vmul.f32 %v1070, %v146
    %v1173 = vmul.f32 %v1070, %v147
    %v1174 = vmul.f32 %v1070, %v148
    %v1175 = vmul.f32 %v1070, %v149
    %v1176 = vmul.f32 %v1070, %v150
    %v1177 = vmul.f32 %v1070, %v151
    %v1178 = vmul.f32 %v1070, %v152
    %v1179 = vmul.f32 %v1070, %v153
    %v1180 = vmul.f32 %v1070, %v154
    %v1181 = vmul.f32 %v1070, %v155
    %v1182 = vmul.f32 %v1070, %v156
    %v1183 = vmul.f32 %v1070, %v157
    %v1184 = vmul.f32 %v1070, %v158
    %v1185 = vmul.f32 %v1070, %v159
    %v1186 = vmul.f32 %v1070, %v160
    %v1187 = vmul.f32 %v1070, %v161
    %v1188 = vmul.f32 %v1070, %v162
    %v1189 = vmul.f32 %v1070, %v163
    %v1190 = vmul.f32 %v1070, %v164
    %v1191 = vmul.f32 %v1070, %v165
    %v1192 = vmul.f32 %v1070, %v166
    %v1193 = vmul.f32 %v1070, %v167
    %v1194 = vmul.f32 %v1070, %v168
    %v1195 = vmul.f32 %v1070, %v169
    %v1196 = vmul.f32 %v1070, %v170
    %v1197 = vmul.f32 %v1070, %v171
    %v1198 = vmul.f32 %v1070, %v172
    %v1199 = vmul.f32 %v1070, %v173
    %v1200 = vmul.f32 %v1070, %v174
    %v1201 = vmul.f32 %v1070, %v175
    %v1202 = vmul.f32 %v1070, %v176
    %v1203 = vmul.f32 %v1070, %v177
    %v1204 = vmul.f32 %v1070, %v178
    %v1205 = vmul.f32 %v1070, %v179
    %v1206 = vmul.f32 %v1070, %v180
    %v1207 = vmul.f32 %v1070, %v181
    %v1208 = vmul.f32 %v1070, %v182
    %v1209 = vmul.f32 %v1070, %v183
    %v1210 = vmul.f32 %v1070, %v184
    %v1211 = vmul.f32 %v1070, %v185
    %v1212 = vmul.f32 %v1070, %v186
    %v1213 = vmul.f32 %v1070, %v187
    %v1214 = vmul.f32 %v1070, %v188
    %v1215 = vmul.f32 %v1070, %v189
    %v1216 = vmul.f32 %v1070, %v190
    %v1217 = vmul.f32 %v1070, %v191
    %v1218 = vmul.f32 %v1070, %v192
    %v1219 = vmul.f32 %v1070, %v193
    %v1220 = vmul.f32 %v1070, %v194
    %v1221 = vmul.f32 %v1070, %v195
    %v1222 = vmul.f32 %v1070, %v196
    %v1223 = vmul.f32 %v1070, %v197
    %v1224 = vmul.f32 %v1070, %v198
    %v1225 = vmul.f32 %v1070, %v199
    %v1226 = vmul.f32 %v1070, %v200
    %v1227 = vmul.f32 %v1070, %v201
    %v1228 = vmul.f32 %v1070, %v202
    %v1229 = vmul.f32 %v1070, %v203
    %v1230 = vmul.f32 %v1070, %v204
    %v1231 = vmul.f32 %v1070, %v205
    %v1232 = vmul.f32 %v1070, %v206
    %v1233 = vmul.f32 %v1070, %v207
    %v1234 = vmul.f32 %v1070, %v208
    %v1235 = vmul.f32 %v1070, %v209
    %v1236 = vmul.f32 %v1070, %v210
    %v1237 = vmul.f32 %v1070, %v211
    %v1238 = vmul.f32 %v1070, %v212
    %v1239 = vmul.f32 %v1070, %v213
    %v1240 = vmul.f32 %v1070, %v214
    %v1241 = vmul.f32 %v1070, %v215
    %v1242 = vmul.f32 %v1070, %v216
    %v1243 = vmul.f32 %v1070, %v217
    %v1244 = vmul.f32 %v1070, %v218
    %v1245 = vmul.f32 %v1070, %v219
    %v1246 = vmul.f32 %v1070, %v220
    %v1247 = vmul.f32 %v1070, %v221
    %v1248 = vmul.f32 %v1070, %v222
    %v1249 = vmul.f32 %v1070, %v223
    %v1250 = vmul.f32 %v1070, %v224
    %v1251 = vmul.f32 %v1070, %v225
    %v1252 = vmul.f32 %v1070, %v226
    %v1253 = vmul.f32 %v1070, %v227
    %v1254 = vmul.f32 %v1070, %v228
    %v1255 = vmul.f32 %v1070, %v229
    %v1256 = vmul.f32 %v1070, %v230
    %v1257 = vmul.f32 %v1070, %v231
    %v1258 = vmul.f32 %v1070, %v232
    %v1259 = vmul.f32 %v1070, %v233
    %v1260 = vmul.f32 %v1070, %v234
    %v1261 = vmul.f32 %v1070, %v235
    %v1262 = vmul.f32 %v1070, %v236
    %v1263 = vmul.f32 %v1070, %v237
    %v1264 = vmul.f32 %v1070, %v238
    %v1265 = vmul.f32 %v1070, %v239
    %v1266 = vmul.f32 %v1070, %v240
    %v1267 = vmul.f32 %v1070, %v241
    %v1268 = vmul.f32 %v1070, %v242
    %v1269 = vmul.f32 %v1070, %v243
    %v1270 = vmul.f32 %v1070, %v244
    %v1271 = vmul.f32 %v1070, %v245
    %v1272 = vmul.f32 %v1070, %v246
    %v1273 = vmul.f32 %v1070, %v247
    %v1274 = vmul.f32 %v1070, %v248
    %v1275 = vmul.f32 %v1070, %v249
    %v1276 = vmul.f32 %v1070, %v250
    %v1277 = vmul.f32 %v1070, %v251
    %v1278 = vmul.f32 %v1070, %v252
    %v1279 = vmul.f32 %v1070, %v253
    %v1280 = vmul.f32 %v1070, %v254
    %v1281 = vmul.f32 %v1070, %v255
    %v1282 = vmul.f32 %v1070, %v256
    %v1283 = vmul.f32 %v1070, %v257
    %v1284 = vmul.f32 %v1070, %v258
    %v1285 = vmul.f32 %v1070, %v259
    %v1286 = vmul.f32 %v1070, %v260
    %v1287 = vmul.f32 %v1070, %v261
    %v1288 = vmul.f32 %v1070, %v262
    %v1289 = vmul.f32 %v1070, %v263
    %v1290 = vmul.f32 %v1070, %v264
    %v1291 = vmul.f32 %v1070, %v265
    %v1292 = vmul.f32 %v1070, %v266
    %v1293 = vmul.f32 %v1070, %v267
    %v1294 = vmul.f32 %v1070, %v268
    %v1295 = vmul.f32 %v1070, %v269
    %v1296 = vmul.f32 %v1070, %v270
    %v1297 = vmul.f32 %v1070, %v271
    %v1298 = vmul.f32 %v1070, %v272
    %v1299 = vmul.f32 %v1070, %v273
    %v1300 = vmul.f32 %v1070, %v274
    %v1301 = vmul.f32 %v1070, %v275
    %v1302 = vmul.f32 %v1070, %v276
    %v1303 = vmul.f32 %v1070, %v277
    %v1304 = vmul.f32 %v1070, %v278
    %v1305 = vmul.f32 %v1070, %v279
    %v1306 = vmul.f32 %v1070, %v280
    %v1307 = vmul.f32 %v1070, %v281
    %v1308 = vmul.f32 %v1070, %v282
    %v1309 = vmul.f32 %v1070, %v283
    %v1310 = vmul.f32 %v1070, %v284
    %v1311 = vmul.f32 %v1070, %v285
    %v1312 = vmul.f32 %v1070, %v286
    %v1313 = vmul.f32 %v1070, %v287
    %v1314 = vmul.f32 %v1070, %v288
    %v1315 = vmul.f32 %v1070, %v289
    %v1316 = vmul.f32 %v1070, %v290
    %v1317 = vmul.f32 %v1070, %v291
    %v1318 = vmul.f32 %v1070, %v292
    %v1319 = vmul.f32 %v1070, %v293
    %v1320 = vmul.f32 %v1070, %v294
    %v1321 = vmul.f32 %v1070, %v295
    %v1322 = vmul.f32 %v1070, %v296
    %v1323 = vmul.f32 %v1070, %v297
    %v1324 = vmul.f32 %v1070, %v298
    %v1325 = vmul.f32 %v1070, %v299
    %v1326 = vmul.f32 %v1070, %v300
    %v1327 = vmul.f32 %v1070, %v301
    %v1328 = vmul.f32 %v1070, %v302
    %v1329 = vmul.f32 %v1070, %v303
    %v1330 = vmul.f32 %v1070, %v304
    %v1331 = vmul.f32 %v1070, %v305
    %v1332 = vmul.f32 %v1070, %v306
    %v1333 = vmul.f32 %v1070, %v307
    %v1334 = vmul.f32 %v1070, %v308
    %v1335 = vmul.f32 %v1070, %v309
    %v1336 = vmul.f32 %v1070, %v310
    %v1337 = vmul.f32 %v1070, %v311
    %v1338 = vmul.f32 %v1070, %v312
    %v1339 = vmul.f32 %v1070, %v313
    %v1340 = vmul.f32 %v1070, %v314
    %v1341 = vmul.f32 %v1070, %v315
    %v1342 = vmul.f32 %v1070, %v316
    %v1343 = vmul.f32 %v1070, %v317
    %v1344 = vmul.f32 %v1070, %v318
    %v1345 = vmul.f32 %v1070, %v319
    %v1346 = vmul.f32 %v1070, %v320
    %v1347 = vmul.f32 %v1070, %v321
    %v1348 = vmul.f32 %v1070, %v322
    %v1349 = vmul.f32 %v1070, %v323
    %v1350 = vmul.f32 %v1070, %v324
    %v1351 = vmul.f32 %v1070, %v325
    %v1352 = vmul.f32 %v1070, %v326
    %v1353 = vmul.f32 %v1070, %v327
    %v1354 = vmul.f32 %v1070, %v328
    %v1355 = vmul.f32 %v1070, %v329
    %v1356 = vmul.f32 %v1070, %v330
    %v1357 = vmul.f32 %v1070, %v331
    %v1358 = vmul.f32 %v1070, %v332
    %v1359 = vmul.f32 %v1070, %v333
    %v1360 = vmul.f32 %v1070, %v334
    %v1361 = vmul.f32 %v1070, %v335
    %v1362 = vmul.f32 %v1070, %v336
    %v1363 = vmul.f32 %v1070, %v337
    %v1364 = vmul.f32 %v1070, %v338
    %v1365 = vmul.f32 %v1070, %v339
    %v1366 = vmul.f32 %v1070, %v340
    %v1367 = vmul.f32 %v1070, %v341
    %v1368 = vmul.f32 %v1070, %v342
    %v1369 = vmul.f32 %v1070, %v343
    %v1370 = vmul.f32 %v1070, %v344
    %v1371 = vmul.f32 %v1070, %v345
    %v1372 = vmul.f32 %v1070, %v346
    %v1373 = vmul.f32 %v1070, %v347
    %v1374 = vmul.f32 %v1070, %v348
    %v1375 = vmul.f32 %v1070, %v349
    %v1376 = vmul.f32 %v1070, %v350
    %v1377 = vmul.f32 %v1070, %v351
    %v1378 = vmul.f32 %v1070, %v352
    %v1379 = vmul.f32 %v1070, %v353
    %v1380 = vmul.f32 %v1070, %v354
    %v1381 = vmul.f32 %v1070, %v355
    %v1382 = vmul.f32 %v1070, %v356
    %v1383 = vmul.f32 %v1070, %v357
    %v1384 = vmul.f32 %v1070, %v358
    %v1385 = vmul.f32 %v1070, %v359
    %v1386 = vmul.f32 %v1070, %v360
    %v1387 = vmul.f32 %v1070, %v361
    %v1388 = vmul.f32 %v1070, %v362
    %v1389 = vmul.f32 %v1070, %v363
    %v1390 = vmul.f32 %v1070, %v364
    %v1391 = vmul.f32 %v1070, %v365
    %v1392 = vmul.f32 %v1070, %v366
    %v1393 = vmul.f32 %v1070, %v367
    %v1394 = vmul.f32 %v1070, %v368
    %v1395 = vmul.f32 %v1070, %v369
    %v1396 = vmul.f32 %v1070, %v370
    %v1397 = vmul.f32 %v1070, %v371
    %v1398 = vmul.f32 %v1070, %v372
    %v1399 = vmul.f32 %v1070, %v373
    %v1400 = vmul.f32 %v1070, %v374
    %v1401 = vmul.f32 %v1070, %v375
    %v1402 = vmul.f32 %v1070, %v376
    %v1403 = vmul.f32 %v1070, %v377
    %v1404 = vmul.f32 %v1070, %v378
    %v1405 = vmul.f32 %v1070, %v379
    %v1406 = vmul.f32 %v1070, %v380
    %v1407 = vmul.f32 %v1070, %v381
    %v1408 = vmul.f32 %v1070, %v382
    %v1409 = vmul.f32 %v1070, %v383
    %v1410 = vmul.f32 %v1070, %v384
    %v1411 = vmul.f32 %v1070, %v385
    %v1412 = vmul.f32 %v1070, %v386
    %v1413 = vmul.f32 %v1070, %v387
    %v1414 = vmul.f32 %v1070, %v388
    %v1415 = vmul.f32 %v1070, %v389
    %v1416 = vmul.f32 %v1070, %v390
    %v1417 = vmul.f32 %v1070, %v391
    %v1418 = vmul.f32 %v1070, %v392
    %v1419 = vmul.f32 %v1070, %v393
    %v1420 = vmul.f32 %v1070, %v394
    %v1421 = vmul.f32 %v1070, %v395
    %v1422 = vmul.f32 %v1070, %v396
    %v1423 = vmul.f32 %v1070, %v397
    %v1424 = vmul.f32 %v1070, %v398
    %v1425 = vmul.f32 %v1070, %v399
    %v1426 = vmul.f32 %v1070, %v400
    %v1427 = vmul.f32 %v1070, %v401
    %v1428 = vmul.f32 %v1070, %v402
    %v1429 = vmul.f32 %v1070, %v403
    %v1430 = vmul.f32 %v1070, %v404
    %v1431 = vmul.f32 %v1070, %v405
    %v1432 = vmul.f32 %v1070, %v406
    %v1433 = vmul.f32 %v1070, %v407
    %v1434 = vmul.f32 %v1070, %v408
    %v1435 = vmul.f32 %v1070, %v409
    %v1436 = vmul.f32 %v1070, %v410
    %v1437 = vmul.f32 %v1070, %v411
    %v1438 = vmul.f32 %v1070, %v412
    %v1439 = vmul.f32 %v1070, %v413
    %v1440 = vmul.f32 %v1070, %v414
    %v1441 = vmul.f32 %v1070, %v415
    %v1442 = vmul.f32 %v1070, %v416
    %v1443 = vmul.f32 %v1070, %v417
    %v1444 = vmul.f32 %v1070, %v418
    %v1445 = vmul.f32 %v1070, %v419
    %v1446 = vmul.f32 %v1070, %v420
    %v1447 = vmul.f32 %v1070, %v421
    %v1448 = vmul.f32 %v1070, %v422
    %v1449 = vmul.f32 %v1070, %v423
    %v1450 = vmul.f32 %v1070, %v424
    %v1451 = vmul.f32 %v1070, %v425
    %v1452 = vmul.f32 %v1070, %v426
    %v1453 = vmul.f32 %v1070, %v427
    %v1454 = vmul.f32 %v1070, %v428
    %v1455 = vmul.f32 %v1070, %v429
    %v1456 = vmul.f32 %v1070, %v430
    %v1457 = vmul.f32 %v1070, %v431
    %v1458 = vmul.f32 %v1070, %v432
    %v1459 = vmul.f32 %v1070, %v433
    %v1460 = vmul.f32 %v1070, %v434
    %v1461 = vmul.f32 %v1070, %v435
    %v1462 = vmul.f32 %v1070, %v436
    %v1463 = vmul.f32 %v1070, %v437
    %v1464 = vmul.f32 %v1070, %v438
    %v1465 = vmul.f32 %v1070, %v439
    %v1466 = vmul.f32 %v1070, %v440
    %v1467 = vmul.f32 %v1070, %v441
    %v1468 = vmul.f32 %v1070, %v442
    %v1469 = vmul.f32 %v1070, %v443
    %v1470 = vmul.f32 %v1070, %v444
    %v1471 = vmul.f32 %v1070, %v445
    %v1472 = vmul.f32 %v1070, %v446
    %v1473 = vmul.f32 %v1070, %v447
    %v1474 = vmul.f32 %v1070, %v448
    %v1475 = vmul.f32 %v1070, %v449
    %v1476 = vmul.f32 %v1070, %v450
    %v1477 = vmul.f32 %v1070, %v451
    %v1478 = vmul.f32 %v1070, %v452
    %v1479 = vmul.f32 %v1070, %v453
    %v1480 = vmul.f32 %v1070, %v454
    %v1481 = vmul.f32 %v1070, %v455
    %v1482 = vmul.f32 %v1070, %v456
    %v1483 = vmul.f32 %v1070, %v457
    %v1484 = vmul.f32 %v1070, %v458
    %v1485 = vmul.f32 %v1070, %v459
    %v1486 = vmul.f32 %v1070, %v460
    %v1487 = vmul.f32 %v1070, %v461
    %v1488 = vmul.f32 %v1070, %v462
    %v1489 = vmul.f32 %v1070, %v463
    %v1490 = vmul.f32 %v1070, %v464
    %v1491 = vmul.f32 %v1070, %v465
    %v1492 = vmul.f32 %v1070, %v466
    %v1493 = vmul.f32 %v1070, %v467
    %v1494 = vmul.f32 %v1070, %v468
    %v1495 = vmul.f32 %v1070, %v469
    %v1496 = vmul.f32 %v1070, %v470
    %v1497 = vmul.f32 %v1070, %v471
    %v1498 = vmul.f32 %v1070, %v472
    %v1499 = vmul.f32 %v1070, %v473
    %v1500 = vmul.f32 %v1070, %v474
    %v1501 = vmul.f32 %v1070, %v475
    %v1502 = vmul.f32 %v1070, %v476
    %v1503 = vmul.f32 %v1070, %v477
    %v1504 = vmul.f32 %v1070, %v478
    %v1505 = vmul.f32 %v1070, %v479
    %v1506 = vmul.f32 %v1070, %v480
    %v1507 = vmul.f32 %v1070, %v481
    %v1508 = vmul.f32 %v1070, %v482
    %v1509 = vmul.f32 %v1070, %v483
    %v1510 = vmul.f32 %v1070, %v484
    %v1511 = vmul.f32 %v1070, %v485
    %v1512 = vmul.f32 %v1070, %v486
    %v1513 = vmul.f32 %v1070, %v487
    %v1514 = vmul.f32 %v1070, %v488
    %v1515 = vmul.f32 %v1070, %v489
    %v1516 = vmul.f32 %v1070, %v490
    %v1517 = vmul.f32 %v1070, %v491
    %v1518 = vmul.f32 %v1070, %v492
    %v1519 = vmul.f32 %v1070, %v493
    %v1520 = vmul.f32 %v1070, %v494
    %v1521 = vmul.f32 %v1070, %v495
    %v1522 = vmul.f32 %v1070, %v496
    %v1523 = vmul.f32 %v1070, %v497
    %v1524 = vmul.f32 %v1070, %v498
    %v1525 = vmul.f32 %v1070, %v499
    %v1526 = vmul.f32 %v1070, %v500
    %v1527 = vmul.f32 %v1070, %v501
    %v1528 = vmul.f32 %v1070, %v502
    %v1529 = vmul.f32 %v1070, %v503
    %v1530 = vmul.f32 %v1070, %v504
    %v1531 = vmul.f32 %v1070, %v505
    %v1532 = vmul.f32 %v1070, %v506
    %v1533 = vmul.f32 %v1070, %v507
    %v1534 = vmul.f32 %v1070, %v508
    %v1535 = vmul.f32 %v1070, %v509
    %v1536 = vmul.f32 %v1070, %v510
    %v1537 = vmul.f32 %v1070, %v511
    %v1538 = vmul.f32 %v1070, %v512
    %v1539 = vmul.f32 %v1070, %v513
    %v1540 = vmul.f32 %v1070, %v514
    %v1541 = vmul.f32 %v1070, %v515
    %v1542 = vmul.f32 %v1070, %v516
    %v1543 = vmul.f32 %v1070, %v517
    %v1544 = vmul.f32 %v1070, %v518
    %v1545 = vmul.f32 %v1070, %v519
    %v1546 = vmul.f32 %v1070, %v520
    %v1547 = vmul.f32 %v1070, %v521
    %v1548 = vmul.f32 %v1070, %v522
    %v1549 = vmul.f32 %v1070, %v523
    %v1550 = vmul.f32 %v1070, %v524
    %v1551 = vmul.f32 %v1070, %v525
    %v1552 = vmul.f32 %v1070, %v526
    %v1553 = vmul.f32 %v1070, %v527
    %v1554 = vmul.f32 %v1070, %v528
    %v1555 = vmul.f32 %v1070, %v529
    %v1556 = vmul.f32 %v1070, %v530
    %v1557 = vmul.f32 %v1070, %v531
    %v1558 = vmul.f32 %v1070, %v532
    %v1559 = vmul.f32 %v1070, %v533
    %v1560 = vmul.f32 %v1070, %v534
    %v1561 = vmul.f32 %v1070, %v535
    %v1562 = vmul.f32 %v1070, %v536
    %v1563 = vmul.f32 %v1070, %v537
    %v1564 = vmul.f32 %v1070, %v538
    %v1565 = vmul.f32 %v1070, %v539
    %v1566 = vmul.f32 %v1070, %v540
    %v1567 = vmul.f32 %v1070, %v541
    %v1568 = vmul.f32 %v1070, %v542
    %v1569 = vmul.f32 %v1070, %v543
    %v1570 = vmul.f32 %v1070, %v544
    %v1571 = vmul.f32 %v1070, %v545
    %v1572 = vmul.f32 %v1070, %v546
    %v1573 = vmul.f32 %v1070, %v547
    %v1574 = vmul.f32 %v1070, %v548
    %v1575 = vmul.f32 %v1070, %v549
    %v1576 = vmul.f32 %v1070, %v550
    %v1577 = vmul.f32 %v1070, %v551
    %v1578 = vmul.f32 %v1070, %v552
    %v1579 = vmul.f32 %v1070, %v553
    %v1580 = vmul.f32 %v1070, %v554
    %v1581 = vmul.f32 %v1070, %v555
    %v1582 = vmul.f32 %v1070, %v556
    %v1583 = vstv %s44
    %v1584 = vmul.f32 %v1583, %v557
    %v1585 = vmul.f32 %v1583, %v558
    %v1586 = vmul.f32 %v1583, %v559
    %v1587 = vmul.f32 %v1583, %v560
    %v1588 = vmul.f32 %v1583, %v561
    %v1589 = vmul.f32 %v1583, %v562
    %v1590 = vmul.f32 %v1583, %v563
    %v1591 = vmul.f32 %v1583, %v564
    %v1592 = vmul.f32 %v1583, %v565
    %v1593 = vmul.f32 %v1583, %v566
    %v1594 = vmul.f32 %v1583, %v567
    %v1595 = vmul.f32 %v1583, %v568
    %v1596 = vmul.f32 %v1583, %v569
    %v1597 = vmul.f32 %v1583, %v570
    %v1598 = vmul.f32 %v1583, %v571
    %v1599 = vmul.f32 %v1583, %v572
    %v1600 = vmul.f32 %v1583, %v573
    %v1601 = vmul.f32 %v1583, %v574
    %v1602 = vmul.f32 %v1583, %v575
    %v1603 = vmul.f32 %v1583, %v576
    %v1604 = vmul.f32 %v1583, %v577
    %v1605 = vmul.f32 %v1583, %v578
    %v1606 = vmul.f32 %v1583, %v579
    %v1607 = vmul.f32 %v1583, %v580
    %v1608 = vmul.f32 %v1583, %v581
    %v1609 = vmul.f32 %v1583, %v582
    %v1610 = vmul.f32 %v1583, %v583
    %v1611 = vmul.f32 %v1583, %v584
    %v1612 = vmul.f32 %v1583, %v585
    %v1613 = vmul.f32 %v1583, %v586
    %v1614 = vmul.f32 %v1583, %v587
    %v1615 = vmul.f32 %v1583, %v588
    %v1616 = vmul.f32 %v1583, %v589
    %v1617 = vmul.f32 %v1583, %v590
    %v1618 = vmul.f32 %v1583, %v591
    %v1619 = vmul.f32 %v1583, %v592
    %v1620 = vmul.f32 %v1583, %v593
    %v1621 = vmul.f32 %v1583, %v594
    %v1622 = vmul.f32 %v1583, %v595
    %v1623 = vmul.f32 %v1583, %v596
    %v1624 = vmul.f32 %v1583, %v597
    %v1625 = vmul.f32 %v1583, %v598
    %v1626 = vmul.f32 %v1583, %v599
    %v1627 = vmul.f32 %v1583, %v600
    %v1628 = vmul.f32 %v1583, %v601
    %v1629 = vmul.f32 %v1583, %v602
    %v1630 = vmul.f32 %v1583, %v603
    %v1631 = vmul.f32 %v1583, %v604
    %v1632 = vmul.f32 %v1583, %v605
    %v1633 = vmul.f32 %v1583, %v606
    %v1634 = vmul.f32 %v1583, %v607
    %v1635 = vmul.f32 %v1583, %v608
    %v1636 = vmul.f32 %v1583, %v609
    %v1637 = vmul.f32 %v1583, %v610
    %v1638 = vmul.f32 %v1583, %v611
    %v1639 = vmul.f32 %v1583, %v612
    %v1640 = vmul.f32 %v1583, %v613
    %v1641 = vmul.f32 %v1583, %v614
    %v1642 = vmul.f32 %v1583, %v615
    %v1643 = vmul.f32 %v1583, %v616
    %v1644 = vmul.f32 %v1583, %v617
    %v1645 = vmul.f32 %v1583, %v618
    %v1646 = vmul.f32 %v1583, %v619
    %v1647 = vmul.f32 %v1583, %v620
    %v1648 = vmul.f32 %v1583, %v621
    %v1649 = vmul.f32 %v1583, %v622
    %v1650 = vmul.f32 %v1583, %v623
    %v1651 = vmul.f32 %v1583, %v624
    %v1652 = vmul.f32 %v1583, %v625
    %v1653 = vmul.f32 %v1583, %v626
    %v1654 = vmul.f32 %v1583, %v627
    %v1655 = vmul.f32 %v1583, %v628
    %v1656 = vmul.f32 %v1583, %v629
    %v1657 = vmul.f32 %v1583, %v630
    %v1658 = vmul.f32 %v1583, %v631
    %v1659 = vmul.f32 %v1583, %v632
    %v1660 = vmul.f32 %v1583, %v633
    %v1661 = vmul.f32 %v1583, %v634
    %v1662 = vmul.f32 %v1583, %v635
    %v1663 = vmul.f32 %v1583, %v636
    %v1664 = vmul.f32 %v1583, %v637
    %v1665 = vmul.f32 %v1583, %v638
    %v1666 = vmul.f32 %v1583, %v639
    %v1667 = vmul.f32 %v1583, %v640
    %v1668 = vmul.f32 %v1583, %v641
    %v1669 = vmul.f32 %v1583, %v642
    %v1670 = vmul.f32 %v1583, %v643
    %v1671 = vmul.f32 %v1583, %v644
    %v1672 = vmul.f32 %v1583, %v645
    %v1673 = vmul.f32 %v1583, %v646
    %v1674 = vmul.f32 %v1583, %v647
    %v1675 = vmul.f32 %v1583, %v648
    %v1676 = vmul.f32 %v1583, %v649
    %v1677 = vmul.f32 %v1583, %v650
    %v1678 = vmul.f32 %v1583, %v651
    %v1679 = vmul.f32 %v1583, %v652
    %v1680 = vmul.f32 %v1583, %v653
    %v1681 = vmul.f32 %v1583, %v654
    %v1682 = vmul.f32 %v1583, %v655
    %v1683 = vmul.f32 %v1583, %v656
    %v1684 = vmul.f32 %v1583, %v657
    %v1685 = vmul.f32 %v1583, %v658
    %v1686 = vmul.f32 %v1583, %v659
    %v1687 = vmul.f32 %v1583, %v660
    %v1688 = vmul.f32 %v1583, %v661
    %v1689 = vmul.f32 %v1583, %v662
    %v1690 = vmul.f32 %v1583, %v663
    %v1691 = vmul.f32 %v1583, %v664
    %v1692 = vmul.f32 %v1583, %v665
    %v1693 = vmul.f32 %v1583, %v666
    %v1694 = vmul.f32 %v1583, %v667
    %v1695 = vmul.f32 %v1583, %v668
    %v1696 = vmul.f32 %v1583, %v669
    %v1697 = vmul.f32 %v1583, %v670
    %v1698 = vmul.f32 %v1583, %v671
    %v1699 = vmul.f32 %v1583, %v672
    %v1700 = vmul.f32 %v1583, %v673
    %v1701 = vmul.f32 %v1583, %v674
    %v1702 = vmul.f32 %v1583, %v675
    %v1703 = vmul.f32 %v1583, %v676
    %v1704 = vmul.f32 %v1583, %v677
    %v1705 = vmul.f32 %v1583, %v678
    %v1706 = vmul.f32 %v1583, %v679
    %v1707 = vmul.f32 %v1583, %v680
    %v1708 = vmul.f32 %v1583, %v681
    %v1709 = vmul.f32 %v1583, %v682
    %v1710 = vmul.f32 %v1583, %v683
    %v1711 = vmul.f32 %v1583, %v684
    %v1712 = vmul.f32 %v1583, %v685
    %v1713 = vmul.f32 %v1583, %v686
    %v1714 = vmul.f32 %v1583, %v687
    %v1715 = vmul.f32 %v1583, %v688
    %v1716 = vmul.f32 %v1583, %v689
    %v1717 = vmul.f32 %v1583, %v690
    %v1718 = vmul.f32 %v1583, %v691
    %v1719 = vmul.f32 %v1583, %v692
    %v1720 = vmul.f32 %v1583, %v693
    %v1721 = vmul.f32 %v1583, %v694
    %v1722 = vmul.f32 %v1583, %v695
    %v1723 = vmul.f32 %v1583, %v696
    %v1724 = vmul.f32 %v1583, %v697
    %v1725 = vmul.f32 %v1583, %v698
    %v1726 = vmul.f32 %v1583, %v699
    %v1727 = vmul.f32 %v1583, %v700
    %v1728 = vmul.f32 %v1583, %v701
    %v1729 = vmul.f32 %v1583, %v702
    %v1730 = vmul.f32 %v1583, %v703
    %v1731 = vmul.f32 %v1583, %v704
    %v1732 = vmul.f32 %v1583, %v705
    %v1733 = vmul.f32 %v1583, %v706
    %v1734 = vmul.f32 %v1583, %v707
    %v1735 = vmul.f32 %v1583, %v708
    %v1736 = vmul.f32 %v1583, %v709
    %v1737 = vmul.f32 %v1583, %v710
    %v1738 = vmul.f32 %v1583, %v711
    %v1739 = vmul.f32 %v1583, %v712
    %v1740 = vmul.f32 %v1583, %v713
    %v1741 = vmul.f32 %v1583, %v714
    %v1742 = vmul.f32 %v1583, %v715
    %v1743 = vmul.f32 %v1583, %v716
    %v1744 = vmul.f32 %v1583, %v717
    %v1745 = vmul.f32 %v1583, %v718
    %v1746 = vmul.f32 %v1583, %v719
    %v1747 = vmul.f32 %v1583, %v720
    %v1748 = vmul.f32 %v1583, %v721
    %v1749 = vmul.f32 %v1583, %v722
    %v1750 = vmul.f32 %v1583, %v723
    %v1751 = vmul.f32 %v1583, %v724
    %v1752 = vmul.f32 %v1583, %v725
    %v1753 = vmul.f32 %v1583, %v726
    %v1754 = vmul.f32 %v1583, %v727
    %v1755 = vmul.f32 %v1583, %v728
    %v1756 = vmul.f32 %v1583, %v729
    %v1757 = vmul.f32 %v1583, %v730
    %v1758 = vmul.f32 %v1583, %v731
    %v1759 = vmul.f32 %v1583, %v732
    %v1760 = vmul.f32 %v1583, %v733
    %v1761 = vmul.f32 %v1583, %v734
    %v1762 = vmul.f32 %v1583, %v735
    %v1763 = vmul.f32 %v1583, %v736
    %v1764 = vmul.f32 %v1583, %v737
    %v1765 = vmul.f32 %v1583, %v738
    %v1766 = vmul.f32 %v1583, %v739
    %v1767 = vmul.f32 %v1583, %v740
    %v1768 = vmul.f32 %v1583, %v741
    %v1769 = vmul.f32 %v1583, %v742
    %v1770 = vmul.f32 %v1583, %v743
    %v1771 = vmul.f32 %v1583, %v744
    %v1772 = vmul.f32 %v1583, %v745
    %v1773 = vmul.f32 %v1583, %v746
    %v1774 = vmul.f32 %v1583, %v747
    %v1775 = vmul.f32 %v1583, %v748
    %v1776 = vmul.f32 %v1583, %v749
    %v1777 = vmul.f32 %v1583, %v750
    %v1778 = vmul.f32 %v1583, %v751
    %v1779 = vmul.f32 %v1583, %v752
    %v1780 = vmul.f32 %v1583, %v753
    %v1781 = vmul.f32 %v1583, %v754
    %v1782 = vmul.f32 %v1583, %v755
    %v1783 = vmul.f32 %v1583, %v756
    %v1784 = vmul.f32 %v1583, %v757
    %v1785 = vmul.f32 %v1583, %v758
    %v1786 = vmul.f32 %v1583, %v759
    %v1787 = vmul.f32 %v1583, %v760
    %v1788 = vmul.f32 %v1583, %v761
    %v1789 = vmul.f32 %v1583, %v762
    %v1790 = vmul.f32 %v1583, %v763
    %v1791 = vmul.f32 %v1583, %v764
    %v1792 = vmul.f32 %v1583, %v765
    %v1793 = vmul.f32 %v1583, %v766
    %v1794 = vmul.f32 %v1583, %v767
    %v1795 = vmul.f32 %v1583, %v768
    %v1796 = vmul.f32 %v1583, %v769
    %v1797 = vmul.f32 %v1583, %v770
    %v1798 = vmul.f32 %v1583, %v771
    %v1799 = vmul.f32 %v1583, %v772
    %v1800 = vmul.f32 %v1583, %v773
    %v1801 = vmul.f32 %v1583, %v774
    %v1802 = vmul.f32 %v1583, %v775
    %v1803 = vmul.f32 %v1583, %v776
    %v1804 = vmul.f32 %v1583, %v777
    %v1805 = vmul.f32 %v1583, %v778
    %v1806 = vmul.f32 %v1583, %v779
    %v1807 = vmul.f32 %v1583, %v780
    %v1808 = vmul.f32 %v1583, %v781
    %v1809 = vmul.f32 %v1583, %v782
    %v1810 = vmul.f32 %v1583, %v783
    %v1811 = vmul.f32 %v1583, %v784
    %v1812 = vmul.f32 %v1583, %v785
    %v1813 = vmul.f32 %v1583, %v786
    %v1814 = vmul.f32 %v1583, %v787
    %v1815 = vmul.f32 %v1583, %v788
    %v1816 = vmul.f32 %v1583, %v789
    %v1817 = vmul.f32 %v1583, %v790
    %v1818 = vmul.f32 %v1583, %v791
    %v1819 = vmul.f32 %v1583, %v792
    %v1820 = vmul.f32 %v1583, %v793
    %v1821 = vmul.f32 %v1583, %v794
    %v1822 = vmul.f32 %v1583, %v795
    %v1823 = vmul.f32 %v1583, %v796
    %v1824 = vmul.f32 %v1583, %v797
    %v1825 = vmul.f32 %v1583, %v798
    %v1826 = vmul.f32 %v1583, %v799
    %v1827 = vmul.f32 %v1583, %v800
    %v1828 = vmul.f32 %v1583, %v801
    %v1829 = vmul.f32 %v1583, %v802
    %v1830 = vmul.f32 %v1583, %v803
    %v1831 = vmul.f32 %v1583, %v804
    %v1832 = vmul.f32 %v1583, %v805
    %v1833 = vmul.f32 %v1583, %v806
    %v1834 = vmul.f32 %v1583, %v807
    %v1835 = vmul.f32 %v1583, %v808
    %v1836 = vmul.f32 %v1583, %v809
    %v1837 = vmul.f32 %v1583, %v810
    %v1838 = vmul.f32 %v1583, %v811
    %v1839 = vmul.f32 %v1583, %v812
    %v1840 = vmul.f32 %v1583, %v813
    %v1841 = vmul.f32 %v1583, %v814
    %v1842 = vmul.f32 %v1583, %v815
    %v1843 = vmul.f32 %v1583, %v816
    %v1844 = vmul.f32 %v1583, %v817
    %v1845 = vmul.f32 %v1583, %v818
    %v1846 = vmul.f32 %v1583, %v819
    %v1847 = vmul.f32 %v1583, %v820
    %v1848 = vmul.f32 %v1583, %v821
    %v1849 = vmul.f32 %v1583, %v822
    %v1850 = vmul.f32 %v1583, %v823
    %v1851 = vmul.f32 %v1583, %v824
    %v1852 = vmul.f32 %v1583, %v825
    %v1853 = vmul.f32 %v1583, %v826
    %v1854 = vmul.f32 %v1583, %v827
    %v1855 = vmul.f32 %v1583, %v828
    %v1856 = vmul.f32 %v1583, %v829
    %v1857 = vmul.f32 %v1583, %v830
    %v1858 = vmul.f32 %v1583, %v831
    %v1859 = vmul.f32 %v1583, %v832
    %v1860 = vmul.f32 %v1583, %v833
    %v1861 = vmul.f32 %v1583, %v834
    %v1862 = vmul.f32 %v1583, %v835
    %v1863 = vmul.f32 %v1583, %v836
    %v1864 = vmul.f32 %v1583, %v837
    %v1865 = vmul.f32 %v1583, %v838
    %v1866 = vmul.f32 %v1583, %v839
    %v1867 = vmul.f32 %v1583, %v840
    %v1868 = vmul.f32 %v1583, %v841
    %v1869 = vmul.f32 %v1583, %v842
    %v1870 = vmul.f32 %v1583, %v843
    %v1871 = vmul.f32 %v1583, %v844
    %v1872 = vmul.f32 %v1583, %v845
    %v1873 = vmul.f32 %v1583, %v846
    %v1874 = vmul.f32 %v1583, %v847
    %v1875 = vmul.f32 %v1583, %v848
    %v1876 = vmul.f32 %v1583, %v849
    %v1877 = vmul.f32 %v1583, %v850
    %v1878 = vmul.f32 %v1583, %v851
    %v1879 = vmul.f32 %v1583, %v852
    %v1880 = vmul.f32 %v1583, %v853
    %v1881 = vmul.f32 %v1583, %v854
    %v1882 = vmul.f32 %v1583, %v855
    %v1883 = vmul.f32 %v1583, %v856
    %v1884 = vmul.f32 %v1583, %v857
    %v1885 = vmul.f32 %v1583, %v858
    %v1886 = vmul.f32 %v1583, %v859
    %v1887 = vmul.f32 %v1583, %v860
    %v1888 = vmul.f32 %v1583, %v861
    %v1889 = vmul.f32 %v1583, %v862
    %v1890 = vmul.f32 %v1583, %v863
    %v1891 = vmul.f32 %v1583, %v864
    %v1892 = vmul.f32 %v1583, %v865
    %v1893 = vmul.f32 %v1583, %v866
    %v1894 = vmul.f32 %v1583, %v867
    %v1895 = vmul.f32 %v1583, %v868
    %v1896 = vmul.f32 %v1583, %v869
    %v1897 = vmul.f32 %v1583, %v870
    %v1898 = vmul.f32 %v1583, %v871
    %v1899 = vmul.f32 %v1583, %v872
    %v1900 = vmul.f32 %v1583, %v873
    %v1901 = vmul.f32 %v1583, %v874
    %v1902 = vmul.f32 %v1583, %v875
    %v1903 = vmul.f32 %v1583, %v876
    %v1904 = vmul.f32 %v1583, %v877
    %v1905 = vmul.f32 %v1583, %v878
    %v1906 = vmul.f32 %v1583, %v879
    %v1907 = vmul.f32 %v1583, %v880
    %v1908 = vmul.f32 %v1583, %v881
    %v1909 = vmul.f32 %v1583, %v882
    %v1910 = vmul.f32 %v1583, %v883
    %v1911 = vmul.f32 %v1583, %v884
    %v1912 = vmul.f32 %v1583, %v885
    %v1913 = vmul.f32 %v1583, %v886
    %v1914 = vmul.f32 %v1583, %v887
    %v1915 = vmul.f32 %v1583, %v888
    %v1916 = vmul.f32 %v1583, %v889
    %v1917 = vmul.f32 %v1583, %v890
    %v1918 = vmul.f32 %v1583, %v891
    %v1919 = vmul.f32 %v1583, %v892
    %v1920 = vmul.f32 %v1583, %v893
    %v1921 = vmul.f32 %v1583, %v894
    %v1922 = vmul.f32 %v1583, %v895
    %v1923 = vmul.f32 %v1583, %v896
    %v1924 = vmul.f32 %v1583, %v897
    %v1925 = vmul.f32 %v1583, %v898
    %v1926 = vmul.f32 %v1583, %v899
    %v1927 = vmul.f32 %v1583, %v900
    %v1928 = vmul.f32 %v1583, %v901
    %v1929 = vmul.f32 %v1583, %v902
    %v1930 = vmul.f32 %v1583, %v903
    %v1931 = vmul.f32 %v1583, %v904
    %v1932 = vmul.f32 %v1583, %v905
    %v1933 = vmul.f32 %v1583, %v906
    %v1934 = vmul.f32 %v1583, %v907
    %v1935 = vmul.f32 %v1583, %v908
    %v1936 = vmul.f32 %v1583, %v909
    %v1937 = vmul.f32 %v1583, %v910
    %v1938 = vmul.f32 %v1583, %v911
    %v1939 = vmul.f32 %v1583, %v912
    %v1940 = vmul.f32 %v1583, %v913
    %v1941 = vmul.f32 %v1583, %v914
    %v1942 = vmul.f32 %v1583, %v915
    %v1943 = vmul.f32 %v1583, %v916
    %v1944 = vmul.f32 %v1583, %v917
    %v1945 = vmul.f32 %v1583, %v918
    %v1946 = vmul.f32 %v1583, %v919
    %v1947 = vmul.f32 %v1583, %v920
    %v1948 = vmul.f32 %v1583, %v921
    %v1949 = vmul.f32 %v1583, %v922
    %v1950 = vmul.f32 %v1583, %v923
    %v1951 = vmul.f32 %v1583, %v924
    %v1952 = vmul.f32 %v1583, %v925
    %v1953 = vmul.f32 %v1583, %v926
    %v1954 = vmul.f32 %v1583, %v927
    %v1955 = vmul.f32 %v1583, %v928
    %v1956 = vmul.f32 %v1583, %v929
    %v1957 = vmul.f32 %v1583, %v930
    %v1958 = vmul.f32 %v1583, %v931
    %v1959 = vmul.f32 %v1583, %v932
    %v1960 = vmul.f32 %v1583, %v933
    %v1961 = vmul.f32 %v1583, %v934
    %v1962 = vmul.f32 %v1583, %v935
    %v1963 = vmul.f32 %v1583, %v936
    %v1964 = vmul.f32 %v1583, %v937
    %v1965 = vmul.f32 %v1583, %v938
    %v1966 = vmul.f32 %v1583, %v939
    %v1967 = vmul.f32 %v1583, %v940
    %v1968 = vmul.f32 %v1583, %v941
    %v1969 = vmul.f32 %v1583, %v942
    %v1970 = vmul.f32 %v1583, %v943
    %v1971 = vmul.f32 %v1583, %v944
    %v1972 = vmul.f32 %v1583, %v945
    %v1973 = vmul.f32 %v1583, %v946
    %v1974 = vmul.f32 %v1583, %v947
    %v1975 = vmul.f32 %v1583, %v948
    %v1976 = vmul.f32 %v1583, %v949
    %v1977 = vmul.f32 %v1583, %v950
    %v1978 = vmul.f32 %v1583, %v951
    %v1979 = vmul.f32 %v1583, %v952
    %v1980 = vmul.f32 %v1583, %v953
    %v1981 = vmul.f32 %v1583, %v954
    %v1982 = vmul.f32 %v1583, %v955
    %v1983 = vmul.f32 %v1583, %v956
    %v1984 = vmul.f32 %v1583, %v957
    %v1985 = vmul.f32 %v1583, %v958
    %v1986 = vmul.f32 %v1583, %v959
    %v1987 = vmul.f32 %v1583, %v960
    %v1988 = vmul.f32 %v1583, %v961
    %v1989 = vmul.f32 %v1583, %v962
    %v1990 = vmul.f32 %v1583, %v963
    %v1991 = vmul.f32 %v1583, %v964
    %v1992 = vmul.f32 %v1583, %v965
    %v1993 = vmul.f32 %v1583, %v966
    %v1994 = vmul.f32 %v1583, %v967
    %v1995 = vmul.f32 %v1583, %v968
    %v1996 = vmul.f32 %v1583, %v969
    %v1997 = vmul.f32 %v1583, %v970
    %v1998 = vmul.f32 %v1583, %v971
    %v1999 = vmul.f32 %v1583, %v972
    %v2000 = vmul.f32 %v1583, %v973
    %v2001 = vmul.f32 %v1583, %v974
    %v2002 = vmul.f32 %v1583, %v975
    %v2003 = vmul.f32 %v1583, %v976
    %v2004 = vmul.f32 %v1583, %v977
    %v2005 = vmul.f32 %v1583, %v978
    %v2006 = vmul.f32 %v1583, %v979
    %v2007 = vmul.f32 %v1583, %v980
    %v2008 = vmul.f32 %v1583, %v981
    %v2009 = vmul.f32 %v1583, %v982
    %v2010 = vmul.f32 %v1583, %v983
    %v2011 = vmul.f32 %v1583, %v984
    %v2012 = vmul.f32 %v1583, %v985
    %v2013 = vmul.f32 %v1583, %v986
    %v2014 = vmul.f32 %v1583, %v987
    %v2015 = vmul.f32 %v1583, %v988
    %v2016 = vmul.f32 %v1583, %v989
    %v2017 = vmul.f32 %v1583, %v990
    %v2018 = vmul.f32 %v1583, %v991
    %v2019 = vmul.f32 %v1583, %v992
    %v2020 = vmul.f32 %v1583, %v993
    %v2021 = vmul.f32 %v1583, %v994
    %v2022 = vmul.f32 %v1583, %v995
    %v2023 = vmul.f32 %v1583, %v996
    %v2024 = vmul.f32 %v1583, %v997
    %v2025 = vmul.f32 %v1583, %v998
    %v2026 = vmul.f32 %v1583, %v999
    %v2027 = vmul.f32 %v1583, %v1000
    %v2028 = vmul.f32 %v1583, %v1001
    %v2029 = vmul.f32 %v1583, %v1002
    %v2030 = vmul.f32 %v1583, %v1003
    %v2031 = vmul.f32 %v1583, %v1004
    %v2032 = vmul.f32 %v1583, %v1005
    %v2033 = vmul.f32 %v1583, %v1006
    %v2034 = vmul.f32 %v1583, %v1007
    %v2035 = vmul.f32 %v1583, %v1008
    %v2036 = vmul.f32 %v1583, %v1009
    %v2037 = vmul.f32 %v1583, %v1010
    %v2038 = vmul.f32 %v1583, %v1011
    %v2039 = vmul.f32 %v1583, %v1012
    %v2040 = vmul.f32 %v1583, %v1013
    %v2041 = vmul.f32 %v1583, %v1014
    %v2042 = vmul.f32 %v1583, %v1015
    %v2043 = vmul.f32 %v1583, %v1016
    %v2044 = vmul.f32 %v1583, %v1017
    %v2045 = vmul.f32 %v1583, %v1018
    %v2046 = vmul.f32 %v1583, %v1019
    %v2047 = vmul.f32 %v1583, %v1020
    %v2048 = vmul.f32 %v1583, %v1021
    %v2049 = vmul.f32 %v1583, %v1022
    %v2050 = vmul.f32 %v1583, %v1023
    %v2051 = vmul.f32 %v1583, %v1024
    %v2052 = vmul.f32 %v1583, %v1025
    %v2053 = vmul.f32 %v1583, %v1026
    %v2054 = vmul.f32 %v1583, %v1027
    %v2055 = vmul.f32 %v1583, %v1028
    %v2056 = vmul.f32 %v1583, %v1029
    %v2057 = vmul.f32 %v1583, %v1030
    %v2058 = vmul.f32 %v1583, %v1031
    %v2059 = vmul.f32 %v1583, %v1032
    %v2060 = vmul.f32 %v1583, %v1033
    %v2061 = vmul.f32 %v1583, %v1034
    %v2062 = vmul.f32 %v1583, %v1035
    %v2063 = vmul.f32 %v1583, %v1036
    %v2064 = vmul.f32 %v1583, %v1037
    %v2065 = vmul.f32 %v1583, %v1038
    %v2066 = vmul.f32 %v1583, %v1039
    %v2067 = vmul.f32 %v1583, %v1040
    %v2068 = vmul.f32 %v1583, %v1041
    %v2069 = vmul.f32 %v1583, %v1042
    %v2070 = vmul.f32 %v1583, %v1043
    %v2071 = vmul.f32 %v1583, %v1044
    %v2072 = vmul.f32 %v1583, %v1045
    %v2073 = vmul.f32 %v1583, %v1046
    %v2074 = vmul.f32 %v1583, %v1047
    %v2075 = vmul.f32 %v1583, %v1048
    %v2076 = vmul.f32 %v1583, %v1049
    %v2077 = vmul.f32 %v1583, %v1050
    %v2078 = vmul.f32 %v1583, %v1051
    %v2079 = vmul.f32 %v1583, %v1052
    %v2080 = vmul.f32 %v1583, %v1053
    %v2081 = vmul.f32 %v1583, %v1054
    %v2082 = vmul.f32 %v1583, %v1055
    %v2083 = vmul.f32 %v1583, %v1056
    %v2084 = vmul.f32 %v1583, %v1057
    %v2085 = vmul.f32 %v1583, %v1058
    %v2086 = vmul.f32 %v1583, %v1059
    %v2087 = vmul.f32 %v1583, %v1060
    %v2088 = vmul.f32 %v1583, %v1061
    %v2089 = vmul.f32 %v1583, %v1062
    %v2090 = vmul.f32 %v1583, %v1063
    %v2091 = vmul.f32 %v1583, %v1064
    %v2092 = vmul.f32 %v1583, %v1065
    %v2093 = vmul.f32 %v1583, %v1066
    %v2094 = vmul.f32 %v1583, %v1067
    %v2095 = vmul.f32 %v1583, %v1068
    %v2096 = vadd.f32 %v1071, %v1584
    %v2097 = vadd.f32 %v1072, %v1585
    %v2098 = vadd.f32 %v1073, %v1586
    %v2099 = vadd.f32 %v1074, %v1587
    %v2100 = vadd.f32 %v1075, %v1588
    %v2101 = vadd.f32 %v1076, %v1589
    %v2102 = vadd.f32 %v1077, %v1590
    %v2103 = vadd.f32 %v1078, %v1591
    %v2104 = vadd.f32 %v1079, %v1592
    %v2105 = vadd.f32 %v1080, %v1593
    %v2106 = vadd.f32 %v1081, %v1594
    %v2107 = vadd.f32 %v1082, %v1595
    %v2108 = vadd.f32 %v1083, %v1596
    %v2109 = vadd.f32 %v1084, %v1597
    %v2110 = vadd.f32 %v1085, %v1598
    %v2111 = vadd.f32 %v1086, %v1599
    %v2112 = vadd.f32 %v1087, %v1600
    %v2113 = vadd.f32 %v1088, %v1601
    %v2114 = vadd.f32 %v1089, %v1602
    %v2115 = vadd.f32 %v1090, %v1603
    %v2116 = vadd.f32 %v1091, %v1604
    %v2117 = vadd.f32 %v1092, %v1605
    %v2118 = vadd.f32 %v1093, %v1606
    %v2119 = vadd.f32 %v1094, %v1607
    %v2120 = vadd.f32 %v1095, %v1608
    %v2121 = vadd.f32 %v1096, %v1609
    %v2122 = vadd.f32 %v1097, %v1610
    %v2123 = vadd.f32 %v1098, %v1611
    %v2124 = vadd.f32 %v1099, %v1612
    %v2125 = vadd.f32 %v1100, %v1613
    %v2126 = vadd.f32 %v1101, %v1614
    %v2127 = vadd.f32 %v1102, %v1615
    %v2128 = vadd.f32 %v1103, %v1616
    %v2129 = vadd.f32 %v1104, %v1617
    %v2130 = vadd.f32 %v1105, %v1618
    %v2131 = vadd.f32 %v1106, %v1619
    %v2132 = vadd.f32 %v1107, %v1620
    %v2133 = vadd.f32 %v1108, %v1621
    %v2134 = vadd.f32 %v1109, %v1622
    %v2135 = vadd.f32 %v1110, %v1623
    %v2136 = vadd.f32 %v1111, %v1624
    %v2137 = vadd.f32 %v1112, %v1625
    %v2138 = vadd.f32 %v1113, %v1626
    %v2139 = vadd.f32 %v1114, %v1627
    %v2140 = vadd.f32 %v1115, %v1628
    %v2141 = vadd.f32 %v1116, %v1629
    %v2142 = vadd.f32 %v1117, %v1630
    %v2143 = vadd.f32 %v1118, %v1631
    %v2144 = vadd.f32 %v1119, %v1632
    %v2145 = vadd.f32 %v1120, %v1633
    %v2146 = vadd.f32 %v1121, %v1634
    %v2147 = vadd.f32 %v1122, %v1635
    %v2148 = vadd.f32 %v1123, %v1636
    %v2149 = vadd.f32 %v1124, %v1637
    %v2150 = vadd.f32 %v1125, %v1638
    %v2151 = vadd.f32 %v1126, %v1639
    %v2152 = vadd.f32 %v1127, %v1640
    %v2153 = vadd.f32 %v1128, %v1641
    %v2154 = vadd.f32 %v1129, %v1642
    %v2155 = vadd.f32 %v1130, %v1643
    %v2156 = vadd.f32 %v1131, %v1644
    %v2157 = vadd.f32 %v1132, %v1645
    %v2158 = vadd.f32 %v1133, %v1646
    %v2159 = vadd.f32 %v1134, %v1647
    %v2160 = vadd.f32 %v1135, %v1648
    %v2161 = vadd.f32 %v1136, %v1649
    %v2162 = vadd.f32 %v1137, %v1650
    %v2163 = vadd.f32 %v1138, %v1651
    %v2164 = vadd.f32 %v1139, %v1652
    %v2165 = vadd.f32 %v1140, %v1653
    %v2166 = vadd.f32 %v1141, %v1654
    %v2167 = vadd.f32 %v1142, %v1655
    %v2168 = vadd.f32 %v1143, %v1656
    %v2169 = vadd.f32 %v1144, %v1657
    %v2170 = vadd.f32 %v1145, %v1658
    %v2171 = vadd.f32 %v1146, %v1659
    %v2172 = vadd.f32 %v1147, %v1660
    %v2173 = vadd.f32 %v1148, %v1661
    %v2174 = vadd.f32 %v1149, %v1662
    %v2175 = vadd.f32 %v1150, %v1663
    %v2176 = vadd.f32 %v1151, %v1664
    %v2177 = vadd.f32 %v1152, %v1665
    %v2178 = vadd.f32 %v1153, %v1666
    %v2179 = vadd.f32 %v1154, %v1667
    %v2180 = vadd.f32 %v1155, %v1668
    %v2181 = vadd.f32 %v1156, %v1669
    %v2182 = vadd.f32 %v1157, %v1670
    %v2183 = vadd.f32 %v1158, %v1671
    %v2184 = vadd.f32 %v1159, %v1672
    %v2185 = vadd.f32 %v1160, %v1673
    %v2186 = vadd.f32 %v1161, %v1674
    %v2187 = vadd.f32 %v1162, %v1675
    %v2188 = vadd.f32 %v1163, %v1676
    %v2189 = vadd.f32 %v1164, %v1677
    %v2190 = vadd.f32 %v1165, %v1678
    %v2191 = vadd.f32 %v1166, %v1679
    %v2192 = vadd.f32 %v1167, %v1680
    %v2193 = vadd.f32 %v1168, %v1681
    %v2194 = vadd.f32 %v1169, %v1682
    %v2195 = vadd.f32 %v1170, %v1683
    %v2196 = vadd.f32 %v1171, %v1684
    %v2197 = vadd.f32 %v1172, %v1685
    %v2198 = vadd.f32 %v1173, %v1686
    %v2199 = vadd.f32 %v1174, %v1687
    %v2200 = vadd.f32 %v1175, %v1688
    %v2201 = vadd.f32 %v1176, %v1689
    %v2202 = vadd.f32 %v1177, %v1690
    %v2203 = vadd.f32 %v1178, %v1691
    %v2204 = vadd.f32 %v1179, %v1692
    %v2205 = vadd.f32 %v1180, %v1693
    %v2206 = vadd.f32 %v1181, %v1694
    %v2207 = vadd.f32 %v1182, %v1695
    %v2208 = vadd.f32 %v1183, %v1696
    %v2209 = vadd.f32 %v1184, %v1697
    %v2210 = vadd.f32 %v1185, %v1698
    %v2211 = vadd.f32 %v1186, %v1699
    %v2212 = vadd.f32 %v1187, %v1700
    %v2213 = vadd.f32 %v1188, %v1701
    %v2214 = vadd.f32 %v1189, %v1702
    %v2215 = vadd.f32 %v1190, %v1703
    %v2216 = vadd.f32 %v1191, %v1704
    %v2217 = vadd.f32 %v1192, %v1705
    %v2218 = vadd.f32 %v1193, %v1706
    %v2219 = vadd.f32 %v1194, %v1707
    %v2220 = vadd.f32 %v1195, %v1708
    %v2221 = vadd.f32 %v1196, %v1709
    %v2222 = vadd.f32 %v1197, %v1710
    %v2223 = vadd.f32 %v1198, %v1711
    %v2224 = vadd.f32 %v1199, %v1712
    %v2225 = vadd.f32 %v1200, %v1713
    %v2226 = vadd.f32 %v1201, %v1714
    %v2227 = vadd.f32 %v1202, %v1715
    %v2228 = vadd.f32 %v1203, %v1716
    %v2229 = vadd.f32 %v1204, %v1717
    %v2230 = vadd.f32 %v1205, %v1718
    %v2231 = vadd.f32 %v1206, %v1719
    %v2232 = vadd.f32 %v1207, %v1720
    %v2233 = vadd.f32 %v1208, %v1721
    %v2234 = vadd.f32 %v1209, %v1722
    %v2235 = vadd.f32 %v1210, %v1723
    %v2236 = vadd.f32 %v1211, %v1724
    %v2237 = vadd.f32 %v1212, %v1725
    %v2238 = vadd.f32 %v1213, %v1726
    %v2239 = vadd.f32 %v1214, %v1727
    %v2240 = vadd.f32 %v1215, %v1728
    %v2241 = vadd.f32 %v1216, %v1729
    %v2242 = vadd.f32 %v1217, %v1730
    %v2243 = vadd.f32 %v1218, %v1731
    %v2244 = vadd.f32 %v1219, %v1732
    %v2245 = vadd.f32 %v1220, %v1733
    %v2246 = vadd.f32 %v1221, %v1734
    %v2247 = vadd.f32 %v1222, %v1735
    %v2248 = vadd.f32 %v1223, %v1736
    %v2249 = vadd.f32 %v1224, %v1737
    %v2250 = vadd.f32 %v1225, %v1738
    %v2251 = vadd.f32 %v1226, %v1739
    %v2252 = vadd.f32 %v1227, %v1740
    %v2253 = vadd.f32 %v1228, %v1741
    %v2254 = vadd.f32 %v1229, %v1742
    %v2255 = vadd.f32 %v1230, %v1743
    %v2256 = vadd.f32 %v1231, %v1744
    %v2257 = vadd.f32 %v1232, %v1745
    %v2258 = vadd.f32 %v1233, %v1746
    %v2259 = vadd.f32 %v1234, %v1747
    %v2260 = vadd.f32 %v1235, %v1748
    %v2261 = vadd.f32 %v1236, %v1749
    %v2262 = vadd.f32 %v1237, %v1750
    %v2263 = vadd.f32 %v1238, %v1751
    %v2264 = vadd.f32 %v1239, %v1752
    %v2265 = vadd.f32 %v1240, %v1753
    %v2266 = vadd.f32 %v1241, %v1754
    %v2267 = vadd.f32 %v1242, %v1755
    %v2268 = vadd.f32 %v1243, %v1756
    %v2269 = vadd.f32 %v1244, %v1757
    %v2270 = vadd.f32 %v1245, %v1758
    %v2271 = vadd.f32 %v1246, %v1759
    %v2272 = vadd.f32 %v1247, %v1760
    %v2273 = vadd.f32 %v1248, %v1761
    %v2274 = vadd.f32 %v1249, %v1762
    %v2275 = vadd.f32 %v1250, %v1763
    %v2276 = vadd.f32 %v1251, %v1764
    %v2277 = vadd.f32 %v1252, %v1765
    %v2278 = vadd.f32 %v1253, %v1766
    %v2279 = vadd.f32 %v1254, %v1767
    %v2280 = vadd.f32 %v1255, %v1768
    %v2281 = vadd.f32 %v1256, %v1769
    %v2282 = vadd.f32 %v1257, %v1770
    %v2283 = vadd.f32 %v1258, %v1771
    %v2284 = vadd.f32 %v1259, %v1772
    %v2285 = vadd.f32 %v1260, %v1773
    %v2286 = vadd.f32 %v1261, %v1774
    %v2287 = vadd.f32 %v1262, %v1775
    %v2288 = vadd.f32 %v1263, %v1776
    %v2289 = vadd.f32 %v1264, %v1777
    %v2290 = vadd.f32 %v1265, %v1778
    %v2291 = vadd.f32 %v1266, %v1779
    %v2292 = vadd.f32 %v1267, %v1780
    %v2293 = vadd.f32 %v1268, %v1781
    %v2294 = vadd.f32 %v1269, %v1782
    %v2295 = vadd.f32 %v1270, %v1783
    %v2296 = vadd.f32 %v1271, %v1784
    %v2297 = vadd.f32 %v1272, %v1785
    %v2298 = vadd.f32 %v1273, %v1786
    %v2299 = vadd.f32 %v1274, %v1787
    %v2300 = vadd.f32 %v1275, %v1788
    %v2301 = vadd.f32 %v1276, %v1789
    %v2302 = vadd.f32 %v1277, %v1790
    %v2303 = vadd.f32 %v1278, %v1791
    %v2304 = vadd.f32 %v1279, %v1792
    %v2305 = vadd.f32 %v1280, %v1793
    %v2306 = vadd.f32 %v1281, %v1794
    %v2307 = vadd.f32 %v1282, %v1795
    %v2308 = vadd.f32 %v1283, %v1796
    %v2309 = vadd.f32 %v1284, %v1797
    %v2310 = vadd.f32 %v1285, %v1798
    %v2311 = vadd.f32 %v1286, %v1799
    %v2312 = vadd.f32 %v1287, %v1800
    %v2313 = vadd.f32 %v1288, %v1801
    %v2314 = vadd.f32 %v1289, %v1802
    %v2315 = vadd.f32 %v1290, %v1803
    %v2316 = vadd.f32 %v1291, %v1804
    %v2317 = vadd.f32 %v1292, %v1805
    %v2318 = vadd.f32 %v1293, %v1806
    %v2319 = vadd.f32 %v1294, %v1807
    %v2320 = vadd.f32 %v1295, %v1808
    %v2321 = vadd.f32 %v1296, %v1809
    %v2322 = vadd.f32 %v1297, %v1810
    %v2323 = vadd.f32 %v1298, %v1811
    %v2324 = vadd.f32 %v1299, %v1812
    %v2325 = vadd.f32 %v1300, %v1813
    %v2326 = vadd.f32 %v1301, %v1814
    %v2327 = vadd.f32 %v1302, %v1815
    %v2328 = vadd.f32 %v1303, %v1816
    %v2329 = vadd.f32 %v1304, %v1817
    %v2330 = vadd.f32 %v1305, %v1818
    %v2331 = vadd.f32 %v1306, %v1819
    %v2332 = vadd.f32 %v1307, %v1820
    %v2333 = vadd.f32 %v1308, %v1821
    %v2334 = vadd.f32 %v1309, %v1822
    %v2335 = vadd.f32 %v1310, %v1823
    %v2336 = vadd.f32 %v1311, %v1824
    %v2337 = vadd.f32 %v1312, %v1825
    %v2338 = vadd.f32 %v1313, %v1826
    %v2339 = vadd.f32 %v1314, %v1827
    %v2340 = vadd.f32 %v1315, %v1828
    %v2341 = vadd.f32 %v1316, %v1829
    %v2342 = vadd.f32 %v1317, %v1830
    %v2343 = vadd.f32 %v1318, %v1831
    %v2344 = vadd.f32 %v1319, %v1832
    %v2345 = vadd.f32 %v1320, %v1833
    %v2346 = vadd.f32 %v1321, %v1834
    %v2347 = vadd.f32 %v1322, %v1835
    %v2348 = vadd.f32 %v1323, %v1836
    %v2349 = vadd.f32 %v1324, %v1837
    %v2350 = vadd.f32 %v1325, %v1838
    %v2351 = vadd.f32 %v1326, %v1839
    %v2352 = vadd.f32 %v1327, %v1840
    %v2353 = vadd.f32 %v1328, %v1841
    %v2354 = vadd.f32 %v1329, %v1842
    %v2355 = vadd.f32 %v1330, %v1843
    %v2356 = vadd.f32 %v1331, %v1844
    %v2357 = vadd.f32 %v1332, %v1845
    %v2358 = vadd.f32 %v1333, %v1846
    %v2359 = vadd.f32 %v1334, %v1847
    %v2360 = vadd.f32 %v1335, %v1848
    %v2361 = vadd.f32 %v1336, %v1849
    %v2362 = vadd.f32 %v1337, %v1850
    %v2363 = vadd.f32 %v1338, %v1851
    %v2364 = vadd.f32 %v1339, %v1852
    %v2365 = vadd.f32 %v1340, %v1853
    %v2366 = vadd.f32 %v1341, %v1854
    %v2367 = vadd.f32 %v1342, %v1855
    %v2368 = vadd.f32 %v1343, %v1856
    %v2369 = vadd.f32 %v1344, %v1857
    %v2370 = vadd.f32 %v1345, %v1858
    %v2371 = vadd.f32 %v1346, %v1859
    %v2372 = vadd.f32 %v1347, %v1860
    %v2373 = vadd.f32 %v1348, %v1861
    %v2374 = vadd.f32 %v1349, %v1862
    %v2375 = vadd.f32 %v1350, %v1863
    %v2376 = vadd.f32 %v1351, %v1864
    %v2377 = vadd.f32 %v1352, %v1865
    %v2378 = vadd.f32 %v1353, %v1866
    %v2379 = vadd.f32 %v1354, %v1867
    %v2380 = vadd.f32 %v1355, %v1868
    %v2381 = vadd.f32 %v1356, %v1869
    %v2382 = vadd.f32 %v1357, %v1870
    %v2383 = vadd.f32 %v1358, %v1871
    %v2384 = vadd.f32 %v1359, %v1872
    %v2385 = vadd.f32 %v1360, %v1873
    %v2386 = vadd.f32 %v1361, %v1874
    %v2387 = vadd.f32 %v1362, %v1875
    %v2388 = vadd.f32 %v1363, %v1876
    %v2389 = vadd.f32 %v1364, %v1877
    %v2390 = vadd.f32 %v1365, %v1878
    %v2391 = vadd.f32 %v1366, %v1879
    %v2392 = vadd.f32 %v1367, %v1880
    %v2393 = vadd.f32 %v1368, %v1881
    %v2394 = vadd.f32 %v1369, %v1882
    %v2395 = vadd.f32 %v1370, %v1883
    %v2396 = vadd.f32 %v1371, %v1884
    %v2397 = vadd.f32 %v1372, %v1885
    %v2398 = vadd.f32 %v1373, %v1886
    %v2399 = vadd.f32 %v1374, %v1887
    %v2400 = vadd.f32 %v1375, %v1888
    %v2401 = vadd.f32 %v1376, %v1889
    %v2402 = vadd.f32 %v1377, %v1890
    %v2403 = vadd.f32 %v1378, %v1891
    %v2404 = vadd.f32 %v1379, %v1892
    %v2405 = vadd.f32 %v1380, %v1893
    %v2406 = vadd.f32 %v1381, %v1894
    %v2407 = vadd.f32 %v1382, %v1895
    %v2408 = vadd.f32 %v1383, %v1896
    %v2409 = vadd.f32 %v1384, %v1897
    %v2410 = vadd.f32 %v1385, %v1898
    %v2411 = vadd.f32 %v1386, %v1899
    %v2412 = vadd.f32 %v1387, %v1900
    %v2413 = vadd.f32 %v1388, %v1901
    %v2414 = vadd.f32 %v1389, %v1902
    %v2415 = vadd.f32 %v1390, %v1903
    %v2416 = vadd.f32 %v1391, %v1904
    %v2417 = vadd.f32 %v1392, %v1905
    %v2418 = vadd.f32 %v1393, %v1906
    %v2419 = vadd.f32 %v1394, %v1907
    %v2420 = vadd.f32 %v1395, %v1908
    %v2421 = vadd.f32 %v1396, %v1909
    %v2422 = vadd.f32 %v1397, %v1910
    %v2423 = vadd.f32 %v1398, %v1911
    %v2424 = vadd.f32 %v1399, %v1912
    %v2425 = vadd.f32 %v1400, %v1913
    %v2426 = vadd.f32 %v1401, %v1914
    %v2427 = vadd.f32 %v1402, %v1915
    %v2428 = vadd.f32 %v1403, %v1916
    %v2429 = vadd.f32 %v1404, %v1917
    %v2430 = vadd.f32 %v1405, %v1918
    %v2431 = vadd.f32 %v1406, %v1919
    %v2432 = vadd.f32 %v1407, %v1920
    %v2433 = vadd.f32 %v1408, %v1921
    %v2434 = vadd.f32 %v1409, %v1922
    %v2435 = vadd.f32 %v1410, %v1923
    %v2436 = vadd.f32 %v1411, %v1924
    %v2437 = vadd.f32 %v1412, %v1925
    %v2438 = vadd.f32 %v1413, %v1926
    %v2439 = vadd.f32 %v1414, %v1927
    %v2440 = vadd.f32 %v1415, %v1928
    %v2441 = vadd.f32 %v1416, %v1929
    %v2442 = vadd.f32 %v1417, %v1930
    %v2443 = vadd.f32 %v1418, %v1931
    %v2444 = vadd.f32 %v1419, %v1932
    %v2445 = vadd.f32 %v1420, %v1933
    %v2446 = vadd.f32 %v1421, %v1934
    %v2447 = vadd.f32 %v1422, %v1935
    %v2448 = vadd.f32 %v1423, %v1936
    %v2449 = vadd.f32 %v1424, %v1937
    %v2450 = vadd.f32 %v1425, %v1938
    %v2451 = vadd.f32 %v1426, %v1939
    %v2452 = vadd.f32 %v1427, %v1940
    %v2453 = vadd.f32 %v1428, %v1941
    %v2454 = vadd.f32 %v1429, %v1942
    %v2455 = vadd.f32 %v1430, %v1943
    %v2456 = vadd.f32 %v1431, %v1944
    %v2457 = vadd.f32 %v1432, %v1945
    %v2458 = vadd.f32 %v1433, %v1946
    %v2459 = vadd.f32 %v1434, %v1947
    %v2460 = vadd.f32 %v1435, %v1948
    %v2461 = vadd.f32 %v1436, %v1949
    %v2462 = vadd.f32 %v1437, %v1950
    %v2463 = vadd.f32 %v1438, %v1951
    %v2464 = vadd.f32 %v1439, %v1952
    %v2465 = vadd.f32 %v1440, %v1953
    %v2466 = vadd.f32 %v1441, %v1954
    %v2467 = vadd.f32 %v1442, %v1955
    %v2468 = vadd.f32 %v1443, %v1956
    %v2469 = vadd.f32 %v1444, %v1957
    %v2470 = vadd.f32 %v1445, %v1958
    %v2471 = vadd.f32 %v1446, %v1959
    %v2472 = vadd.f32 %v1447, %v1960
    %v2473 = vadd.f32 %v1448, %v1961
    %v2474 = vadd.f32 %v1449, %v1962
    %v2475 = vadd.f32 %v1450, %v1963
    %v2476 = vadd.f32 %v1451, %v1964
    %v2477 = vadd.f32 %v1452, %v1965
    %v2478 = vadd.f32 %v1453, %v1966
    %v2479 = vadd.f32 %v1454, %v1967
    %v2480 = vadd.f32 %v1455, %v1968
    %v2481 = vadd.f32 %v1456, %v1969
    %v2482 = vadd.f32 %v1457, %v1970
    %v2483 = vadd.f32 %v1458, %v1971
    %v2484 = vadd.f32 %v1459, %v1972
    %v2485 = vadd.f32 %v1460, %v1973
    %v2486 = vadd.f32 %v1461, %v1974
    %v2487 = vadd.f32 %v1462, %v1975
    %v2488 = vadd.f32 %v1463, %v1976
    %v2489 = vadd.f32 %v1464, %v1977
    %v2490 = vadd.f32 %v1465, %v1978
    %v2491 = vadd.f32 %v1466, %v1979
    %v2492 = vadd.f32 %v1467, %v1980
    %v2493 = vadd.f32 %v1468, %v1981
    %v2494 = vadd.f32 %v1469, %v1982
    %v2495 = vadd.f32 %v1470, %v1983
    %v2496 = vadd.f32 %v1471, %v1984
    %v2497 = vadd.f32 %v1472, %v1985
    %v2498 = vadd.f32 %v1473, %v1986
    %v2499 = vadd.f32 %v1474, %v1987
    %v2500 = vadd.f32 %v1475, %v1988
    %v2501 = vadd.f32 %v1476, %v1989
    %v2502 = vadd.f32 %v1477, %v1990
    %v2503 = vadd.f32 %v1478, %v1991
    %v2504 = vadd.f32 %v1479, %v1992
    %v2505 = vadd.f32 %v1480, %v1993
    %v2506 = vadd.f32 %v1481, %v1994
    %v2507 = vadd.f32 %v1482, %v1995
    %v2508 = vadd.f32 %v1483, %v1996
    %v2509 = vadd.f32 %v1484, %v1997
    %v2510 = vadd.f32 %v1485, %v1998
    %v2511 = vadd.f32 %v1486, %v1999
    %v2512 = vadd.f32 %v1487, %v2000
    %v2513 = vadd.f32 %v1488, %v2001
    %v2514 = vadd.f32 %v1489, %v2002
    %v2515 = vadd.f32 %v1490, %v2003
    %v2516 = vadd.f32 %v1491, %v2004
    %v2517 = vadd.f32 %v1492, %v2005
    %v2518 = vadd.f32 %v1493, %v2006
    %v2519 = vadd.f32 %v1494, %v2007
    %v2520 = vadd.f32 %v1495, %v2008
    %v2521 = vadd.f32 %v1496, %v2009
    %v2522 = vadd.f32 %v1497, %v2010
    %v2523 = vadd.f32 %v1498, %v2011
    %v2524 = vadd.f32 %v1499, %v2012
    %v2525 = vadd.f32 %v1500, %v2013
    %v2526 = vadd.f32 %v1501, %v2014
    %v2527 = vadd.f32 %v1502, %v2015
    %v2528 = vadd.f32 %v1503, %v2016
    %v2529 = vadd.f32 %v1504, %v2017
    %v2530 = vadd.f32 %v1505, %v2018
    %v2531 = vadd.f32 %v1506, %v2019
    %v2532 = vadd.f32 %v1507, %v2020
    %v2533 = vadd.f32 %v1508, %v2021
    %v2534 = vadd.f32 %v1509, %v2022
    %v2535 = vadd.f32 %v1510, %v2023
    %v2536 = vadd.f32 %v1511, %v2024
    %v2537 = vadd.f32 %v1512, %v2025
    %v2538 = vadd.f32 %v1513, %v2026
    %v2539 = vadd.f32 %v1514, %v2027
    %v2540 = vadd.f32 %v1515, %v2028
    %v2541 = vadd.f32 %v1516, %v2029
    %v2542 = vadd.f32 %v1517, %v2030
    %v2543 = vadd.f32 %v1518, %v2031
    %v2544 = vadd.f32 %v1519, %v2032
    %v2545 = vadd.f32 %v1520, %v2033
    %v2546 = vadd.f32 %v1521, %v2034
    %v2547 = vadd.f32 %v1522, %v2035
    %v2548 = vadd.f32 %v1523, %v2036
    %v2549 = vadd.f32 %v1524, %v2037
    %v2550 = vadd.f32 %v1525, %v2038
    %v2551 = vadd.f32 %v1526, %v2039
    %v2552 = vadd.f32 %v1527, %v2040
    %v2553 = vadd.f32 %v1528, %v2041
    %v2554 = vadd.f32 %v1529, %v2042
    %v2555 = vadd.f32 %v1530, %v2043
    %v2556 = vadd.f32 %v1531, %v2044
    %v2557 = vadd.f32 %v1532, %v2045
    %v2558 = vadd.f32 %v1533, %v2046
    %v2559 = vadd.f32 %v1534, %v2047
    %v2560 = vadd.f32 %v1535, %v2048
    %v2561 = vadd.f32 %v1536, %v2049
    %v2562 = vadd.f32 %v1537, %v2050
    %v2563 = vadd.f32 %v1538, %v2051
    %v2564 = vadd.f32 %v1539, %v2052
    %v2565 = vadd.f32 %v1540, %v2053
    %v2566 = vadd.f32 %v1541, %v2054
    %v2567 = vadd.f32 %v1542, %v2055
    %v2568 = vadd.f32 %v1543, %v2056
    %v2569 = vadd.f32 %v1544, %v2057
    %v2570 = vadd.f32 %v1545, %v2058
    %v2571 = vadd.f32 %v1546, %v2059
    %v2572 = vadd.f32 %v1547, %v2060
    %v2573 = vadd.f32 %v1548, %v2061
    %v2574 = vadd.f32 %v1549, %v2062
    %v2575 = vadd.f32 %v1550, %v2063
    %v2576 = vadd.f32 %v1551, %v2064
    %v2577 = vadd.f32 %v1552, %v2065
    %v2578 = vadd.f32 %v1553, %v2066
    %v2579 = vadd.f32 %v1554, %v2067
    %v2580 = vadd.f32 %v1555, %v2068
    %v2581 = vadd.f32 %v1556, %v2069
    %v2582 = vadd.f32 %v1557, %v2070
    %v2583 = vadd.f32 %v1558, %v2071
    %v2584 = vadd.f32 %v1559, %v2072
    %v2585 = vadd.f32 %v1560, %v2073
    %v2586 = vadd.f32 %v1561, %v2074
    %v2587 = vadd.f32 %v1562, %v2075
    %v2588 = vadd.f32 %v1563, %v2076
    %v2589 = vadd.f32 %v1564, %v2077
    %v2590 = vadd.f32 %v1565, %v2078
    %v2591 = vadd.f32 %v1566, %v2079
    %v2592 = vadd.f32 %v1567, %v2080
    %v2593 = vadd.f32 %v1568, %v2081
    %v2594 = vadd.f32 %v1569, %v2082
    %v2595 = vadd.f32 %v1570, %v2083
    %v2596 = vadd.f32 %v1571, %v2084
    %v2597 = vadd.f32 %v1572, %v2085
    %v2598 = vadd.f32 %v1573, %v2086
    %v2599 = vadd.f32 %v1574, %v2087
    %v2600 = vadd.f32 %v1575, %v2088
    %v2601 = vadd.f32 %v1576, %v2089
    %v2602 = vadd.f32 %v1577, %v2090
    %v2603 = vadd.f32 %v1578, %v2091
    %v2604 = vadd.f32 %v1579, %v2092
    %v2605 = vadd.f32 %v1580, %v2093
    %v2606 = vadd.f32 %v1581, %v2094
    %v2607 = vadd.f32 %v1582, %v2095
    %2608 = vst [vmem:[#allocation8] sm:$0xff] %v2096
    %2609 = vst [vmem:[#allocation8 + $0x8] sm:$0xff] %v2097
    %2610 = vst [vmem:[#allocation8 + $0x10] sm:$0xff] %v2098
    %2611 = vst [vmem:[#allocation8 + $0x18] sm:$0xff] %v2099
    %2612 = vst [vmem:[#allocation8 + $0x20] sm:$0xff] %v2100
    %2613 = vst [vmem:[#allocation8 + $0x28] sm:$0xff] %v2101
    %2614 = vst [vmem:[#allocation8 + $0x30] sm:$0xff] %v2102
    %2615 = vst [vmem:[#allocation8 + $0x38] sm:$0xff] %v2103
    %2616 = vst [vmem:[#allocation8 + $0x40] sm:$0xff] %v2104
    %2617 = vst [vmem:[#allocation8 + $0x48] sm:$0xff] %v2105
    %2618 = vst [vmem:[#allocation8 + $0x50] sm:$0xff] %v2106
    %2619 = vst [vmem:[#allocation8 + $0x58] sm:$0xff] %v2107
    %2620 = vst [vmem:[#allocation8 + $0x60] sm:$0xff] %v2108
    %2621 = vst [vmem:[#allocation8 + $0x68] sm:$0xff] %v2109
    %2622 = vst [vmem:[#allocation8 + $0x70] sm:$0xff] %v2110
    %2623 = vst [vmem:[#allocation8 + $0x78] sm:$0xff] %v2111
    %2624 = vst [vmem:[#allocation8 + $0x80] sm:$0xff] %v2112
    %2625 = vst [vmem:[#allocation8 + $0x88] sm:$0xff] %v2113
    %2626 = vst [vmem:[#allocation8 + $0x90] sm:$0xff] %v2114
    %2627 = vst [vmem:[#allocation8 + $0x98] sm:$0xff] %v2115
    %2628 = vst [vmem:[#allocation8 + $0xa0] sm:$0xff] %v2116
    %2629 = vst [vmem:[#allocation8 + $0xa8] sm:$0xff] %v2117
    %2630 = vst [vmem:[#allocation8 + $0xb0] sm:$0xff] %v2118
    %2631 = vst [vmem:[#allocation8 + $0xb8] sm:$0xff] %v2119
    %2632 = vst [vmem:[#allocation8 + $0xc0] sm:$0xff] %v2120
    %2633 = vst [vmem:[#allocation8 + $0xc8] sm:$0xff] %v2121
    %2634 = vst [vmem:[#allocation8 + $0xd0] sm:$0xff] %v2122
    %2635 = vst [vmem:[#allocation8 + $0xd8] sm:$0xff] %v2123
    %2636 = vst [vmem:[#allocation8 + $0xe0] sm:$0xff] %v2124
    %2637 = vst [vmem:[#allocation8 + $0xe8] sm:$0xff] %v2125
    %2638 = vst [vmem:[#allocation8 + $0xf0] sm:$0xff] %v2126
    %2639 = vst [vmem:[#allocation8 + $0xf8] sm:$0xff] %v2127
    %2640 = vst [vmem:[#allocation8 + $0x100] sm:$0xff] %v2128
    %2641 = vst [vmem:[#allocation8 + $0x108] sm:$0xff] %v2129
    %2642 = vst [vmem:[#allocation8 + $0x110] sm:$0xff] %v2130
    %2643 = vst [vmem:[#allocation8 + $0x118] sm:$0xff] %v2131
    %2644 = vst [vmem:[#allocation8 + $0x120] sm:$0xff] %v2132
    %2645 = vst [vmem:[#allocation8 + $0x128] sm:$0xff] %v2133
    %2646 = vst [vmem:[#allocation8 + $0x130] sm:$0xff] %v2134
    %2647 = vst [vmem:[#allocation8 + $0x138] sm:$0xff] %v2135
    %2648 = vst [vmem:[#allocation8 + $0x140] sm:$0xff] %v2136
    %2649 = vst [vmem:[#allocation8 + $0x148] sm:$0xff] %v2137
    %2650 = vst [vmem:[#allocation8 + $0x150] sm:$0xff] %v2138
    %2651 = vst [vmem:[#allocation8 + $0x158] sm:$0xff] %v2139
    %2652 = vst [vmem:[#allocation8 + $0x160] sm:$0xff] %v2140
    %2653 = vst [vmem:[#allocation8 + $0x168] sm:$0xff] %v2141
    %2654 = vst [vmem:[#allocation8 + $0x170] sm:$0xff] %v2142
    %2655 = vst [vmem:[#allocation8 + $0x178] sm:$0xff] %v2143
    %2656 = vst [vmem:[#allocation8 + $0x180] sm:$0xff] %v2144
    %2657 = vst [vmem:[#allocation8 + $0x188] sm:$0xff] %v2145
    %2658 = vst [vmem:[#allocation8 + $0x190] sm:$0xff] %v2146
    %2659 = vst [vmem:[#allocation8 + $0x198] sm:$0xff] %v2147
    %2660 = vst [vmem:[#allocation8 + $0x1a0] sm:$0xff] %v2148
    %2661 = vst [vmem:[#allocation8 + $0x1a8] sm:$0xff] %v2149
    %2662 = vst [vmem:[#allocation8 + $0x1b0] sm:$0xff] %v2150
    %2663 = vst [vmem:[#allocation8 + $0x1b8] sm:$0xff] %v2151
    %2664 = vst [vmem:[#allocation8 + $0x1c0] sm:$0xff] %v2152
    %2665 = vst [vmem:[#allocation8 + $0x1c8] sm:$0xff] %v2153
    %2666 = vst [vmem:[#allocation8 + $0x1d0] sm:$0xff] %v2154
    %2667 = vst [vmem:[#allocation8 + $0x1d8] sm:$0xff] %v2155
    %2668 = vst [vmem:[#allocation8 + $0x1e0] sm:$0xff] %v2156
    %2669 = vst [vmem:[#allocation8 + $0x1e8] sm:$0xff] %v2157
    %2670 = vst [vmem:[#allocation8 + $0x1f0] sm:$0xff] %v2158
    %2671 = vst [vmem:[#allocation8 + $0x1f8] sm:$0xff] %v2159
    %2672 = vst [vmem:[#allocation8 + $0x200] sm:$0xff] %v2160
    %2673 = vst [vmem:[#allocation8 + $0x208] sm:$0xff] %v2161
    %2674 = vst [vmem:[#allocation8 + $0x210] sm:$0xff] %v2162
    %2675 = vst [vmem:[#allocation8 + $0x218] sm:$0xff] %v2163
    %2676 = vst [vmem:[#allocation8 + $0x220] sm:$0xff] %v2164
    %2677 = vst [vmem:[#allocation8 + $0x228] sm:$0xff] %v2165
    %2678 = vst [vmem:[#allocation8 + $0x230] sm:$0xff] %v2166
    %2679 = vst [vmem:[#allocation8 + $0x238] sm:$0xff] %v2167
    %2680 = vst [vmem:[#allocation8 + $0x240] sm:$0xff] %v2168
    %2681 = vst [vmem:[#allocation8 + $0x248] sm:$0xff] %v2169
    %2682 = vst [vmem:[#allocation8 + $0x250] sm:$0xff] %v2170
    %2683 = vst [vmem:[#allocation8 + $0x258] sm:$0xff] %v2171
    %2684 = vst [vmem:[#allocation8 + $0x260] sm:$0xff] %v2172
    %2685 = vst [vmem:[#allocation8 + $0x268] sm:$0xff] %v2173
    %2686 = vst [vmem:[#allocation8 + $0x270] sm:$0xff] %v2174
    %2687 = vst [vmem:[#allocation8 + $0x278] sm:$0xff] %v2175
    %2688 = vst [vmem:[#allocation8 + $0x280] sm:$0xff] %v2176
    %2689 = vst [vmem:[#allocation8 + $0x288] sm:$0xff] %v2177
    %2690 = vst [vmem:[#allocation8 + $0x290] sm:$0xff] %v2178
    %2691 = vst [vmem:[#allocation8 + $0x298] sm:$0xff] %v2179
    %2692 = vst [vmem:[#allocation8 + $0x2a0] sm:$0xff] %v2180
    %2693 = vst [vmem:[#allocation8 + $0x2a8] sm:$0xff] %v2181
    %2694 = vst [vmem:[#allocation8 + $0x2b0] sm:$0xff] %v2182
    %2695 = vst [vmem:[#allocation8 + $0x2b8] sm:$0xff] %v2183
    %2696 = vst [vmem:[#allocation8 + $0x2c0] sm:$0xff] %v2184
    %2697 = vst [vmem:[#allocation8 + $0x2c8] sm:$0xff] %v2185
    %2698 = vst [vmem:[#allocation8 + $0x2d0] sm:$0xff] %v2186
    %2699 = vst [vmem:[#allocation8 + $0x2d8] sm:$0xff] %v2187
    %2700 = vst [vmem:[#allocation8 + $0x2e0] sm:$0xff] %v2188
    %2701 = vst [vmem:[#allocation8 + $0x2e8] sm:$0xff] %v2189
    %2702 = vst [vmem:[#allocation8 + $0x2f0] sm:$0xff] %v2190
    %2703 = vst [vmem:[#allocation8 + $0x2f8] sm:$0xff] %v2191
    %2704 = vst [vmem:[#allocation8 + $0x300] sm:$0xff] %v2192
    %2705 = vst [vmem:[#allocation8 + $0x308] sm:$0xff] %v2193
    %2706 = vst [vmem:[#allocation8 + $0x310] sm:$0xff] %v2194
    %2707 = vst [vmem:[#allocation8 + $0x318] sm:$0xff] %v2195
    %2708 = vst [vmem:[#allocation8 + $0x320] sm:$0xff] %v2196
    %2709 = vst [vmem:[#allocation8 + $0x328] sm:$0xff] %v2197
    %2710 = vst [vmem:[#allocation8 + $0x330] sm:$0xff] %v2198
    %2711 = vst [vmem:[#allocation8 + $0x338] sm:$0xff] %v2199
    %2712 = vst [vmem:[#allocation8 + $0x340] sm:$0xff] %v2200
    %2713 = vst [vmem:[#allocation8 + $0x348] sm:$0xff] %v2201
    %2714 = vst [vmem:[#allocation8 + $0x350] sm:$0xff] %v2202
    %2715 = vst [vmem:[#allocation8 + $0x358] sm:$0xff] %v2203
    %2716 = vst [vmem:[#allocation8 + $0x360] sm:$0xff] %v2204
    %2717 = vst [vmem:[#allocation8 + $0x368] sm:$0xff] %v2205
    %2718 = vst [vmem:[#allocation8 + $0x370] sm:$0xff] %v2206
    %2719 = vst [vmem:[#allocation8 + $0x378] sm:$0xff] %v2207
    %2720 = vst [vmem:[#allocation8 + $0x380] sm:$0xff] %v2208
    %2721 = vst [vmem:[#allocation8 + $0x388] sm:$0xff] %v2209
    %2722 = vst [vmem:[#allocation8 + $0x390] sm:$0xff] %v2210
    %2723 = vst [vmem:[#allocation8 + $0x398] sm:$0xff] %v2211
    %2724 = vst [vmem:[#allocation8 + $0x3a0] sm:$0xff] %v2212
    %2725 = vst [vmem:[#allocation8 + $0x3a8] sm:$0xff] %v2213
    %2726 = vst [vmem:[#allocation8 + $0x3b0] sm:$0xff] %v2214
    %2727 = vst [vmem:[#allocation8 + $0x3b8] sm:$0xff] %v2215
    %2728 = vst [vmem:[#allocation8 + $0x3c0] sm:$0xff] %v2216
    %2729 = vst [vmem:[#allocation8 + $0x3c8] sm:$0xff] %v2217
    %2730 = vst [vmem:[#allocation8 + $0x3d0] sm:$0xff] %v2218
    %2731 = vst [vmem:[#allocation8 + $0x3d8] sm:$0xff] %v2219
    %2732 = vst [vmem:[#allocation8 + $0x3e0] sm:$0xff] %v2220
    %2733 = vst [vmem:[#allocation8 + $0x3e8] sm:$0xff] %v2221
    %2734 = vst [vmem:[#allocation8 + $0x3f0] sm:$0xff] %v2222
    %2735 = vst [vmem:[#allocation8 + $0x3f8] sm:$0xff] %v2223
    %2736 = vst [vmem:[#allocation8 + $0x400] sm:$0xff] %v2224
    %2737 = vst [vmem:[#allocation8 + $0x408] sm:$0xff] %v2225
    %2738 = vst [vmem:[#allocation8 + $0x410] sm:$0xff] %v2226
    %2739 = vst [vmem:[#allocation8 + $0x418] sm:$0xff] %v2227
    %2740 = vst [vmem:[#allocation8 + $0x420] sm:$0xff] %v2228
    %2741 = vst [vmem:[#allocation8 + $0x428] sm:$0xff] %v2229
    %2742 = vst [vmem:[#allocation8 + $0x430] sm:$0xff] %v2230
    %2743 = vst [vmem:[#allocation8 + $0x438] sm:$0xff] %v2231
    %2744 = vst [vmem:[#allocation8 + $0x440] sm:$0xff] %v2232
    %2745 = vst [vmem:[#allocation8 + $0x448] sm:$0xff] %v2233
    %2746 = vst [vmem:[#allocation8 + $0x450] sm:$0xff] %v2234
    %2747 = vst [vmem:[#allocation8 + $0x458] sm:$0xff] %v2235
    %2748 = vst [vmem:[#allocation8 + $0x460] sm:$0xff] %v2236
    %2749 = vst [vmem:[#allocation8 + $0x468] sm:$0xff] %v2237
    %2750 = vst [vmem:[#allocation8 + $0x470] sm:$0xff] %v2238
    %2751 = vst [vmem:[#allocation8 + $0x478] sm:$0xff] %v2239
    %2752 = vst [vmem:[#allocation8 + $0x480] sm:$0xff] %v2240
    %2753 = vst [vmem:[#allocation8 + $0x488] sm:$0xff] %v2241
    %2754 = vst [vmem:[#allocation8 + $0x490] sm:$0xff] %v2242
    %2755 = vst [vmem:[#allocation8 + $0x498] sm:$0xff] %v2243
    %2756 = vst [vmem:[#allocation8 + $0x4a0] sm:$0xff] %v2244
    %2757 = vst [vmem:[#allocation8 + $0x4a8] sm:$0xff] %v2245
    %2758 = vst [vmem:[#allocation8 + $0x4b0] sm:$0xff] %v2246
    %2759 = vst [vmem:[#allocation8 + $0x4b8] sm:$0xff] %v2247
    %2760 = vst [vmem:[#allocation8 + $0x4c0] sm:$0xff] %v2248
    %2761 = vst [vmem:[#allocation8 + $0x4c8] sm:$0xff] %v2249
    %2762 = vst [vmem:[#allocation8 + $0x4d0] sm:$0xff] %v2250
    %2763 = vst [vmem:[#allocation8 + $0x4d8] sm:$0xff] %v2251
    %2764 = vst [vmem:[#allocation8 + $0x4e0] sm:$0xff] %v2252
    %2765 = vst [vmem:[#allocation8 + $0x4e8] sm:$0xff] %v2253
    %2766 = vst [vmem:[#allocation8 + $0x4f0] sm:$0xff] %v2254
    %2767 = vst [vmem:[#allocation8 + $0x4f8] sm:$0xff] %v2255
    %2768 = vst [vmem:[#allocation8 + $0x500] sm:$0xff] %v2256
    %2769 = vst [vmem:[#allocation8 + $0x508] sm:$0xff] %v2257
    %2770 = vst [vmem:[#allocation8 + $0x510] sm:$0xff] %v2258
    %2771 = vst [vmem:[#allocation8 + $0x518] sm:$0xff] %v2259
    %2772 = vst [vmem:[#allocation8 + $0x520] sm:$0xff] %v2260
    %2773 = vst [vmem:[#allocation8 + $0x528] sm:$0xff] %v2261
    %2774 = vst [vmem:[#allocation8 + $0x530] sm:$0xff] %v2262
    %2775 = vst [vmem:[#allocation8 + $0x538] sm:$0xff] %v2263
    %2776 = vst [vmem:[#allocation8 + $0x540] sm:$0xff] %v2264
    %2777 = vst [vmem:[#allocation8 + $0x548] sm:$0xff] %v2265
    %2778 = vst [vmem:[#allocation8 + $0x550] sm:$0xff] %v2266
    %2779 = vst [vmem:[#allocation8 + $0x558] sm:$0xff] %v2267
    %2780 = vst [vmem:[#allocation8 + $0x560] sm:$0xff] %v2268
    %2781 = vst [vmem:[#allocation8 + $0x568] sm:$0xff] %v2269
    %2782 = vst [vmem:[#allocation8 + $0x570] sm:$0xff] %v2270
    %2783 = vst [vmem:[#allocation8 + $0x578] sm:$0xff] %v2271
    %2784 = vst [vmem:[#allocation8 + $0x580] sm:$0xff] %v2272
    %2785 = vst [vmem:[#allocation8 + $0x588] sm:$0xff] %v2273
    %2786 = vst [vmem:[#allocation8 + $0x590] sm:$0xff] %v2274
    %2787 = vst [vmem:[#allocation8 + $0x598] sm:$0xff] %v2275
    %2788 = vst [vmem:[#allocation8 + $0x5a0] sm:$0xff] %v2276
    %2789 = vst [vmem:[#allocation8 + $0x5a8] sm:$0xff] %v2277
    %2790 = vst [vmem:[#allocation8 + $0x5b0] sm:$0xff] %v2278
    %2791 = vst [vmem:[#allocation8 + $0x5b8] sm:$0xff] %v2279
    %2792 = vst [vmem:[#allocation8 + $0x5c0] sm:$0xff] %v2280
    %2793 = vst [vmem:[#allocation8 + $0x5c8] sm:$0xff] %v2281
    %2794 = vst [vmem:[#allocation8 + $0x5d0] sm:$0xff] %v2282
    %2795 = vst [vmem:[#allocation8 + $0x5d8] sm:$0xff] %v2283
    %2796 = vst [vmem:[#allocation8 + $0x5e0] sm:$0xff] %v2284
    %2797 = vst [vmem:[#allocation8 + $0x5e8] sm:$0xff] %v2285
    %2798 = vst [vmem:[#allocation8 + $0x5f0] sm:$0xff] %v2286
    %2799 = vst [vmem:[#allocation8 + $0x5f8] sm:$0xff] %v2287
    %2800 = vst [vmem:[#allocation8 + $0x600] sm:$0xff] %v2288
    %2801 = vst [vmem:[#allocation8 + $0x608] sm:$0xff] %v2289
    %2802 = vst [vmem:[#allocation8 + $0x610] sm:$0xff] %v2290
    %2803 = vst [vmem:[#allocation8 + $0x618] sm:$0xff] %v2291
    %2804 = vst [vmem:[#allocation8 + $0x620] sm:$0xff] %v2292
    %2805 = vst [vmem:[#allocation8 + $0x628] sm:$0xff] %v2293
    %2806 = vst [vmem:[#allocation8 + $0x630] sm:$0xff] %v2294
    %2807 = vst [vmem:[#allocation8 + $0x638] sm:$0xff] %v2295
    %2808 = vst [vmem:[#allocation8 + $0x640] sm:$0xff] %v2296
    %2809 = vst [vmem:[#allocation8 + $0x648] sm:$0xff] %v2297
    %2810 = vst [vmem:[#allocation8 + $0x650] sm:$0xff] %v2298
    %2811 = vst [vmem:[#allocation8 + $0x658] sm:$0xff] %v2299
    %2812 = vst [vmem:[#allocation8 + $0x660] sm:$0xff] %v2300
    %2813 = vst [vmem:[#allocation8 + $0x668] sm:$0xff] %v2301
    %2814 = vst [vmem:[#allocation8 + $0x670] sm:$0xff] %v2302
    %2815 = vst [vmem:[#allocation8 + $0x678] sm:$0xff] %v2303
    %2816 = vst [vmem:[#allocation8 + $0x680] sm:$0xff] %v2304
    %2817 = vst [vmem:[#allocation8 + $0x688] sm:$0xff] %v2305
    %2818 = vst [vmem:[#allocation8 + $0x690] sm:$0xff] %v2306
    %2819 = vst [vmem:[#allocation8 + $0x698] sm:$0xff] %v2307
    %2820 = vst [vmem:[#allocation8 + $0x6a0] sm:$0xff] %v2308
    %2821 = vst [vmem:[#allocation8 + $0x6a8] sm:$0xff] %v2309
    %2822 = vst [vmem:[#allocation8 + $0x6b0] sm:$0xff] %v2310
    %2823 = vst [vmem:[#allocation8 + $0x6b8] sm:$0xff] %v2311
    %2824 = vst [vmem:[#allocation8 + $0x6c0] sm:$0xff] %v2312
    %2825 = vst [vmem:[#allocation8 + $0x6c8] sm:$0xff] %v2313
    %2826 = vst [vmem:[#allocation8 + $0x6d0] sm:$0xff] %v2314
    %2827 = vst [vmem:[#allocation8 + $0x6d8] sm:$0xff] %v2315
    %2828 = vst [vmem:[#allocation8 + $0x6e0] sm:$0xff] %v2316
    %2829 = vst [vmem:[#allocation8 + $0x6e8] sm:$0xff] %v2317
    %2830 = vst [vmem:[#allocation8 + $0x6f0] sm:$0xff] %v2318
    %2831 = vst [vmem:[#allocation8 + $0x6f8] sm:$0xff] %v2319
    %2832 = vst [vmem:[#allocation8 + $0x700] sm:$0xff] %v2320
    %2833 = vst [vmem:[#allocation8 + $0x708] sm:$0xff] %v2321
    %2834 = vst [vmem:[#allocation8 + $0x710] sm:$0xff] %v2322
    %2835 = vst [vmem:[#allocation8 + $0x718] sm:$0xff] %v2323
    %2836 = vst [vmem:[#allocation8 + $0x720] sm:$0xff] %v2324
    %2837 = vst [vmem:[#allocation8 + $0x728] sm:$0xff] %v2325
    %2838 = vst [vmem:[#allocation8 + $0x730] sm:$0xff] %v2326
    %2839 = vst [vmem:[#allocation8 + $0x738] sm:$0xff] %v2327
    %2840 = vst [vmem:[#allocation8 + $0x740] sm:$0xff] %v2328
    %2841 = vst [vmem:[#allocation8 + $0x748] sm:$0xff] %v2329
    %2842 = vst [vmem:[#allocation8 + $0x750] sm:$0xff] %v2330
    %2843 = vst [vmem:[#allocation8 + $0x758] sm:$0xff] %v2331
    %2844 = vst [vmem:[#allocation8 + $0x760] sm:$0xff] %v2332
    %2845 = vst [vmem:[#allocation8 + $0x768] sm:$0xff] %v2333
    %2846 = vst [vmem:[#allocation8 + $0x770] sm:$0xff] %v2334
    %2847 = vst [vmem:[#allocation8 + $0x778] sm:$0xff] %v2335
    %2848 = vst [vmem:[#allocation8 + $0x780] sm:$0xff] %v2336
    %2849 = vst [vmem:[#allocation8 + $0x788] sm:$0xff] %v2337
    %2850 = vst [vmem:[#allocation8 + $0x790] sm:$0xff] %v2338
    %2851 = vst [vmem:[#allocation8 + $0x798] sm:$0xff] %v2339
    %2852 = vst [vmem:[#allocation8 + $0x7a0] sm:$0xff] %v2340
    %2853 = vst [vmem:[#allocation8 + $0x7a8] sm:$0xff] %v2341
    %2854 = vst [vmem:[#allocation8 + $0x7b0] sm:$0xff] %v2342
    %2855 = vst [vmem:[#allocation8 + $0x7b8] sm:$0xff] %v2343
    %2856 = vst [vmem:[#allocation8 + $0x7c0] sm:$0xff] %v2344
    %2857 = vst [vmem:[#allocation8 + $0x7c8] sm:$0xff] %v2345
    %2858 = vst [vmem:[#allocation8 + $0x7d0] sm:$0xff] %v2346
    %2859 = vst [vmem:[#allocation8 + $0x7d8] sm:$0xff] %v2347
    %2860 = vst [vmem:[#allocation8 + $0x7e0] sm:$0xff] %v2348
    %2861 = vst [vmem:[#allocation8 + $0x7e8] sm:$0xff] %v2349
    %2862 = vst [vmem:[#allocation8 + $0x7f0] sm:$0xff] %v2350
    %2863 = vst [vmem:[#allocation8 + $0x7f8] sm:$0xff] %v2351
    %2864 = vst [vmem:[#allocation8 + $0x800] sm:$0xff] %v2352
    %2865 = vst [vmem:[#allocation8 + $0x808] sm:$0xff] %v2353
    %2866 = vst [vmem:[#allocation8 + $0x810] sm:$0xff] %v2354
    %2867 = vst [vmem:[#allocation8 + $0x818] sm:$0xff] %v2355
    %2868 = vst [vmem:[#allocation8 + $0x820] sm:$0xff] %v2356
    %2869 = vst [vmem:[#allocation8 + $0x828] sm:$0xff] %v2357
    %2870 = vst [vmem:[#allocation8 + $0x830] sm:$0xff] %v2358
    %2871 = vst [vmem:[#allocation8 + $0x838] sm:$0xff] %v2359
    %2872 = vst [vmem:[#allocation8 + $0x840] sm:$0xff] %v2360
    %2873 = vst [vmem:[#allocation8 + $0x848] sm:$0xff] %v2361
    %2874 = vst [vmem:[#allocation8 + $0x850] sm:$0xff] %v2362
    %2875 = vst [vmem:[#allocation8 + $0x858] sm:$0xff] %v2363
    %2876 = vst [vmem:[#allocation8 + $0x860] sm:$0xff] %v2364
    %2877 = vst [vmem:[#allocation8 + $0x868] sm:$0xff] %v2365
    %2878 = vst [vmem:[#allocation8 + $0x870] sm:$0xff] %v2366
    %2879 = vst [vmem:[#allocation8 + $0x878] sm:$0xff] %v2367
    %2880 = vst [vmem:[#allocation8 + $0x880] sm:$0xff] %v2368
    %2881 = vst [vmem:[#allocation8 + $0x888] sm:$0xff] %v2369
    %2882 = vst [vmem:[#allocation8 + $0x890] sm:$0xff] %v2370
    %2883 = vst [vmem:[#allocation8 + $0x898] sm:$0xff] %v2371
    %2884 = vst [vmem:[#allocation8 + $0x8a0] sm:$0xff] %v2372
    %2885 = vst [vmem:[#allocation8 + $0x8a8] sm:$0xff] %v2373
    %2886 = vst [vmem:[#allocation8 + $0x8b0] sm:$0xff] %v2374
    %2887 = vst [vmem:[#allocation8 + $0x8b8] sm:$0xff] %v2375
    %2888 = vst [vmem:[#allocation8 + $0x8c0] sm:$0xff] %v2376
    %2889 = vst [vmem:[#allocation8 + $0x8c8] sm:$0xff] %v2377
    %2890 = vst [vmem:[#allocation8 + $0x8d0] sm:$0xff] %v2378
    %2891 = vst [vmem:[#allocation8 + $0x8d8] sm:$0xff] %v2379
    %2892 = vst [vmem:[#allocation8 + $0x8e0] sm:$0xff] %v2380
    %2893 = vst [vmem:[#allocation8 + $0x8e8] sm:$0xff] %v2381
    %2894 = vst [vmem:[#allocation8 + $0x8f0] sm:$0xff] %v2382
    %2895 = vst [vmem:[#allocation8 + $0x8f8] sm:$0xff] %v2383
    %2896 = vst [vmem:[#allocation8 + $0x900] sm:$0xff] %v2384
    %2897 = vst [vmem:[#allocation8 + $0x908] sm:$0xff] %v2385
    %2898 = vst [vmem:[#allocation8 + $0x910] sm:$0xff] %v2386
    %2899 = vst [vmem:[#allocation8 + $0x918] sm:$0xff] %v2387
    %2900 = vst [vmem:[#allocation8 + $0x920] sm:$0xff] %v2388
    %2901 = vst [vmem:[#allocation8 + $0x928] sm:$0xff] %v2389
    %2902 = vst [vmem:[#allocation8 + $0x930] sm:$0xff] %v2390
    %2903 = vst [vmem:[#allocation8 + $0x938] sm:$0xff] %v2391
    %2904 = vst [vmem:[#allocation8 + $0x940] sm:$0xff] %v2392
    %2905 = vst [vmem:[#allocation8 + $0x948] sm:$0xff] %v2393
    %2906 = vst [vmem:[#allocation8 + $0x950] sm:$0xff] %v2394
    %2907 = vst [vmem:[#allocation8 + $0x958] sm:$0xff] %v2395
    %2908 = vst [vmem:[#allocation8 + $0x960] sm:$0xff] %v2396
    %2909 = vst [vmem:[#allocation8 + $0x968] sm:$0xff] %v2397
    %2910 = vst [vmem:[#allocation8 + $0x970] sm:$0xff] %v2398
    %2911 = vst [vmem:[#allocation8 + $0x978] sm:$0xff] %v2399
    %2912 = vst [vmem:[#allocation8 + $0x980] sm:$0xff] %v2400
    %2913 = vst [vmem:[#allocation8 + $0x988] sm:$0xff] %v2401
    %2914 = vst [vmem:[#allocation8 + $0x990] sm:$0xff] %v2402
    %2915 = vst [vmem:[#allocation8 + $0x998] sm:$0xff] %v2403
    %2916 = vst [vmem:[#allocation8 + $0x9a0] sm:$0xff] %v2404
    %2917 = vst [vmem:[#allocation8 + $0x9a8] sm:$0xff] %v2405
    %2918 = vst [vmem:[#allocation8 + $0x9b0] sm:$0xff] %v2406
    %2919 = vst [vmem:[#allocation8 + $0x9b8] sm:$0xff] %v2407
    %2920 = vst [vmem:[#allocation8 + $0x9c0] sm:$0xff] %v2408
    %2921 = vst [vmem:[#allocation8 + $0x9c8] sm:$0xff] %v2409
    %2922 = vst [vmem:[#allocation8 + $0x9d0] sm:$0xff] %v2410
    %2923 = vst [vmem:[#allocation8 + $0x9d8] sm:$0xff] %v2411
    %2924 = vst [vmem:[#allocation8 + $0x9e0] sm:$0xff] %v2412
    %2925 = vst [vmem:[#allocation8 + $0x9e8] sm:$0xff] %v2413
    %2926 = vst [vmem:[#allocation8 + $0x9f0] sm:$0xff] %v2414
    %2927 = vst [vmem:[#allocation8 + $0x9f8] sm:$0xff] %v2415
    %2928 = vst [vmem:[#allocation8 + $0xa00] sm:$0xff] %v2416
    %2929 = vst [vmem:[#allocation8 + $0xa08] sm:$0xff] %v2417
    %2930 = vst [vmem:[#allocation8 + $0xa10] sm:$0xff] %v2418
    %2931 = vst [vmem:[#allocation8 + $0xa18] sm:$0xff] %v2419
    %2932 = vst [vmem:[#allocation8 + $0xa20] sm:$0xff] %v2420
    %2933 = vst [vmem:[#allocation8 + $0xa28] sm:$0xff] %v2421
    %2934 = vst [vmem:[#allocation8 + $0xa30] sm:$0xff] %v2422
    %2935 = vst [vmem:[#allocation8 + $0xa38] sm:$0xff] %v2423
    %2936 = vst [vmem:[#allocation8 + $0xa40] sm:$0xff] %v2424
    %2937 = vst [vmem:[#allocation8 + $0xa48] sm:$0xff] %v2425
    %2938 = vst [vmem:[#allocation8 + $0xa50] sm:$0xff] %v2426
    %2939 = vst [vmem:[#allocation8 + $0xa58] sm:$0xff] %v2427
    %2940 = vst [vmem:[#allocation8 + $0xa60] sm:$0xff] %v2428
    %2941 = vst [vmem:[#allocation8 + $0xa68] sm:$0xff] %v2429
    %2942 = vst [vmem:[#allocation8 + $0xa70] sm:$0xff] %v2430
    %2943 = vst [vmem:[#allocation8 + $0xa78] sm:$0xff] %v2431
    %2944 = vst [vmem:[#allocation8 + $0xa80] sm:$0xff] %v2432
    %2945 = vst [vmem:[#allocation8 + $0xa88] sm:$0xff] %v2433
    %2946 = vst [vmem:[#allocation8 + $0xa90] sm:$0xff] %v2434
    %2947 = vst [vmem:[#allocation8 + $0xa98] sm:$0xff] %v2435
    %2948 = vst [vmem:[#allocation8 + $0xaa0] sm:$0xff] %v2436
    %2949 = vst [vmem:[#allocation8 + $0xaa8] sm:$0xff] %v2437
    %2950 = vst [vmem:[#allocation8 + $0xab0] sm:$0xff] %v2438
    %2951 = vst [vmem:[#allocation8 + $0xab8] sm:$0xff] %v2439
    %2952 = vst [vmem:[#allocation8 + $0xac0] sm:$0xff] %v2440
    %2953 = vst [vmem:[#allocation8 + $0xac8] sm:$0xff] %v2441
    %2954 = vst [vmem:[#allocation8 + $0xad0] sm:$0xff] %v2442
    %2955 = vst [vmem:[#allocation8 + $0xad8] sm:$0xff] %v2443
    %2956 = vst [vmem:[#allocation8 + $0xae0] sm:$0xff] %v2444
    %2957 = vst [vmem:[#allocation8 + $0xae8] sm:$0xff] %v2445
    %2958 = vst [vmem:[#allocation8 + $0xaf0] sm:$0xff] %v2446
    %2959 = vst [vmem:[#allocation8 + $0xaf8] sm:$0xff] %v2447
    %2960 = vst [vmem:[#allocation8 + $0xb00] sm:$0xff] %v2448
    %2961 = vst [vmem:[#allocation8 + $0xb08] sm:$0xff] %v2449
    %2962 = vst [vmem:[#allocation8 + $0xb10] sm:$0xff] %v2450
    %2963 = vst [vmem:[#allocation8 + $0xb18] sm:$0xff] %v2451
    %2964 = vst [vmem:[#allocation8 + $0xb20] sm:$0xff] %v2452
    %2965 = vst [vmem:[#allocation8 + $0xb28] sm:$0xff] %v2453
    %2966 = vst [vmem:[#allocation8 + $0xb30] sm:$0xff] %v2454
    %2967 = vst [vmem:[#allocation8 + $0xb38] sm:$0xff] %v2455
    %2968 = vst [vmem:[#allocation8 + $0xb40] sm:$0xff] %v2456
    %2969 = vst [vmem:[#allocation8 + $0xb48] sm:$0xff] %v2457
    %2970 = vst [vmem:[#allocation8 + $0xb50] sm:$0xff] %v2458
    %2971 = vst [vmem:[#allocation8 + $0xb58] sm:$0xff] %v2459
    %2972 = vst [vmem:[#allocation8 + $0xb60] sm:$0xff] %v2460
    %2973 = vst [vmem:[#allocation8 + $0xb68] sm:$0xff] %v2461
    %2974 = vst [vmem:[#allocation8 + $0xb70] sm:$0xff] %v2462
    %2975 = vst [vmem:[#allocation8 + $0xb78] sm:$0xff] %v2463
    %2976 = vst [vmem:[#allocation8 + $0xb80] sm:$0xff] %v2464
    %2977 = vst [vmem:[#allocation8 + $0xb88] sm:$0xff] %v2465
    %2978 = vst [vmem:[#allocation8 + $0xb90] sm:$0xff] %v2466
    %2979 = vst [vmem:[#allocation8 + $0xb98] sm:$0xff] %v2467
    %2980 = vst [vmem:[#allocation8 + $0xba0] sm:$0xff] %v2468
    %2981 = vst [vmem:[#allocation8 + $0xba8] sm:$0xff] %v2469
    %2982 = vst [vmem:[#allocation8 + $0xbb0] sm:$0xff] %v2470
    %2983 = vst [vmem:[#allocation8 + $0xbb8] sm:$0xff] %v2471
    %2984 = vst [vmem:[#allocation8 + $0xbc0] sm:$0xff] %v2472
    %2985 = vst [vmem:[#allocation8 + $0xbc8] sm:$0xff] %v2473
    %2986 = vst [vmem:[#allocation8 + $0xbd0] sm:$0xff] %v2474
    %2987 = vst [vmem:[#allocation8 + $0xbd8] sm:$0xff] %v2475
    %2988 = vst [vmem:[#allocation8 + $0xbe0] sm:$0xff] %v2476
    %2989 = vst [vmem:[#allocation8 + $0xbe8] sm:$0xff] %v2477
    %2990 = vst [vmem:[#allocation8 + $0xbf0] sm:$0xff] %v2478
    %2991 = vst [vmem:[#allocation8 + $0xbf8] sm:$0xff] %v2479
    %2992 = vst [vmem:[#allocation8 + $0xc00] sm:$0xff] %v2480
    %2993 = vst [vmem:[#allocation8 + $0xc08] sm:$0xff] %v2481
    %2994 = vst [vmem:[#allocation8 + $0xc10] sm:$0xff] %v2482
    %2995 = vst [vmem:[#allocation8 + $0xc18] sm:$0xff] %v2483
    %2996 = vst [vmem:[#allocation8 + $0xc20] sm:$0xff] %v2484
    %2997 = vst [vmem:[#allocation8 + $0xc28] sm:$0xff] %v2485
    %2998 = vst [vmem:[#allocation8 + $0xc30] sm:$0xff] %v2486
    %2999 = vst [vmem:[#allocation8 + $0xc38] sm:$0xff] %v2487
    %3000 = vst [vmem:[#allocation8 + $0xc40] sm:$0xff] %v2488
    %3001 = vst [vmem:[#allocation8 + $0xc48] sm:$0xff] %v2489
    %3002 = vst [vmem:[#allocation8 + $0xc50] sm:$0xff] %v2490
    %3003 = vst [vmem:[#allocation8 + $0xc58] sm:$0xff] %v2491
    %3004 = vst [vmem:[#allocation8 + $0xc60] sm:$0xff] %v2492
    %3005 = vst [vmem:[#allocation8 + $0xc68] sm:$0xff] %v2493
    %3006 = vst [vmem:[#allocation8 + $0xc70] sm:$0xff] %v2494
    %3007 = vst [vmem:[#allocation8 + $0xc78] sm:$0xff] %v2495
    %3008 = vst [vmem:[#allocation8 + $0xc80] sm:$0xff] %v2496
    %3009 = vst [vmem:[#allocation8 + $0xc88] sm:$0xff] %v2497
    %3010 = vst [vmem:[#allocation8 + $0xc90] sm:$0xff] %v2498
    %3011 = vst [vmem:[#allocation8 + $0xc98] sm:$0xff] %v2499
    %3012 = vst [vmem:[#allocation8 + $0xca0] sm:$0xff] %v2500
    %3013 = vst [vmem:[#allocation8 + $0xca8] sm:$0xff] %v2501
    %3014 = vst [vmem:[#allocation8 + $0xcb0] sm:$0xff] %v2502
    %3015 = vst [vmem:[#allocation8 + $0xcb8] sm:$0xff] %v2503
    %3016 = vst [vmem:[#allocation8 + $0xcc0] sm:$0xff] %v2504
    %3017 = vst [vmem:[#allocation8 + $0xcc8] sm:$0xff] %v2505
    %3018 = vst [vmem:[#allocation8 + $0xcd0] sm:$0xff] %v2506
    %3019 = vst [vmem:[#allocation8 + $0xcd8] sm:$0xff] %v2507
    %3020 = vst [vmem:[#allocation8 + $0xce0] sm:$0xff] %v2508
    %3021 = vst [vmem:[#allocation8 + $0xce8] sm:$0xff] %v2509
    %3022 = vst [vmem:[#allocation8 + $0xcf0] sm:$0xff] %v2510
    %3023 = vst [vmem:[#allocation8 + $0xcf8] sm:$0xff] %v2511
    %3024 = vst [vmem:[#allocation8 + $0xd00] sm:$0xff] %v2512
    %3025 = vst [vmem:[#allocation8 + $0xd08] sm:$0xff] %v2513
    %3026 = vst [vmem:[#allocation8 + $0xd10] sm:$0xff] %v2514
    %3027 = vst [vmem:[#allocation8 + $0xd18] sm:$0xff] %v2515
    %3028 = vst [vmem:[#allocation8 + $0xd20] sm:$0xff] %v2516
    %3029 = vst [vmem:[#allocation8 + $0xd28] sm:$0xff] %v2517
    %3030 = vst [vmem:[#allocation8 + $0xd30] sm:$0xff] %v2518
    %3031 = vst [vmem:[#allocation8 + $0xd38] sm:$0xff] %v2519
    %3032 = vst [vmem:[#allocation8 + $0xd40] sm:$0xff] %v2520
    %3033 = vst [vmem:[#allocation8 + $0xd48] sm:$0xff] %v2521
    %3034 = vst [vmem:[#allocation8 + $0xd50] sm:$0xff] %v2522
    %3035 = vst [vmem:[#allocation8 + $0xd58] sm:$0xff] %v2523
    %3036 = vst [vmem:[#allocation8 + $0xd60] sm:$0xff] %v2524
    %3037 = vst [vmem:[#allocation8 + $0xd68] sm:$0xff] %v2525
    %3038 = vst [vmem:[#allocation8 + $0xd70] sm:$0xff] %v2526
    %3039 = vst [vmem:[#allocation8 + $0xd78] sm:$0xff] %v2527
    %3040 = vst [vmem:[#allocation8 + $0xd80] sm:$0xff] %v2528
    %3041 = vst [vmem:[#allocation8 + $0xd88] sm:$0xff] %v2529
    %3042 = vst [vmem:[#allocation8 + $0xd90] sm:$0xff] %v2530
    %3043 = vst [vmem:[#allocation8 + $0xd98] sm:$0xff] %v2531
    %3044 = vst [vmem:[#allocation8 + $0xda0] sm:$0xff] %v2532
    %3045 = vst [vmem:[#allocation8 + $0xda8] sm:$0xff] %v2533
    %3046 = vst [vmem:[#allocation8 + $0xdb0] sm:$0xff] %v2534
    %3047 = vst [vmem:[#allocation8 + $0xdb8] sm:$0xff] %v2535
    %3048 = vst [vmem:[#allocation8 + $0xdc0] sm:$0xff] %v2536
    %3049 = vst [vmem:[#allocation8 + $0xdc8] sm:$0xff] %v2537
    %3050 = vst [vmem:[#allocation8 + $0xdd0] sm:$0xff] %v2538
    %3051 = vst [vmem:[#allocation8 + $0xdd8] sm:$0xff] %v2539
    %3052 = vst [vmem:[#allocation8 + $0xde0] sm:$0xff] %v2540
    %3053 = vst [vmem:[#allocation8 + $0xde8] sm:$0xff] %v2541
    %3054 = vst [vmem:[#allocation8 + $0xdf0] sm:$0xff] %v2542
    %3055 = vst [vmem:[#allocation8 + $0xdf8] sm:$0xff] %v2543
    %3056 = vst [vmem:[#allocation8 + $0xe00] sm:$0xff] %v2544
    %3057 = vst [vmem:[#allocation8 + $0xe08] sm:$0xff] %v2545
    %3058 = vst [vmem:[#allocation8 + $0xe10] sm:$0xff] %v2546
    %3059 = vst [vmem:[#allocation8 + $0xe18] sm:$0xff] %v2547
    %3060 = vst [vmem:[#allocation8 + $0xe20] sm:$0xff] %v2548
    %3061 = vst [vmem:[#allocation8 + $0xe28] sm:$0xff] %v2549
    %3062 = vst [vmem:[#allocation8 + $0xe30] sm:$0xff] %v2550
    %3063 = vst [vmem:[#allocation8 + $0xe38] sm:$0xff] %v2551
    %3064 = vst [vmem:[#allocation8 + $0xe40] sm:$0xff] %v2552
    %3065 = vst [vmem:[#allocation8 + $0xe48] sm:$0xff] %v2553
    %3066 = vst [vmem:[#allocation8 + $0xe50] sm:$0xff] %v2554
    %3067 = vst [vmem:[#allocation8 + $0xe58] sm:$0xff] %v2555
    %3068 = vst [vmem:[#allocation8 + $0xe60] sm:$0xff] %v2556
    %3069 = vst [vmem:[#allocation8 + $0xe68] sm:$0xff] %v2557
    %3070 = vst [vmem:[#allocation8 + $0xe70] sm:$0xff] %v2558
    %3071 = vst [vmem:[#allocation8 + $0xe78] sm:$0xff] %v2559
    %3072 = vst [vmem:[#allocation8 + $0xe80] sm:$0xff] %v2560
    %3073 = vst [vmem:[#allocation8 + $0xe88] sm:$0xff] %v2561
    %3074 = vst [vmem:[#allocation8 + $0xe90] sm:$0xff] %v2562
    %3075 = vst [vmem:[#allocation8 + $0xe98] sm:$0xff] %v2563
    %3076 = vst [vmem:[#allocation8 + $0xea0] sm:$0xff] %v2564
    %3077 = vst [vmem:[#allocation8 + $0xea8] sm:$0xff] %v2565
    %3078 = vst [vmem:[#allocation8 + $0xeb0] sm:$0xff] %v2566
    %3079 = vst [vmem:[#allocation8 + $0xeb8] sm:$0xff] %v2567
    %3080 = vst [vmem:[#allocation8 + $0xec0] sm:$0xff] %v2568
    %3081 = vst [vmem:[#allocation8 + $0xec8] sm:$0xff] %v2569
    %3082 = vst [vmem:[#allocation8 + $0xed0] sm:$0xff] %v2570
    %3083 = vst [vmem:[#allocation8 + $0xed8] sm:$0xff] %v2571
    %3084 = vst [vmem:[#allocation8 + $0xee0] sm:$0xff] %v2572
    %3085 = vst [vmem:[#allocation8 + $0xee8] sm:$0xff] %v2573
    %3086 = vst [vmem:[#allocation8 + $0xef0] sm:$0xff] %v2574
    %3087 = vst [vmem:[#allocation8 + $0xef8] sm:$0xff] %v2575
    %3088 = vst [vmem:[#allocation8 + $0xf00] sm:$0xff] %v2576
    %3089 = vst [vmem:[#allocation8 + $0xf08] sm:$0xff] %v2577
    %3090 = vst [vmem:[#allocation8 + $0xf10] sm:$0xff] %v2578
    %3091 = vst [vmem:[#allocation8 + $0xf18] sm:$0xff] %v2579
    %3092 = vst [vmem:[#allocation8 + $0xf20] sm:$0xff] %v2580
    %3093 = vst [vmem:[#allocation8 + $0xf28] sm:$0xff] %v2581
    %3094 = vst [vmem:[#allocation8 + $0xf30] sm:$0xff] %v2582
    %3095 = vst [vmem:[#allocation8 + $0xf38] sm:$0xff] %v2583
    %3096 = vst [vmem:[#allocation8 + $0xf40] sm:$0xff] %v2584
    %3097 = vst [vmem:[#allocation8 + $0xf48] sm:$0xff] %v2585
    %3098 = vst [vmem:[#allocation8 + $0xf50] sm:$0xff] %v2586
    %3099 = vst [vmem:[#allocation8 + $0xf58] sm:$0xff] %v2587
    %3100 = vst [vmem:[#allocation8 + $0xf60] sm:$0xff] %v2588
    %3101 = vst [vmem:[#allocation8 + $0xf68] sm:$0xff] %v2589
    %3102 = vst [vmem:[#allocation8 + $0xf70] sm:$0xff] %v2590
    %3103 = vst [vmem:[#allocation8 + $0xf78] sm:$0xff] %v2591
    %3104 = vst [vmem:[#allocation8 + $0xf80] sm:$0xff] %v2592
    %3105 = vst [vmem:[#allocation8 + $0xf88] sm:$0xff] %v2593
    %3106 = vst [vmem:[#allocation8 + $0xf90] sm:$0xff] %v2594
    %3107 = vst [vmem:[#allocation8 + $0xf98] sm:$0xff] %v2595
    %3108 = vst [vmem:[#allocation8 + $0xfa0] sm:$0xff] %v2596
    %3109 = vst [vmem:[#allocation8 + $0xfa8] sm:$0xff] %v2597
    %3110 = vst [vmem:[#allocation8 + $0xfb0] sm:$0xff] %v2598
    %3111 = vst [vmem:[#allocation8 + $0xfb8] sm:$0xff] %v2599
    %3112 = vst [vmem:[#allocation8 + $0xfc0] sm:$0xff] %v2600
    %3113 = vst [vmem:[#allocation8 + $0xfc8] sm:$0xff] %v2601
    %3114 = vst [vmem:[#allocation8 + $0xfd0] sm:$0xff] %v2602
    %3115 = vst [vmem:[#allocation8 + $0xfd8] sm:$0xff] %v2603
    %3116 = vst [vmem:[#allocation8 + $0xfe0] sm:$0xff] %v2604
    %3117 = vst [vmem:[#allocation8 + $0xfe8] sm:$0xff] %v2605
    %3118 = vst [vmem:[#allocation8 + $0xff0] sm:$0xff] %v2606
    %3119 = vst [vmem:[#allocation8 + $0xff8] sm:$0xff] %v2607
    // Predicated region
    $region22: #{tpu_custom_call.1} parent=1 // pred_check
      _
    $region23: #{tpu_custom_call.1} parent=1 // pred_check_branch
      %3121 = sbr.rel (0) target = $region25
    $region24: #{tpu_custom_call.1} parent=1 // pred_region
      %s3123 = ssub.s32 65536, 65536
      %3124 = vsyncadd [#allocation5], %s3123
      %s3125 = sshll.u32 [#allocation8], 4
      %s3126 = int_to_ptr.vmem [resolvable:$true] %s3125
      %3131 = dma.vmem_to_hbm [thread:$0]  %s3126, 65536, %s3, [#allocation5], 128, 128, 8
    $region25: #{tpu_custom_call.1} parent=1 // pred_fallthru
      _
    // Predicated region
    $region26: #{tpu_custom_call.1} parent=1 // pred_check
      _
    $region27: #{tpu_custom_call.1} parent=1 // pred_check_branch
      %3133 = sbr.rel (0) target = $region29
    $region28: #{tpu_custom_call.1} parent=1 // pred_region
      %3134 = dma.done [#allocation5], 65536
    $region29: #{tpu_custom_call.1} parent=1 // pred_fallthru
      _
    %3135 = vsyncpa [#allocation4], 1
    %3136 = vsyncpa [#allocation7], 1
    %3137 = vsyncpa [#allocation5], 1

</llo_original>
